<compile_context>
chip_gen: v7x
topology: tpu7x:2x2x1
jax: 0.10.0
libtpu: 0.0.40
codegen_flags: <defaults>
</compile_context>

<pallas_src>
import jax
import jax.numpy as jnp
from jax.experimental import pallas as pl
from jax.experimental.pallas import tpu as pltpu


# ------------------------------- fused forward kernel --------------------------------
def _make_fused_kernel(H2, W2, C1, C2, KH2, KW2):
    q = H2 * W2                       # pooled pixels per image (64)
    pad2 = KH2 // 2                   # conv2 halo (2)
    Wp = W2 + 2 * pad2                # padded-width row length (12)
    Mo = H2 * Wp                      # padded-width output rows (96)

    def kernel(p1_ref, w1_ref, b1_ref, w2_ref, b2_ref, o_ref, a2_ref):
        # p1_ref: (4*q, K1)   conv1 im2col patches (pool-ordered rows)
        # w1_ref: (K1, C1)    conv1 weight matrix, rows = (dy, dx, ci)
        # b1_ref: (1, C1)
        # w2_ref: (KH2*KW2*C1, C2) conv2 weight matrix, rows = (dy, dx, ci)
        # b2_ref: (1, C2)
        # o_ref : (Mo, C2)    lane-dense output in padded-width layout (row = h2*Wp + w2)
        # a2_ref: (n_flat, C1) flat zero-padded pooled activation (row = hp*Wp + wp)

        # ---- conv1: one MXU matmul + bias + ReLU (M = 4q = 256, K = 147, N = 64) ----
        y = jnp.dot(p1_ref[...], w1_ref[...], preferred_element_type=jnp.float32)
        y = jnp.maximum(y + b1_ref[...], 0.0)                        # (4*q, C1)

        # ---- fused 2x2 maxpool: the 4 window members are 4 contiguous row groups ----
        pool = jnp.maximum(jnp.maximum(y[0 * q:1 * q], y[1 * q:2 * q]),
                           jnp.maximum(y[2 * q:3 * q], y[3 * q:4 * q]))   # (q, C1)

        # ---- build the flat padded-width activation entirely in VMEM ----
        a2_ref[...] = jnp.zeros(a2_ref.shape, a2_ref.dtype)
        for h2 in range(H2):
            a2_ref[pl.ds((h2 + pad2) * Wp + pad2, W2), :] = pool[h2 * W2:(h2 + 1) * W2, :]

        # ---- conv2: 25 taps; each LHS is ONE contiguous Mo-row slice of the scratch,
        #      each weight slice is a sublane-aligned (C1, C2) block of w2_ref ----
        z = jnp.zeros((Mo, C2), jnp.float32)
        for dy in range(KH2):
            for dx in range(KW2):
                lhs = a2_ref[pl.ds(dy * Wp + dx, Mo), :]                   # (Mo, C1)
                w_tap = w2_ref[pl.ds((dy * KW2 + dx) * C1, C1), :]         # (C1, C2)
                z = z + jnp.dot(lhs, w_tap, preferred_element_type=jnp.float32)

        o_ref[...] = jnp.maximum(z + b2_ref[...], 0.0)

    return kernel


# ------------------------------------- wrapper ----------------------------------------
@jax.jit
def simple_cnn_forward(x_nchw, params):
    w1, b1, w2, b2 = params                      # PyTorch layouts: OIHW weights, (O,) biases
    N, Cin, H, W = x_nchw.shape
    KH1, KW1 = w1.shape[2], w1.shape[3]          # 7, 7
    KH2, KW2 = w2.shape[2], w2.shape[3]          # 5, 5
    C1, C2 = w1.shape[0], w2.shape[0]            # 64, 128
    H2, W2 = H // 2, W // 2
    K1 = KH1 * KW1 * Cin                         # 147
    K2 = KH2 * KW2 * C1                          # 1600
    q = H2 * W2                                  # 64
    ph, pw = KH1 // 2, KW1 // 2                  # conv1 'same' padding (3)
    pad2 = KH2 // 2                              # conv2 'same' padding (2)
    Wp = W2 + 2 * pad2                           # 12
    Mo = H2 * Wp                                 # 96
    # flat scratch rows: enough for all tap slices, rounded up to a sublane multiple
    n_flat = Mo + (KH2 - 1) * Wp + (KW2 - 1)
    n_flat = -(-n_flat // 8) * 8                 # 152

    # --- layout plumbing in the wrapper: NCHW -> NHWC, conv1 im2col, weight matrices ---
    x = jnp.transpose(x_nchw, (0, 2, 3, 1))
    xp = jnp.pad(x, ((0, 0), (ph, ph), (pw, pw), (0, 0)))
    taps = [xp[:, dy:dy + H, dx:dx + W, :] for dy in range(KH1) for dx in range(KW1)]
    p = jnp.stack(taps, axis=3).reshape(N, H, W, K1)          # K order = (dy, dx, ci)
    # reorder rows so each 2x2 pool window's 4 members land in 4 contiguous row groups
    p = (p.reshape(N, H2, 2, W2, 2, K1)
           .transpose(0, 2, 4, 1, 3, 5)
           .reshape(N, 4 * q, K1))

    w1mat = jnp.transpose(w1, (2, 3, 1, 0)).reshape(K1, C1)   # (147, 64),  rows = (dy,dx,ci)
    w2mat = jnp.transpose(w2, (2, 3, 1, 0)).reshape(K2, C2)   # (1600, 128), rows = (dy,dx,ci)
    b1r = b1.reshape(1, C1)
    b2r = b2.reshape(1, C2)

    kernel = _make_fused_kernel(H2, W2, C1, C2, KH2, KW2)

    out = pl.pallas_call(
        kernel,
        out_shape=jax.ShapeDtypeStruct((N, Mo, C2), jnp.float32),
        grid=(N,),
        in_specs=[
            pl.BlockSpec((None, 4 * q, K1), lambda n: (n, 0, 0)),
            pl.BlockSpec((K1, C1), lambda n: (0, 0)),
            pl.BlockSpec((1, C1), lambda n: (0, 0)),
            pl.BlockSpec((K2, C2), lambda n: (0, 0)),
            pl.BlockSpec((1, C2), lambda n: (0, 0)),
        ],
        out_specs=pl.BlockSpec((None, Mo, C2), lambda n: (n, 0, 0)),
        scratch_shapes=[pltpu.VMEM((n_flat, C1), jnp.float32)],
        compiler_params=pltpu.CompilerParams(dimension_semantics=("parallel",)),
    )(p, w1mat, b1r, w2mat, b2r)

    # strip the padded-width garbage columns, NHWC -> NCHW (match PyTorch)
    out = out.reshape(N, H2, Wp, C2)[:, :, :W2, :]
    return jnp.transpose(out, (0, 3, 1, 2))


def reference_forward(x, params):
    """Pure-JAX/XLA reference with PyTorch semantics (NCHW / OIHW)."""
    w1, b1, w2, b2 = params
    dn = ("NCHW", "OIHW", "NCHW")
    y = jax.lax.conv_general_dilated(x, w1, (1, 1), ((3, 3), (3, 3)), dimension_numbers=dn)
    y = jax.nn.relu(y + b1[None, :, None, None])
    y = jax.lax.reduce_window(y, -jnp.inf, jax.lax.max, (1, 1, 2, 2), (1, 1, 2, 2), "VALID")
    y = jax.lax.conv_general_dilated(y, w2, (1, 1), ((2, 2), (2, 2)), dimension_numbers=dn)
    y = jax.nn.relu(y + b2[None, :, None, None])
    return y


if __name__ == "__main__":
    key = jax.random.PRNGKey(0)
    kx, k1, k2, k3, k4 = jax.random.split(key, 5)

    # Deterministic synthetic parameters (PyTorch layout: OIHW weights, (O,) biases).
    w1 = jax.random.normal(k1, (64, 3, 7, 7), jnp.float32) * 0.05
    b1 = jax.random.normal(k2, (64,), jnp.float32) * 0.05
    w2 = jax.random.normal(k3, (128, 64, 5, 5), jnp.float32) * 0.05
    b2 = jax.random.normal(k4, (128,), jnp.float32) * 0.05
    params = (w1, b1, w2, b2)

    # Small NCHW input consistent with Conv2d(3, ...)
    x = jax.random.normal(kx, (2, 3, 16, 16), jnp.float32)

    out = jax.block_until_ready(simple_cnn_forward(x, params))
    assert out.shape == (2, 128, 8, 8), out.shape

    ref = jax.block_until_ready(reference_forward(x, params))
    max_err = float(jnp.max(jnp.abs(out - ref)))
    assert max_err < 2e-2, f"max abs error vs XLA reference: {max_err}"

    print("KERNEL_OK")
</pallas_src>

<mosaic_0001>
module attributes {stable_mosaic.version = 11 : i64} {
  func.func @kernel(%arg0: i32, %arg1: memref<1x256x147xf32, #tpu.memory_space<vmem>>, %arg2: memref<147x64xf32, #tpu.memory_space<vmem>>, %arg3: memref<1x64xf32, #tpu.memory_space<vmem>>, %arg4: memref<1600x128xf32, #tpu.memory_space<vmem>>, %arg5: memref<1x128xf32, #tpu.memory_space<vmem>>, %arg6: memref<1x96x128xf32, #tpu.memory_space<vmem>>, %arg7: memref<152x64xf32, #tpu.memory_space<vmem>>) attributes {dimension_semantics = [#tpu.dimension_semantics<parallel>], iteration_bounds = array<i64: 2>, scalar_prefetch = 0 : i64, scratch_operands = 1 : i64, tpu.core_type = #tpu.core_type<tc>, window_params = [{transform_indices = @transform_0, window_bounds = array<i64: 1, 256, 147>}, {pipeline_mode = #tpu.pipeline_mode<synchronous>, transform_indices = @transform_1, window_bounds = array<i64: 147, 64>}, {pipeline_mode = #tpu.pipeline_mode<synchronous>, transform_indices = @transform_2, window_bounds = array<i64: 1, 64>}, {pipeline_mode = #tpu.pipeline_mode<synchronous>, transform_indices = @transform_3, window_bounds = array<i64: 1600, 128>}, {pipeline_mode = #tpu.pipeline_mode<synchronous>, transform_indices = @transform_4, window_bounds = array<i64: 1, 128>}, {transform_indices = @transform_5, window_bounds = array<i64: 1, 96, 128>}]} {
    %c0 = arith.constant 0 : index
    %c0_0 = arith.constant 0 : index
    %c0_1 = arith.constant 0 : index
    %0 = vector.load %arg1[%c0, %c0_0, %c0_1] : memref<1x256x147xf32, #tpu.memory_space<vmem>>, vector<1x256x147xf32>
    %1 = vector.shape_cast %0 : vector<1x256x147xf32> to vector<256x147xf32>
    %c0_2 = arith.constant 0 : index
    %c0_3 = arith.constant 0 : index
    %2 = vector.load %arg2[%c0_2, %c0_3] : memref<147x64xf32, #tpu.memory_space<vmem>>, vector<147x64xf32>
    %cst = arith.constant dense<0.000000e+00> : vector<256x64xf32>
    %3 = tpu.matmul %1, %2, %cst {dimension_numbers = #tpu.dot_dimension_numbers<[1], [0], [0], [1], [0, 0, 1, 1], [], []>} : vector<256x147xf32>, vector<147x64xf32>, vector<256x64xf32> -> vector<256x64xf32>
    %c0_4 = arith.constant 0 : index
    %c0_5 = arith.constant 0 : index
    %4 = vector.load %arg3[%c0_4, %c0_5] : memref<1x64xf32, #tpu.memory_space<vmem>>, vector<1x64xf32>
    %5 = vector.broadcast %4 : vector<1x64xf32> to vector<256x64xf32>
    %6 = arith.addf %3, %5 : vector<256x64xf32>
    %cst_6 = arith.constant 0.000000e+00 : f32
    %7 = vector.broadcast %cst_6 : f32 to vector<256x64xf32>
    %8 = arith.maximumf %6, %7 : vector<256x64xf32>
    %9 = vector.extract_strided_slice %8 {offsets = [0, 0], sizes = [64, 64], strides = [1, 1]} : vector<256x64xf32> to vector<64x64xf32>
    %10 = vector.extract_strided_slice %8 {offsets = [64, 0], sizes = [64, 64], strides = [1, 1]} : vector<256x64xf32> to vector<64x64xf32>
    %11 = arith.maximumf %9, %10 : vector<64x64xf32>
    %12 = vector.extract_strided_slice %8 {offsets = [128, 0], sizes = [64, 64], strides = [1, 1]} : vector<256x64xf32> to vector<64x64xf32>
    %13 = vector.extract_strided_slice %8 {offsets = [192, 0], sizes = [64, 64], strides = [1, 1]} : vector<256x64xf32> to vector<64x64xf32>
    %14 = arith.maximumf %12, %13 : vector<64x64xf32>
    %15 = arith.maximumf %11, %14 : vector<64x64xf32>
    %cst_7 = arith.constant 0.000000e+00 : f32
    %16 = vector.broadcast %cst_7 : f32 to vector<152x64xf32>
    %c0_8 = arith.constant 0 : index
    %c0_9 = arith.constant 0 : index
    %17 = vector.load %arg7[%c0_8, %c0_9] : memref<152x64xf32, #tpu.memory_space<vmem>>, vector<152x64xf32>
    tpu.vector_store %arg7[%c0_8, %c0_9], %16 {strides = array<i32>} : memref<152x64xf32, #tpu.memory_space<vmem>>, vector<152x64xf32>,
    %18 = vector.extract_strided_slice %15 {offsets = [0, 0], sizes = [8, 64], strides = [1, 1]} : vector<64x64xf32> to vector<8x64xf32>
    %c26 = arith.constant 26 : index
    %c0_10 = arith.constant 0 : index
    %19 = vector.load %arg7[%c26, %c0_10] : memref<152x64xf32, #tpu.memory_space<vmem>>, vector<8x64xf32>
    tpu.vector_store %arg7[%c26, %c0_10], %18 {strides = array<i32>} : memref<152x64xf32, #tpu.memory_space<vmem>>, vector<8x64xf32>,
    %20 = vector.extract_strided_slice %15 {offsets = [8, 0], sizes = [8, 64], strides = [1, 1]} : vector<64x64xf32> to vector<8x64xf32>
    %c38 = arith.constant 38 : index
    %c0_11 = arith.constant 0 : index
    %21 = vector.load %arg7[%c38, %c0_11] : memref<152x64xf32, #tpu.memory_space<vmem>>, vector<8x64xf32>
    tpu.vector_store %arg7[%c38, %c0_11], %20 {strides = array<i32>} : memref<152x64xf32, #tpu.memory_space<vmem>>, vector<8x64xf32>,
    %22 = vector.extract_strided_slice %15 {offsets = [16, 0], sizes = [8, 64], strides = [1, 1]} : vector<64x64xf32> to vector<8x64xf32>
    %c50 = arith.constant 50 : index
    %c0_12 = arith.constant 0 : index
    %23 = vector.load %arg7[%c50, %c0_12] : memref<152x64xf32, #tpu.memory_space<vmem>>, vector<8x64xf32>
    tpu.vector_store %arg7[%c50, %c0_12], %22 {strides = array<i32>} : memref<152x64xf32, #tpu.memory_space<vmem>>, vector<8x64xf32>,
    %24 = vector.extract_strided_slice %15 {offsets = [24, 0], sizes = [8, 64], strides = [1, 1]} : vector<64x64xf32> to vector<8x64xf32>
    %c62 = arith.constant 62 : index
    %c0_13 = arith.constant 0 : index
    %25 = vector.load %arg7[%c62, %c0_13] : memref<152x64xf32, #tpu.memory_space<vmem>>, vector<8x64xf32>
    tpu.vector_store %arg7[%c62, %c0_13], %24 {strides = array<i32>} : memref<152x64xf32, #tpu.memory_space<vmem>>, vector<8x64xf32>,
    %26 = vector.extract_strided_slice %15 {offsets = [32, 0], sizes = [8, 64], strides = [1, 1]} : vector<64x64xf32> to vector<8x64xf32>
    %c74 = arith.constant 74 : index
    %c0_14 = arith.constant 0 : index
    %27 = vector.load %arg7[%c74, %c0_14] : memref<152x64xf32, #tpu.memory_space<vmem>>, vector<8x64xf32>
    tpu.vector_store %arg7[%c74, %c0_14], %26 {strides = array<i32>} : memref<152x64xf32, #tpu.memory_space<vmem>>, vector<8x64xf32>,
    %28 = vector.extract_strided_slice %15 {offsets = [40, 0], sizes = [8, 64], strides = [1, 1]} : vector<64x64xf32> to vector<8x64xf32>
    %c86 = arith.constant 86 : index
    %c0_15 = arith.constant 0 : index
    %29 = vector.load %arg7[%c86, %c0_15] : memref<152x64xf32, #tpu.memory_space<vmem>>, vector<8x64xf32>
    tpu.vector_store %arg7[%c86, %c0_15], %28 {strides = array<i32>} : memref<152x64xf32, #tpu.memory_space<vmem>>, vector<8x64xf32>,
    %30 = vector.extract_strided_slice %15 {offsets = [48, 0], sizes = [8, 64], strides = [1, 1]} : vector<64x64xf32> to vector<8x64xf32>
    %c98 = arith.constant 98 : index
    %c0_16 = arith.constant 0 : index
    %31 = vector.load %arg7[%c98, %c0_16] : memref<152x64xf32, #tpu.memory_space<vmem>>, vector<8x64xf32>
    tpu.vector_store %arg7[%c98, %c0_16], %30 {strides = array<i32>} : memref<152x64xf32, #tpu.memory_space<vmem>>, vector<8x64xf32>,
    %32 = vector.extract_strided_slice %15 {offsets = [56, 0], sizes = [8, 64], strides = [1, 1]} : vector<64x64xf32> to vector<8x64xf32>
    %c110 = arith.constant 110 : index
    %c0_17 = arith.constant 0 : index
    %33 = vector.load %arg7[%c110, %c0_17] : memref<152x64xf32, #tpu.memory_space<vmem>>, vector<8x64xf32>
    tpu.vector_store %arg7[%c110, %c0_17], %32 {strides = array<i32>} : memref<152x64xf32, #tpu.memory_space<vmem>>, vector<8x64xf32>,
    %cst_18 = arith.constant 0.000000e+00 : f32
    %34 = vector.broadcast %cst_18 : f32 to vector<96x128xf32>
    %c0_19 = arith.constant 0 : index
    %c0_20 = arith.constant 0 : index
    %35 = vector.load %arg7[%c0_19, %c0_20] : memref<152x64xf32, #tpu.memory_space<vmem>>, vector<96x64xf32>
    %c0_21 = arith.constant 0 : index
    %c0_22 = arith.constant 0 : index
    %36 = vector.load %arg4[%c0_21, %c0_22] : memref<1600x128xf32, #tpu.memory_space<vmem>>, vector<64x128xf32>
    %cst_23 = arith.constant dense<0.000000e+00> : vector<96x128xf32>
    %37 = tpu.matmul %35, %36, %cst_23 {dimension_numbers = #tpu.dot_dimension_numbers<[1], [0], [0], [1], [0, 0, 1, 1], [], []>} : vector<96x64xf32>, vector<64x128xf32>, vector<96x128xf32> -> vector<96x128xf32>
    %38 = arith.addf %34, %37 : vector<96x128xf32>
    %c1 = arith.constant 1 : index
    %c0_24 = arith.constant 0 : index
    %39 = vector.load %arg7[%c1, %c0_24] : memref<152x64xf32, #tpu.memory_space<vmem>>, vector<96x64xf32>
    %c64 = arith.constant 64 : index
    %c0_25 = arith.constant 0 : index
    %40 = vector.load %arg4[%c64, %c0_25] : memref<1600x128xf32, #tpu.memory_space<vmem>>, vector<64x128xf32>
    %cst_26 = arith.constant dense<0.000000e+00> : vector<96x128xf32>
    %41 = tpu.matmul %39, %40, %cst_26 {dimension_numbers = #tpu.dot_dimension_numbers<[1], [0], [0], [1], [0, 0, 1, 1], [], []>} : vector<96x64xf32>, vector<64x128xf32>, vector<96x128xf32> -> vector<96x128xf32>
    %42 = arith.addf %38, %41 : vector<96x128xf32>
    %c2 = arith.constant 2 : index
    %c0_27 = arith.constant 0 : index
    %43 = vector.load %arg7[%c2, %c0_27] : memref<152x64xf32, #tpu.memory_space<vmem>>, vector<96x64xf32>
    %c128 = arith.constant 128 : index
    %c0_28 = arith.constant 0 : index
    %44 = vector.load %arg4[%c128, %c0_28] : memref<1600x128xf32, #tpu.memory_space<vmem>>, vector<64x128xf32>
    %cst_29 = arith.constant dense<0.000000e+00> : vector<96x128xf32>
    %45 = tpu.matmul %43, %44, %cst_29 {dimension_numbers = #tpu.dot_dimension_numbers<[1], [0], [0], [1], [0, 0, 1, 1], [], []>} : vector<96x64xf32>, vector<64x128xf32>, vector<96x128xf32> -> vector<96x128xf32>
    %46 = arith.addf %42, %45 : vector<96x128xf32>
    %c3 = arith.constant 3 : index
    %c0_30 = arith.constant 0 : index
    %47 = vector.load %arg7[%c3, %c0_30] : memref<152x64xf32, #tpu.memory_space<vmem>>, vector<96x64xf32>
    %c192 = arith.constant 192 : index
    %c0_31 = arith.constant 0 : index
    %48 = vector.load %arg4[%c192, %c0_31] : memref<1600x128xf32, #tpu.memory_space<vmem>>, vector<64x128xf32>
    %cst_32 = arith.constant dense<0.000000e+00> : vector<96x128xf32>
    %49 = tpu.matmul %47, %48, %cst_32 {dimension_numbers = #tpu.dot_dimension_numbers<[1], [0], [0], [1], [0, 0, 1, 1], [], []>} : vector<96x64xf32>, vector<64x128xf32>, vector<96x128xf32> -> vector<96x128xf32>
    %50 = arith.addf %46, %49 : vector<96x128xf32>
    %c4 = arith.constant 4 : index
    %c0_33 = arith.constant 0 : index
    %51 = vector.load %arg7[%c4, %c0_33] : memref<152x64xf32, #tpu.memory_space<vmem>>, vector<96x64xf32>
    %c256 = arith.constant 256 : index
    %c0_34 = arith.constant 0 : index
    %52 = vector.load %arg4[%c256, %c0_34] : memref<1600x128xf32, #tpu.memory_space<vmem>>, vector<64x128xf32>
    %cst_35 = arith.constant dense<0.000000e+00> : vector<96x128xf32>
    %53 = tpu.matmul %51, %52, %cst_35 {dimension_numbers = #tpu.dot_dimension_numbers<[1], [0], [0], [1], [0, 0, 1, 1], [], []>} : vector<96x64xf32>, vector<64x128xf32>, vector<96x128xf32> -> vector<96x128xf32>
    %54 = arith.addf %50, %53 : vector<96x128xf32>
    %c12 = arith.constant 12 : index
    %c0_36 = arith.constant 0 : index
    %55 = vector.load %arg7[%c12, %c0_36] : memref<152x64xf32, #tpu.memory_space<vmem>>, vector<96x64xf32>
    %c320 = arith.constant 320 : index
    %c0_37 = arith.constant 0 : index
    %56 = vector.load %arg4[%c320, %c0_37] : memref<1600x128xf32, #tpu.memory_space<vmem>>, vector<64x128xf32>
    %cst_38 = arith.constant dense<0.000000e+00> : vector<96x128xf32>
    %57 = tpu.matmul %55, %56, %cst_38 {dimension_numbers = #tpu.dot_dimension_numbers<[1], [0], [0], [1], [0, 0, 1, 1], [], []>} : vector<96x64xf32>, vector<64x128xf32>, vector<96x128xf32> -> vector<96x128xf32>
    %58 = arith.addf %54, %57 : vector<96x128xf32>
    %c13 = arith.constant 13 : index
    %c0_39 = arith.constant 0 : index
    %59 = vector.load %arg7[%c13, %c0_39] : memref<152x64xf32, #tpu.memory_space<vmem>>, vector<96x64xf32>
    %c384 = arith.constant 384 : index
    %c0_40 = arith.constant 0 : index
    %60 = vector.load %arg4[%c384, %c0_40] : memref<1600x128xf32, #tpu.memory_space<vmem>>, vector<64x128xf32>
    %cst_41 = arith.constant dense<0.000000e+00> : vector<96x128xf32>
    %61 = tpu.matmul %59, %60, %cst_41 {dimension_numbers = #tpu.dot_dimension_numbers<[1], [0], [0], [1], [0, 0, 1, 1], [], []>} : vector<96x64xf32>, vector<64x128xf32>, vector<96x128xf32> -> vector<96x128xf32>
    %62 = arith.addf %58, %61 : vector<96x128xf32>
    %c14 = arith.constant 14 : index
    %c0_42 = arith.constant 0 : index
    %63 = vector.load %arg7[%c14, %c0_42] : memref<152x64xf32, #tpu.memory_space<vmem>>, vector<96x64xf32>
    %c448 = arith.constant 448 : index
    %c0_43 = arith.constant 0 : index
    %64 = vector.load %arg4[%c448, %c0_43] : memref<1600x128xf32, #tpu.memory_space<vmem>>, vector<64x128xf32>
    %cst_44 = arith.constant dense<0.000000e+00> : vector<96x128xf32>
    %65 = tpu.matmul %63, %64, %cst_44 {dimension_numbers = #tpu.dot_dimension_numbers<[1], [0], [0], [1], [0, 0, 1, 1], [], []>} : vector<96x64xf32>, vector<64x128xf32>, vector<96x128xf32> -> vector<96x128xf32>
    %66 = arith.addf %62, %65 : vector<96x128xf32>
    %c15 = arith.constant 15 : index
    %c0_45 = arith.constant 0 : index
    %67 = vector.load %arg7[%c15, %c0_45] : memref<152x64xf32, #tpu.memory_space<vmem>>, vector<96x64xf32>
    %c512 = arith.constant 512 : index
    %c0_46 = arith.constant 0 : index
    %68 = vector.load %arg4[%c512, %c0_46] : memref<1600x128xf32, #tpu.memory_space<vmem>>, vector<64x128xf32>
    %cst_47 = arith.constant dense<0.000000e+00> : vector<96x128xf32>
    %69 = tpu.matmul %67, %68, %cst_47 {dimension_numbers = #tpu.dot_dimension_numbers<[1], [0], [0], [1], [0, 0, 1, 1], [], []>} : vector<96x64xf32>, vector<64x128xf32>, vector<96x128xf32> -> vector<96x128xf32>
    %70 = arith.addf %66, %69 : vector<96x128xf32>
    %c16 = arith.constant 16 : index
    %c0_48 = arith.constant 0 : index
    %71 = vector.load %arg7[%c16, %c0_48] : memref<152x64xf32, #tpu.memory_space<vmem>>, vector<96x64xf32>
    %c576 = arith.constant 576 : index
    %c0_49 = arith.constant 0 : index
    %72 = vector.load %arg4[%c576, %c0_49] : memref<1600x128xf32, #tpu.memory_space<vmem>>, vector<64x128xf32>
    %cst_50 = arith.constant dense<0.000000e+00> : vector<96x128xf32>
    %73 = tpu.matmul %71, %72, %cst_50 {dimension_numbers = #tpu.dot_dimension_numbers<[1], [0], [0], [1], [0, 0, 1, 1], [], []>} : vector<96x64xf32>, vector<64x128xf32>, vector<96x128xf32> -> vector<96x128xf32>
    %74 = arith.addf %70, %73 : vector<96x128xf32>
    %c24 = arith.constant 24 : index
    %c0_51 = arith.constant 0 : index
    %75 = vector.load %arg7[%c24, %c0_51] : memref<152x64xf32, #tpu.memory_space<vmem>>, vector<96x64xf32>
    %c640 = arith.constant 640 : index
    %c0_52 = arith.constant 0 : index
    %76 = vector.load %arg4[%c640, %c0_52] : memref<1600x128xf32, #tpu.memory_space<vmem>>, vector<64x128xf32>
    %cst_53 = arith.constant dense<0.000000e+00> : vector<96x128xf32>
    %77 = tpu.matmul %75, %76, %cst_53 {dimension_numbers = #tpu.dot_dimension_numbers<[1], [0], [0], [1], [0, 0, 1, 1], [], []>} : vector<96x64xf32>, vector<64x128xf32>, vector<96x128xf32> -> vector<96x128xf32>
    %78 = arith.addf %74, %77 : vector<96x128xf32>
    %c25 = arith.constant 25 : index
    %c0_54 = arith.constant 0 : index
    %79 = vector.load %arg7[%c25, %c0_54] : memref<152x64xf32, #tpu.memory_space<vmem>>, vector<96x64xf32>
    %c704 = arith.constant 704 : index
    %c0_55 = arith.constant 0 : index
    %80 = vector.load %arg4[%c704, %c0_55] : memref<1600x128xf32, #tpu.memory_space<vmem>>, vector<64x128xf32>
    %cst_56 = arith.constant dense<0.000000e+00> : vector<96x128xf32>
    %81 = tpu.matmul %79, %80, %cst_56 {dimension_numbers = #tpu.dot_dimension_numbers<[1], [0], [0], [1], [0, 0, 1, 1], [], []>} : vector<96x64xf32>, vector<64x128xf32>, vector<96x128xf32> -> vector<96x128xf32>
    %82 = arith.addf %78, %81 : vector<96x128xf32>
    %c26_57 = arith.constant 26 : index
    %c0_58 = arith.constant 0 : index
    %83 = vector.load %arg7[%c26_57, %c0_58] : memref<152x64xf32, #tpu.memory_space<vmem>>, vector<96x64xf32>
    %c768 = arith.constant 768 : index
    %c0_59 = arith.constant 0 : index
    %84 = vector.load %arg4[%c768, %c0_59] : memref<1600x128xf32, #tpu.memory_space<vmem>>, vector<64x128xf32>
    %cst_60 = arith.constant dense<0.000000e+00> : vector<96x128xf32>
    %85 = tpu.matmul %83, %84, %cst_60 {dimension_numbers = #tpu.dot_dimension_numbers<[1], [0], [0], [1], [0, 0, 1, 1], [], []>} : vector<96x64xf32>, vector<64x128xf32>, vector<96x128xf32> -> vector<96x128xf32>
    %86 = arith.addf %82, %85 : vector<96x128xf32>
    %c27 = arith.constant 27 : index
    %c0_61 = arith.constant 0 : index
    %87 = vector.load %arg7[%c27, %c0_61] : memref<152x64xf32, #tpu.memory_space<vmem>>, vector<96x64xf32>
    %c832 = arith.constant 832 : index
    %c0_62 = arith.constant 0 : index
    %88 = vector.load %arg4[%c832, %c0_62] : memref<1600x128xf32, #tpu.memory_space<vmem>>, vector<64x128xf32>
    %cst_63 = arith.constant dense<0.000000e+00> : vector<96x128xf32>
    %89 = tpu.matmul %87, %88, %cst_63 {dimension_numbers = #tpu.dot_dimension_numbers<[1], [0], [0], [1], [0, 0, 1, 1], [], []>} : vector<96x64xf32>, vector<64x128xf32>, vector<96x128xf32> -> vector<96x128xf32>
    %90 = arith.addf %86, %89 : vector<96x128xf32>
    %c28 = arith.constant 28 : index
    %c0_64 = arith.constant 0 : index
    %91 = vector.load %arg7[%c28, %c0_64] : memref<152x64xf32, #tpu.memory_space<vmem>>, vector<96x64xf32>
    %c896 = arith.constant 896 : index
    %c0_65 = arith.constant 0 : index
    %92 = vector.load %arg4[%c896, %c0_65] : memref<1600x128xf32, #tpu.memory_space<vmem>>, vector<64x128xf32>
    %cst_66 = arith.constant dense<0.000000e+00> : vector<96x128xf32>
    %93 = tpu.matmul %91, %92, %cst_66 {dimension_numbers = #tpu.dot_dimension_numbers<[1], [0], [0], [1], [0, 0, 1, 1], [], []>} : vector<96x64xf32>, vector<64x128xf32>, vector<96x128xf32> -> vector<96x128xf32>
    %94 = arith.addf %90, %93 : vector<96x128xf32>
    %c36 = arith.constant 36 : index
    %c0_67 = arith.constant 0 : index
    %95 = vector.load %arg7[%c36, %c0_67] : memref<152x64xf32, #tpu.memory_space<vmem>>, vector<96x64xf32>
    %c960 = arith.constant 960 : index
    %c0_68 = arith.constant 0 : index
    %96 = vector.load %arg4[%c960, %c0_68] : memref<1600x128xf32, #tpu.memory_space<vmem>>, vector<64x128xf32>
    %cst_69 = arith.constant dense<0.000000e+00> : vector<96x128xf32>
    %97 = tpu.matmul %95, %96, %cst_69 {dimension_numbers = #tpu.dot_dimension_numbers<[1], [0], [0], [1], [0, 0, 1, 1], [], []>} : vector<96x64xf32>, vector<64x128xf32>, vector<96x128xf32> -> vector<96x128xf32>
    %98 = arith.addf %94, %97 : vector<96x128xf32>
    %c37 = arith.constant 37 : index
    %c0_70 = arith.constant 0 : index
    %99 = vector.load %arg7[%c37, %c0_70] : memref<152x64xf32, #tpu.memory_space<vmem>>, vector<96x64xf32>
    %c1024 = arith.constant 1024 : index
    %c0_71 = arith.constant 0 : index
    %100 = vector.load %arg4[%c1024, %c0_71] : memref<1600x128xf32, #tpu.memory_space<vmem>>, vector<64x128xf32>
    %cst_72 = arith.constant dense<0.000000e+00> : vector<96x128xf32>
    %101 = tpu.matmul %99, %100, %cst_72 {dimension_numbers = #tpu.dot_dimension_numbers<[1], [0], [0], [1], [0, 0, 1, 1], [], []>} : vector<96x64xf32>, vector<64x128xf32>, vector<96x128xf32> -> vector<96x128xf32>
    %102 = arith.addf %98, %101 : vector<96x128xf32>
    %c38_73 = arith.constant 38 : index
    %c0_74 = arith.constant 0 : index
    %103 = vector.load %arg7[%c38_73, %c0_74] : memref<152x64xf32, #tpu.memory_space<vmem>>, vector<96x64xf32>
    %c1088 = arith.constant 1088 : index
    %c0_75 = arith.constant 0 : index
    %104 = vector.load %arg4[%c1088, %c0_75] : memref<1600x128xf32, #tpu.memory_space<vmem>>, vector<64x128xf32>
    %cst_76 = arith.constant dense<0.000000e+00> : vector<96x128xf32>
    %105 = tpu.matmul %103, %104, %cst_76 {dimension_numbers = #tpu.dot_dimension_numbers<[1], [0], [0], [1], [0, 0, 1, 1], [], []>} : vector<96x64xf32>, vector<64x128xf32>, vector<96x128xf32> -> vector<96x128xf32>
    %106 = arith.addf %102, %105 : vector<96x128xf32>
    %c39 = arith.constant 39 : index
    %c0_77 = arith.constant 0 : index
    %107 = vector.load %arg7[%c39, %c0_77] : memref<152x64xf32, #tpu.memory_space<vmem>>, vector<96x64xf32>
    %c1152 = arith.constant 1152 : index
    %c0_78 = arith.constant 0 : index
    %108 = vector.load %arg4[%c1152, %c0_78] : memref<1600x128xf32, #tpu.memory_space<vmem>>, vector<64x128xf32>
    %cst_79 = arith.constant dense<0.000000e+00> : vector<96x128xf32>
    %109 = tpu.matmul %107, %108, %cst_79 {dimension_numbers = #tpu.dot_dimension_numbers<[1], [0], [0], [1], [0, 0, 1, 1], [], []>} : vector<96x64xf32>, vector<64x128xf32>, vector<96x128xf32> -> vector<96x128xf32>
    %110 = arith.addf %106, %109 : vector<96x128xf32>
    %c40 = arith.constant 40 : index
    %c0_80 = arith.constant 0 : index
    %111 = vector.load %arg7[%c40, %c0_80] : memref<152x64xf32, #tpu.memory_space<vmem>>, vector<96x64xf32>
    %c1216 = arith.constant 1216 : index
    %c0_81 = arith.constant 0 : index
    %112 = vector.load %arg4[%c1216, %c0_81] : memref<1600x128xf32, #tpu.memory_space<vmem>>, vector<64x128xf32>
    %cst_82 = arith.constant dense<0.000000e+00> : vector<96x128xf32>
    %113 = tpu.matmul %111, %112, %cst_82 {dimension_numbers = #tpu.dot_dimension_numbers<[1], [0], [0], [1], [0, 0, 1, 1], [], []>} : vector<96x64xf32>, vector<64x128xf32>, vector<96x128xf32> -> vector<96x128xf32>
    %114 = arith.addf %110, %113 : vector<96x128xf32>
    %c48 = arith.constant 48 : index
    %c0_83 = arith.constant 0 : index
    %115 = vector.load %arg7[%c48, %c0_83] : memref<152x64xf32, #tpu.memory_space<vmem>>, vector<96x64xf32>
    %c1280 = arith.constant 1280 : index
    %c0_84 = arith.constant 0 : index
    %116 = vector.load %arg4[%c1280, %c0_84] : memref<1600x128xf32, #tpu.memory_space<vmem>>, vector<64x128xf32>
    %cst_85 = arith.constant dense<0.000000e+00> : vector<96x128xf32>
    %117 = tpu.matmul %115, %116, %cst_85 {dimension_numbers = #tpu.dot_dimension_numbers<[1], [0], [0], [1], [0, 0, 1, 1], [], []>} : vector<96x64xf32>, vector<64x128xf32>, vector<96x128xf32> -> vector<96x128xf32>
    %118 = arith.addf %114, %117 : vector<96x128xf32>
    %c49 = arith.constant 49 : index
    %c0_86 = arith.constant 0 : index
    %119 = vector.load %arg7[%c49, %c0_86] : memref<152x64xf32, #tpu.memory_space<vmem>>, vector<96x64xf32>
    %c1344 = arith.constant 1344 : index
    %c0_87 = arith.constant 0 : index
    %120 = vector.load %arg4[%c1344, %c0_87] : memref<1600x128xf32, #tpu.memory_space<vmem>>, vector<64x128xf32>
    %cst_88 = arith.constant dense<0.000000e+00> : vector<96x128xf32>
    %121 = tpu.matmul %119, %120, %cst_88 {dimension_numbers = #tpu.dot_dimension_numbers<[1], [0], [0], [1], [0, 0, 1, 1], [], []>} : vector<96x64xf32>, vector<64x128xf32>, vector<96x128xf32> -> vector<96x128xf32>
    %122 = arith.addf %118, %121 : vector<96x128xf32>
    %c50_89 = arith.constant 50 : index
    %c0_90 = arith.constant 0 : index
    %123 = vector.load %arg7[%c50_89, %c0_90] : memref<152x64xf32, #tpu.memory_space<vmem>>, vector<96x64xf32>
    %c1408 = arith.constant 1408 : index
    %c0_91 = arith.constant 0 : index
    %124 = vector.load %arg4[%c1408, %c0_91] : memref<1600x128xf32, #tpu.memory_space<vmem>>, vector<64x128xf32>
    %cst_92 = arith.constant dense<0.000000e+00> : vector<96x128xf32>
    %125 = tpu.matmul %123, %124, %cst_92 {dimension_numbers = #tpu.dot_dimension_numbers<[1], [0], [0], [1], [0, 0, 1, 1], [], []>} : vector<96x64xf32>, vector<64x128xf32>, vector<96x128xf32> -> vector<96x128xf32>
    %126 = arith.addf %122, %125 : vector<96x128xf32>
    %c51 = arith.constant 51 : index
    %c0_93 = arith.constant 0 : index
    %127 = vector.load %arg7[%c51, %c0_93] : memref<152x64xf32, #tpu.memory_space<vmem>>, vector<96x64xf32>
    %c1472 = arith.constant 1472 : index
    %c0_94 = arith.constant 0 : index
    %128 = vector.load %arg4[%c1472, %c0_94] : memref<1600x128xf32, #tpu.memory_space<vmem>>, vector<64x128xf32>
    %cst_95 = arith.constant dense<0.000000e+00> : vector<96x128xf32>
    %129 = tpu.matmul %127, %128, %cst_95 {dimension_numbers = #tpu.dot_dimension_numbers<[1], [0], [0], [1], [0, 0, 1, 1], [], []>} : vector<96x64xf32>, vector<64x128xf32>, vector<96x128xf32> -> vector<96x128xf32>
    %130 = arith.addf %126, %129 : vector<96x128xf32>
    %c52 = arith.constant 52 : index
    %c0_96 = arith.constant 0 : index
    %131 = vector.load %arg7[%c52, %c0_96] : memref<152x64xf32, #tpu.memory_space<vmem>>, vector<96x64xf32>
    %c1536 = arith.constant 1536 : index
    %c0_97 = arith.constant 0 : index
    %132 = vector.load %arg4[%c1536, %c0_97] : memref<1600x128xf32, #tpu.memory_space<vmem>>, vector<64x128xf32>
    %cst_98 = arith.constant dense<0.000000e+00> : vector<96x128xf32>
    %133 = tpu.matmul %131, %132, %cst_98 {dimension_numbers = #tpu.dot_dimension_numbers<[1], [0], [0], [1], [0, 0, 1, 1], [], []>} : vector<96x64xf32>, vector<64x128xf32>, vector<96x128xf32> -> vector<96x128xf32>
    %134 = arith.addf %130, %133 : vector<96x128xf32>
    %c0_99 = arith.constant 0 : index
    %c0_100 = arith.constant 0 : index
    %135 = vector.load %arg5[%c0_99, %c0_100] : memref<1x128xf32, #tpu.memory_space<vmem>>, vector<1x128xf32>
    %136 = vector.broadcast %135 : vector<1x128xf32> to vector<96x128xf32>
    %137 = arith.addf %134, %136 : vector<96x128xf32>
    %cst_101 = arith.constant 0.000000e+00 : f32
    %138 = vector.broadcast %cst_101 : f32 to vector<96x128xf32>
    %139 = arith.maximumf %137, %138 : vector<96x128xf32>
    %c0_102 = arith.constant 0 : index
    %c0_103 = arith.constant 0 : index
    %c0_104 = arith.constant 0 : index
    %140 = vector.load %arg6[%c0_102, %c0_103, %c0_104] : memref<1x96x128xf32, #tpu.memory_space<vmem>>, vector<1x96x128xf32>
    %141 = vector.shape_cast %140 : vector<1x96x128xf32> to vector<96x128xf32>
    %142 = vector.shape_cast %139 : vector<96x128xf32> to vector<1x96x128xf32>
    tpu.vector_store %arg6[%c0_102, %c0_103, %c0_104], %142 {strides = array<i32>} : memref<1x96x128xf32, #tpu.memory_space<vmem>>, vector<1x96x128xf32>,
    return
  }
  func.func @transform_0(%arg0: i32) -> (i32, i32, i32) {
    %c0_i32 = arith.constant 0 : i32
    %c0_i32_0 = arith.constant 0 : i32
    %c0_i32_1 = arith.constant 0 : i32
    return %arg0, %c0_i32, %c0_i32_0 : i32, i32, i32
  }
  func.func @transform_1(%arg0: i32) -> (i32, i32) {
    %c0_i32 = arith.constant 0 : i32
    %c0_i32_0 = arith.constant 0 : i32
    %c0_i32_1 = arith.constant 0 : i32
    return %c0_i32, %c0_i32_0 : i32, i32
  }
  func.func @transform_2(%arg0: i32) -> (i32, i32) {
    %c0_i32 = arith.constant 0 : i32
    %c0_i32_0 = arith.constant 0 : i32
    %c0_i32_1 = arith.constant 0 : i32
    return %c0_i32, %c0_i32_0 : i32, i32
  }
  func.func @transform_3(%arg0: i32) -> (i32, i32) {
    %c0_i32 = arith.constant 0 : i32
    %c0_i32_0 = arith.constant 0 : i32
    %c0_i32_1 = arith.constant 0 : i32
    return %c0_i32, %c0_i32_0 : i32, i32
  }
  func.func @transform_4(%arg0: i32) -> (i32, i32) {
    %c0_i32 = arith.constant 0 : i32
    %c0_i32_0 = arith.constant 0 : i32
    %c0_i32_1 = arith.constant 0 : i32
    return %c0_i32, %c0_i32_0 : i32, i32
  }
  func.func @transform_5(%arg0: i32) -> (i32, i32, i32) {
    %c0_i32 = arith.constant 0 : i32
    %c0_i32_0 = arith.constant 0 : i32
    %c0_i32_1 = arith.constant 0 : i32
    return %arg0, %c0_i32, %c0_i32_0 : i32, i32, i32
  }
}

</mosaic_0001>

<llo_original>
// kernel: simple_cnn_forward.1
$region0: #{simple_cnn_forward.1}
  #allocation0 [shape = 'u32[]', space=smem, size = 0x4, offset = 0x4, fixed_abs, tag = 'smem constant byte address 0x4 - core index']
  #allocation1 [shape = 'u32[144,128]{1,0:T(1,128)}', space=vmem, size = 0x12000, scoped, tag = 'internal scratch']
  #allocation2 [shape = 'f32[152,64]{1,0:T(8,128)}', space=vmem, size = 0x13000, scoped, tag = 'scratch operand']
  %s0 = inlined_call_operand.vmem [shape: f32[2,256,147], index: 0, kind: input, shape index: {}]
  %s1 = inlined_call_operand.vmem [shape: f32[147,64], index: 1, kind: input, shape index: {}]
  %s2 = inlined_call_operand.vmem [shape: f32[1,64], index: 2, kind: input, shape index: {}]
  %s3 = inlined_call_operand.vmem [shape: f32[1600,128], index: 3, kind: input, shape index: {}]
  %s4 = inlined_call_operand.vmem [shape: f32[1,128], index: 4, kind: input, shape index: {}]
  %s5 = inlined_call_operand.vmem [shape: f32[2,96,128], index: 5, kind: output, shape index: {}]
  %s6 = sld [smem:[#allocation0]]
  $region53: #{simple_cnn_forward.1} parent=0
    _
  %s8 = ssub.s32 1, %s6
  %s9 = scalar_select 0, %s8, %s6
  loop: start=0, step=1, limit=4
  $region2: #{simple_cnn_forward.1} parent=0 // loop_pre_header
    _
  $region3: #{simple_cnn_forward.1} parent=0 // loop_header
    %s11 = sphi 0, %s15
    %p12 = scmp.ge.s32.totalorder %s11, 4
    %s21 = sphi 0, %s23
    %s24 = sphi 0, %s21
    %s25 = sphi 0, %s24
    %s41 = sphi 0, %s25
    %s45 = sphi 0, %s45
    %s47 = sphi 0, %s45
    %s48 = sphi 0, %s47
    %s62 = sphi 0, %s48
    %s66 = sphi 0, %s66
    %s68 = sphi 0, %s66
    %s69 = sphi 0, %s68
    %s83 = sphi 0, %s69
    %s87 = sphi 0, %s87
    %s89 = sphi 0, %s87
    %s90 = sphi 0, %s89
    %s104 = sphi 0, %s90
    %s108 = sphi 0, %s108
    %s110 = sphi 0, %s108
    %s111 = sphi 0, %s110
    %s125 = sphi 0, %s111
    %s131 = sphi 0, %s133
    %s134 = sphi 0, %s131
    %s135 = sphi 0, %s134
    %s151 = sphi 0, %s135
  $region4: #{simple_cnn_forward.1} parent=0 // loop_header_branch
    %14 = sbr.rel (%p12) target = $region8
  $region5: #{simple_cnn_forward.1} parent=0 // loop_body
    %s16 = ssub.s32 %s11, 1
    %s17 = ssub.s32 %s11, 2
    %s18 = sadd.s32 %s11, 1
    %s19 = ssub.s32 %s11, %s18
    %p20 = scmp.eq.s32.totalorder %s19, 0
    %s22 = sadd.s32 %s21, 1
    %s23 = scalar_select %p20, %s21, %s22
    %p26 = pneg %p20
    %p27 = scmp.eq.s32.totalorder %s11, 1
    %p28 = por %p26, %p27
    %p29 = scmp.ne.s32.totalorder %s21, %s24
    %p30 = scmp.eq.s32.totalorder %s11, 0
    %p31 = por %p29, %p30
    %p32 = scmp.ne.s32.totalorder %s21, %s24
    %p33 = scmp.eq.s32.totalorder %s16, 1
    %p34 = por %p32, %p33
    %p35 = scmp.ne.s32.totalorder %s24, %s25
    %p36 = scmp.eq.s32.totalorder %s16, 0
    %p37 = por %p35, %p36
    %p38 = scmp.ne.s32.totalorder %s24, %s25
    %p39 = scmp.eq.s32.totalorder %s17, 1
    %p40 = por %p38, %p39
    %p42 = scmp.ne.s32.totalorder %s25, %s41
    %p43 = scmp.eq.s32.totalorder %s17, 0
    %p44 = por %p42, %p43
    %s46 = sadd.s32 %s45, 1
    %p49 = scmp.eq.s32.totalorder %s11, 1
    %p50 = scmp.ne.s32.totalorder %s45, %s47
    %p51 = scmp.eq.s32.totalorder %s11, 0
    %p52 = por %p50, %p51
    %p53 = scmp.ne.s32.totalorder %s45, %s47
    %p54 = scmp.eq.s32.totalorder %s16, 1
    %p55 = por %p53, %p54
    %p56 = scmp.ne.s32.totalorder %s47, %s48
    %p57 = scmp.eq.s32.totalorder %s16, 0
    %p58 = por %p56, %p57
    %p59 = scmp.ne.s32.totalorder %s47, %s48
    %p60 = scmp.eq.s32.totalorder %s17, 1
    %p61 = por %p59, %p60
    %p63 = scmp.ne.s32.totalorder %s48, %s62
    %p64 = scmp.eq.s32.totalorder %s17, 0
    %p65 = por %p63, %p64
    %s67 = sadd.s32 %s66, 1
    %p70 = scmp.eq.s32.totalorder %s11, 1
    %p71 = scmp.ne.s32.totalorder %s66, %s68
    %p72 = scmp.eq.s32.totalorder %s11, 0
    %p73 = por %p71, %p72
    %p74 = scmp.ne.s32.totalorder %s66, %s68
    %p75 = scmp.eq.s32.totalorder %s16, 1
    %p76 = por %p74, %p75
    %p77 = scmp.ne.s32.totalorder %s68, %s69
    %p78 = scmp.eq.s32.totalorder %s16, 0
    %p79 = por %p77, %p78
    %p80 = scmp.ne.s32.totalorder %s68, %s69
    %p81 = scmp.eq.s32.totalorder %s17, 1
    %p82 = por %p80, %p81
    %p84 = scmp.ne.s32.totalorder %s69, %s83
    %p85 = scmp.eq.s32.totalorder %s17, 0
    %p86 = por %p84, %p85
    %s88 = sadd.s32 %s87, 1
    %p91 = scmp.eq.s32.totalorder %s11, 1
    %p92 = scmp.ne.s32.totalorder %s87, %s89
    %p93 = scmp.eq.s32.totalorder %s11, 0
    %p94 = por %p92, %p93
    %p95 = scmp.ne.s32.totalorder %s87, %s89
    %p96 = scmp.eq.s32.totalorder %s16, 1
    %p97 = por %p95, %p96
    %p98 = scmp.ne.s32.totalorder %s89, %s90
    %p99 = scmp.eq.s32.totalorder %s16, 0
    %p100 = por %p98, %p99
    %p101 = scmp.ne.s32.totalorder %s89, %s90
    %p102 = scmp.eq.s32.totalorder %s17, 1
    %p103 = por %p101, %p102
    %p105 = scmp.ne.s32.totalorder %s90, %s104
    %p106 = scmp.eq.s32.totalorder %s17, 0
    %p107 = por %p105, %p106
    %s109 = sadd.s32 %s108, 1
    %p112 = scmp.eq.s32.totalorder %s11, 1
    %p113 = scmp.ne.s32.totalorder %s108, %s110
    %p114 = scmp.eq.s32.totalorder %s11, 0
    %p115 = por %p113, %p114
    %p116 = scmp.ne.s32.totalorder %s108, %s110
    %p117 = scmp.eq.s32.totalorder %s16, 1
    %p118 = por %p116, %p117
    %p119 = scmp.ne.s32.totalorder %s110, %s111
    %p120 = scmp.eq.s32.totalorder %s16, 0
    %p121 = por %p119, %p120
    %p122 = scmp.ne.s32.totalorder %s110, %s111
    %p123 = scmp.eq.s32.totalorder %s17, 1
    %p124 = por %p122, %p123
    %p126 = scmp.ne.s32.totalorder %s111, %s125
    %p127 = scmp.eq.s32.totalorder %s17, 0
    %p128 = por %p126, %p127
    %s129 = ssub.s32 %s11, %s18
    %p130 = scmp.eq.s32.totalorder %s129, 0
    %s132 = sadd.s32 %s131, 1
    %s133 = scalar_select %p130, %s131, %s132
    %p136 = pneg %p130
    %p137 = scmp.eq.s32.totalorder %s11, 1
    %p138 = por %p136, %p137
    %p139 = scmp.ne.s32.totalorder %s131, %s134
    %p140 = scmp.eq.s32.totalorder %s11, 0
    %p141 = por %p139, %p140
    %p142 = scmp.ne.s32.totalorder %s131, %s134
    %p143 = scmp.eq.s32.totalorder %s16, 1
    %p144 = por %p142, %p143
    %p145 = scmp.ne.s32.totalorder %s134, %s135
    %p146 = scmp.eq.s32.totalorder %s16, 0
    %p147 = por %p145, %p146
    %p148 = scmp.ne.s32.totalorder %s134, %s135
    %p149 = scmp.eq.s32.totalorder %s17, 1
    %p150 = por %p148, %p149
    %p152 = scmp.ne.s32.totalorder %s135, %s151
    %p153 = scmp.eq.s32.totalorder %s17, 0
    %p154 = por %p152, %p153
    %p155 = scmp.le.s32.totalorder 1, %s11
    %p156 = scmp.lt.s32.totalorder %s11, 3
    %p157 = pnand %p155, %p156
    %p158 = pneg %p157
    // Predicated region
    $region9: #{simple_cnn_forward.1} parent=5 // pred_check
      _
    $region10: #{simple_cnn_forward.1} parent=5 // pred_check_branch
      %160 = sbr.rel (%p157) target = $region12
    $region11: #{simple_cnn_forward.1} parent=5 // pred_region
      %s161 = ssub.s32 %s11, 1
      // Predicated region
      $region13: #{simple_cnn_forward.1} parent=11 // pred_check
        %p162 = pneg %p58
      $region14: #{simple_cnn_forward.1} parent=11 // pred_check_branch
        %164 = sbr.rel (%p162) target = $region16
      $region15: #{simple_cnn_forward.1} parent=11 // pred_region
        _
      $region16: #{simple_cnn_forward.1} parent=11 // pred_fallthru
        _
      // Predicated region
      $region17: #{simple_cnn_forward.1} parent=11 // pred_check
        %p165 = pneg %p79
      $region18: #{simple_cnn_forward.1} parent=11 // pred_check_branch
        %167 = sbr.rel (%p165) target = $region20
      $region19: #{simple_cnn_forward.1} parent=11 // pred_region
        _
      $region20: #{simple_cnn_forward.1} parent=11 // pred_fallthru
        _
      // Predicated region
      $region21: #{simple_cnn_forward.1} parent=11 // pred_check
        %p168 = pneg %p100
      $region22: #{simple_cnn_forward.1} parent=11 // pred_check_branch
        %170 = sbr.rel (%p168) target = $region24
      $region23: #{simple_cnn_forward.1} parent=11 // pred_region
        _
      $region24: #{simple_cnn_forward.1} parent=11 // pred_fallthru
        _
      // Predicated region
      $region25: #{simple_cnn_forward.1} parent=11 // pred_check
        %p171 = pneg %p121
      $region26: #{simple_cnn_forward.1} parent=11 // pred_check_branch
        %173 = sbr.rel (%p171) target = $region28
      $region27: #{simple_cnn_forward.1} parent=11 // pred_region
        _
      $region28: #{simple_cnn_forward.1} parent=11 // pred_fallthru
        _
    $region12: #{simple_cnn_forward.1} parent=5 // pred_fallthru
      _
    %p174 = scmp.lt.s32.totalorder %s11, 2
    // Predicated region
    $region29: #{simple_cnn_forward.1} parent=5 // pred_check
      %p175 = pneg %p174
    $region30: #{simple_cnn_forward.1} parent=5 // pred_check_branch
      %177 = sbr.rel (%p175) target = $region32
    $region31: #{simple_cnn_forward.1} parent=5 // pred_region
      // Predicated region
      $region33: #{simple_cnn_forward.1} parent=31 // pred_check
        %p178 = pneg %p31
      $region34: #{simple_cnn_forward.1} parent=31 // pred_check_branch
        %180 = sbr.rel (%p178) target = $region36
      $region35: #{simple_cnn_forward.1} parent=31 // pred_region
        %p181 = scmp.lt.s32.totalorder %s11, 1
        %s182 = scalar_select %p181, %s11, 1
        %s183 = smul.addr %s182, 64
        %s184 = smul.addr %s183, 8
        %s185 = scalar_lea.vmem %s0, %s184
      $region36: #{simple_cnn_forward.1} parent=31 // pred_fallthru
        _
    $region32: #{simple_cnn_forward.1} parent=5 // pred_fallthru
      _
    %p186 = scmp.le.s32.totalorder 1, %s11
    %p187 = scmp.lt.s32.totalorder %s11, 3
    %p188 = pnand %p186, %p187
    %p189 = pneg %p188
    // Predicated region
    $region37: #{simple_cnn_forward.1} parent=5 // pred_check
      _
    $region38: #{simple_cnn_forward.1} parent=5 // pred_check_branch
      %191 = sbr.rel (%p188) target = $region40
    $region39: #{simple_cnn_forward.1} parent=5 // pred_region
      %s192 = ssub.s32 %s11, 1
      %p193 = scmp.lt.s32.totalorder %s16, 1
      %s194 = scalar_select %p193, %s16, 1
      %s195 = smul.addr %s194, 64
      %s196 = smul.addr %s195, 8
      %s197 = scalar_lea.vmem %s0, %s196
      %p198 = pneg %p37
      %p199 = pneg %p34
      %p200 = pneg %p58
      %p201 = pneg %p55
      %p202 = pneg %p79
      %p203 = pneg %p76
      %p204 = pneg %p100
      %p205 = pneg %p97
      %p206 = pneg %p121
      %p207 = pneg %p118
      %p208 = pneg %p147
      %p209 = pneg %p144
      %p210 = scmp.lt.s32.totalorder %s16, 1
      %s211 = scalar_select %p210, %s16, 1
      %s212 = smul.addr %s211, 12
      %s213 = smul.addr %s212, 8
      %s214 = scalar_lea.vmem %s5, %s213
      %p215 = scmp.lt.s32.totalorder %s16, 1
      %s216 = scalar_select %p215, %s16, 1
      %s217 = smul.addr %s216, 64
      %s218 = smul.addr %s217, 8
      %s219 = scalar_lea.vmem %s0, %s218
      %p220 = scmp.lt.s32.totalorder %s16, 1
      %s221 = scalar_select %p220, %s16, 1
      %s222 = smul.addr %s221, 12
      %s223 = smul.addr %s222, 8
      %s224 = scalar_lea.vmem %s5, %s223
      %v225 = vld [vmem:[%s219] sm:$0xff]
      %v226 = vld [vmem:[%s219 + $0x8] sm:$0xff]
      %v227 = vld [vmem:[%s219 + $0x10] sm:$0xff]
      %v228 = vld [vmem:[%s219 + $0x18] sm:$0xff]
      %v229 = vld [vmem:[%s219 + $0x20] sm:$0xff]
      %v230 = vld [vmem:[%s219 + $0x28] sm:$0xff]
      %v231 = vld [vmem:[%s219 + $0x30] sm:$0xff]
      %v232 = vld [vmem:[%s219 + $0x38] sm:$0xff]
      %v233 = vld [vmem:[%s219 + $0x40] sm:$0xff]
      %v234 = vld [vmem:[%s219 + $0x48] sm:$0xff]
      %v235 = vld [vmem:[%s219 + $0x50] sm:$0xff]
      %v236 = vld [vmem:[%s219 + $0x58] sm:$0xff]
      %v237 = vld [vmem:[%s219 + $0x60] sm:$0xff]
      %v238 = vld [vmem:[%s219 + $0x68] sm:$0xff]
      %v239 = vld [vmem:[%s219 + $0x70] sm:$0xff]
      %v240 = vld [vmem:[%s219 + $0x78] sm:$0xff]
      %v241 = vld [vmem:[%s219 + $0x80] sm:$0xff]
      %v242 = vld [vmem:[%s219 + $0x88] sm:$0xff]
      %v243 = vld [vmem:[%s219 + $0x90] sm:$0xff]
      %v244 = vld [vmem:[%s219 + $0x98] sm:$0xff]
      %v245 = vld [vmem:[%s219 + $0xa0] sm:$0xff]
      %v246 = vld [vmem:[%s219 + $0xa8] sm:$0xff]
      %v247 = vld [vmem:[%s219 + $0xb0] sm:$0xff]
      %v248 = vld [vmem:[%s219 + $0xb8] sm:$0xff]
      %v249 = vld [vmem:[%s219 + $0xc0] sm:$0xff]
      %v250 = vld [vmem:[%s219 + $0xc8] sm:$0xff]
      %v251 = vld [vmem:[%s219 + $0xd0] sm:$0xff]
      %v252 = vld [vmem:[%s219 + $0xd8] sm:$0xff]
      %v253 = vld [vmem:[%s219 + $0xe0] sm:$0xff]
      %v254 = vld [vmem:[%s219 + $0xe8] sm:$0xff]
      %v255 = vld [vmem:[%s219 + $0xf0] sm:$0xff]
      %v256 = vld [vmem:[%s219 + $0xf8] sm:$0xff]
      %v257 = vld [vmem:[%s219 + $0x100] sm:$0xff]
      %v258 = vld [vmem:[%s219 + $0x108] sm:$0xff]
      %v259 = vld [vmem:[%s219 + $0x110] sm:$0xff]
      %v260 = vld [vmem:[%s219 + $0x118] sm:$0xff]
      %v261 = vld [vmem:[%s219 + $0x120] sm:$0xff]
      %v262 = vld [vmem:[%s219 + $0x128] sm:$0xff]
      %v263 = vld [vmem:[%s219 + $0x130] sm:$0xff]
      %v264 = vld [vmem:[%s219 + $0x138] sm:$0xff]
      %v265 = vld [vmem:[%s219 + $0x140] sm:$0xff]
      %v266 = vld [vmem:[%s219 + $0x148] sm:$0xff]
      %v267 = vld [vmem:[%s219 + $0x150] sm:$0xff]
      %v268 = vld [vmem:[%s219 + $0x158] sm:$0xff]
      %v269 = vld [vmem:[%s219 + $0x160] sm:$0xff]
      %v270 = vld [vmem:[%s219 + $0x168] sm:$0xff]
      %v271 = vld [vmem:[%s219 + $0x170] sm:$0xff]
      %v272 = vld [vmem:[%s219 + $0x178] sm:$0xff]
      %v273 = vld [vmem:[%s219 + $0x180] sm:$0xff]
      %v274 = vld [vmem:[%s219 + $0x188] sm:$0xff]
      %v275 = vld [vmem:[%s219 + $0x190] sm:$0xff]
      %v276 = vld [vmem:[%s219 + $0x198] sm:$0xff]
      %v277 = vld [vmem:[%s219 + $0x1a0] sm:$0xff]
      %v278 = vld [vmem:[%s219 + $0x1a8] sm:$0xff]
      %v279 = vld [vmem:[%s219 + $0x1b0] sm:$0xff]
      %v280 = vld [vmem:[%s219 + $0x1b8] sm:$0xff]
      %v281 = vld [vmem:[%s219 + $0x1c0] sm:$0xff]
      %v282 = vld [vmem:[%s219 + $0x1c8] sm:$0xff]
      %v283 = vld [vmem:[%s219 + $0x1d0] sm:$0xff]
      %v284 = vld [vmem:[%s219 + $0x1d8] sm:$0xff]
      %v285 = vld [vmem:[%s219 + $0x1e0] sm:$0xff]
      %v286 = vld [vmem:[%s219 + $0x1e8] sm:$0xff]
      %v287 = vld [vmem:[%s219 + $0x1f0] sm:$0xff]
      %v288 = vld [vmem:[%s219 + $0x1f8] sm:$0xff]
      %v289 = vld [vmem:[%s1] sm:$0xff]
      %v290 = vld [vmem:[%s1 + $0x8] sm:$0xff]
      %v291 = vld [vmem:[%s1 + $0x10] sm:$0xff]
      %v292 = vld [vmem:[%s1 + $0x18] sm:$0xff]
      %v293 = vld [vmem:[%s1 + $0x20] sm:$0xff]
      %v294 = vld [vmem:[%s1 + $0x28] sm:$0xff]
      %v295 = vld [vmem:[%s1 + $0x30] sm:$0xff]
      %v296 = vld [vmem:[%s1 + $0x38] sm:$0xff]
      %v297 = vld [vmem:[%s1 + $0x40] sm:$0xff]
      %v298 = vld [vmem:[%s1 + $0x48] sm:$0xff]
      %v299 = vld [vmem:[%s1 + $0x50] sm:$0xff]
      %v300 = vld [vmem:[%s1 + $0x58] sm:$0xff]
      %v301 = vld [vmem:[%s1 + $0x60] sm:$0xff]
      %v302 = vld [vmem:[%s1 + $0x68] sm:$0xff]
      %v303 = vld [vmem:[%s1 + $0x70] sm:$0xff]
      %v304 = vld [vmem:[%s1 + $0x78] sm:$0xff]
      %v305 = vld [vmem:[%s1 + $0x80] sm:$0xff]
      %v306 = vld [vmem:[%s1 + $0x88] sm:$0xff]
      %v307 = vld [vmem:[%s1 + $0x90] sm:$0x7]
      %v308 = vld [vmem:[%s2] sm:$0x1]
      %v310 = vlaneseq
      %v311 = vshrl.u32 %v310, 7
      %v312 = vsub.s32 0, %v311
      %v313 = vrot.slane %v308, %v312
      %vm315 = vcmask 154624
      %v317 = vsel %vm315, %v226, 0
      %v320 = vsel %vm315, %v228, 0
      %v323 = vsel %vm315, %v230, 0
      %v326 = vsel %vm315, %v232, 0
      %v329 = vsel %vm315, %v234, 0
      %v332 = vsel %vm315, %v236, 0
      %v335 = vsel %vm315, %v238, 0
      %v338 = vsel %vm315, %v240, 0
      %v341 = vsel %vm315, %v242, 0
      %v344 = vsel %vm315, %v244, 0
      %v347 = vsel %vm315, %v246, 0
      %v350 = vsel %vm315, %v248, 0
      %v353 = vsel %vm315, %v250, 0
      %v356 = vsel %vm315, %v252, 0
      %v359 = vsel %vm315, %v254, 0
      %v362 = vsel %vm315, %v256, 0
      %v365 = vsel %vm315, %v258, 0
      %v368 = vsel %vm315, %v260, 0
      %v371 = vsel %vm315, %v262, 0
      %v374 = vsel %vm315, %v264, 0
      %v377 = vsel %vm315, %v266, 0
      %v380 = vsel %vm315, %v268, 0
      %v383 = vsel %vm315, %v270, 0
      %v386 = vsel %vm315, %v272, 0
      %v389 = vsel %vm315, %v274, 0
      %v392 = vsel %vm315, %v276, 0
      %v395 = vsel %vm315, %v278, 0
      %v398 = vsel %vm315, %v280, 0
      %v401 = vsel %vm315, %v282, 0
      %v404 = vsel %vm315, %v284, 0
      %v407 = vsel %vm315, %v286, 0
      %v410 = vsel %vm315, %v288, 0
      %vm412 = vcmask 1042432
      %v414 = vsel %vm412, %v307, 0
      %416 = vmatprep.subr.mxu0 0.0
      %417 = vmatpush1.msra.mxu0 %v289
      %418 = vmatprep.subr.mxu0 0.0
      %419 = vmatpush1.msra.mxu0 %v290
      %420 = vmatprep.subr.mxu0 0.0
      %421 = vmatpush1.msra.mxu0 %v291
      %422 = vmatprep.subr.mxu0 0.0
      %423 = vmatpush1.msra.mxu0 %v292
      %424 = vmatprep.subr.mxu0 0.0
      %425 = vmatpush1.msra.mxu0 %v293
      %426 = vmatprep.subr.mxu0 0.0
      %427 = vmatpush1.msra.mxu0 %v294
      %428 = vmatprep.subr.mxu0 0.0
      %429 = vmatpush1.msra.mxu0 %v295
      %430 = vmatprep.subr.mxu0 0.0
      %431 = vmatpush1.msra.mxu0 %v296
      %432 = vmatprep.subr.mxu0 0.0
      %433 = vmatpush1.msra.mxu0 %v297
      %434 = vmatprep.subr.mxu0 0.0
      %435 = vmatpush1.msra.mxu0 %v298
      %436 = vmatprep.subr.mxu0 0.0
      %437 = vmatpush1.msra.mxu0 %v299
      %438 = vmatprep.subr.mxu0 0.0
      %439 = vmatpush1.msra.mxu0 %v300
      %440 = vmatprep.subr.mxu0 0.0
      %441 = vmatpush1.msra.mxu0 %v301
      %442 = vmatprep.subr.mxu0 0.0
      %443 = vmatpush1.msra.mxu0 %v302
      %444 = vmatprep.subr.mxu0 0.0
      %445 = vmatpush1.msra.mxu0 %v303
      %446 = vmatprep.subr.mxu0 0.0
      %447 = vmatpush1.msra.mxu0 %v304
      %448 = vmatprep.subr.mxu0 0.0
      %449 = vmatpush1.msra.mxu0 %v305
      %450 = vmatprep.subr.mxu0 0.0
      %451 = vmatpush1.msra.mxu0 %v306
      %452 = vmatprep.subr.mxu0 0.0
      %453 = vmatpush1.msra.mxu0 %v414
      %454 = vmatprep.subr.mxu0 0.0
      %455 = vmatpush1.msra.mxu0 0.0
      %456 = vmatprep.subr.mxu0 0.0
      %457 = vmatpush1.msra.mxu0 0.0
      %458 = vmatprep.subr.mxu0 0.0
      %459 = vmatpush1.msra.mxu0 0.0
      %460 = vmatprep.subr.mxu0 0.0
      %461 = vmatpush1.msra.mxu0 0.0
      %462 = vmatprep.subr.mxu0 0.0
      %463 = vmatpush1.msra.mxu0 0.0
      %464 = vmatprep.subr.mxu0 0.0
      %465 = vmatpush1.msra.mxu0 0.0
      %466 = vmatprep.subr.mxu0 0.0
      %467 = vmatpush1.msra.mxu0 0.0
      %468 = vmatprep.subr.mxu0 0.0
      %469 = vmatpush1.msra.mxu0 0.0
      %470 = vmatprep.subr.mxu0 0.0
      %471 = vmatpush1.msra.mxu0 0.0
      %472 = vmatprep.subr.mxu0 0.0
      %473 = vmatpush1.msra.mxu0 0.0
      %474 = vmatprep.subr.mxu0 0.0
      %475 = vmatpush1.msra.mxu0 0.0
      %476 = vmatprep.subr.mxu0 0.0
      %477 = vmatpush1.msra.mxu0 0.0
      %478 = vmatprep.subr.mxu0 0.0
      %479 = vmatpush1.msra.mxu0 0.0
      %480 = vmatprep.mubr.f32.mxu0 %v317
      %481 = vmatmul.mubr.f32.gmra.mrb[0].mxu0 %v225
      %v482 = vpop.f32.mrb[0].mxu0
      %v483 = vadd.f32 %v313, %v482
      %v484 = vpop.f32.mrb[0].mxu0
      %485 = vmatprep.mubr.f32.mxu0 %v320
      %486 = vmatmul.mubr.f32.gmra.mrb[0].mxu0 %v227
      %v487 = vpop.f32.mrb[0].mxu0
      %v488 = vadd.f32 %v313, %v487
      %v489 = vpop.f32.mrb[0].mxu0
      %490 = vmatprep.mubr.f32.mxu0 %v323
      %491 = vmatmul.mubr.f32.gmra.mrb[0].mxu0 %v229
      %v492 = vpop.f32.mrb[0].mxu0
      %v493 = vadd.f32 %v313, %v492
      %v494 = vpop.f32.mrb[0].mxu0
      %495 = vmatprep.mubr.f32.mxu0 %v326
      %496 = vmatmul.mubr.f32.gmra.mrb[0].mxu0 %v231
      %v497 = vpop.f32.mrb[0].mxu0
      %v498 = vadd.f32 %v313, %v497
      %v499 = vpop.f32.mrb[0].mxu0
      %500 = vmatprep.mubr.f32.mxu0 %v329
      %501 = vmatmul.mubr.f32.gmra.mrb[0].mxu0 %v233
      %v502 = vpop.f32.mrb[0].mxu0
      %v503 = vadd.f32 %v313, %v502
      %v504 = vpop.f32.mrb[0].mxu0
      %505 = vmatprep.mubr.f32.mxu0 %v332
      %506 = vmatmul.mubr.f32.gmra.mrb[0].mxu0 %v235
      %v507 = vpop.f32.mrb[0].mxu0
      %v508 = vadd.f32 %v313, %v507
      %v509 = vpop.f32.mrb[0].mxu0
      %510 = vmatprep.mubr.f32.mxu0 %v335
      %511 = vmatmul.mubr.f32.gmra.mrb[0].mxu0 %v237
      %v512 = vpop.f32.mrb[0].mxu0
      %v513 = vadd.f32 %v313, %v512
      %v514 = vpop.f32.mrb[0].mxu0
      %515 = vmatprep.mubr.f32.mxu0 %v338
      %516 = vmatmul.mubr.f32.gmra.mrb[0].mxu0 %v239
      %v517 = vpop.f32.mrb[0].mxu0
      %v518 = vadd.f32 %v313, %v517
      %v519 = vpop.f32.mrb[0].mxu0
      %520 = vmatprep.mubr.f32.mxu0 %v341
      %521 = vmatmul.mubr.f32.gmra.mrb[0].mxu0 %v241
      %v522 = vpop.f32.mrb[0].mxu0
      %v523 = vadd.f32 %v313, %v522
      %v524 = vpop.f32.mrb[0].mxu0
      %525 = vmatprep.mubr.f32.mxu0 %v344
      %526 = vmatmul.mubr.f32.gmra.mrb[0].mxu0 %v243
      %v527 = vpop.f32.mrb[0].mxu0
      %v528 = vadd.f32 %v313, %v527
      %v529 = vpop.f32.mrb[0].mxu0
      %530 = vmatprep.mubr.f32.mxu0 %v347
      %531 = vmatmul.mubr.f32.gmra.mrb[0].mxu0 %v245
      %v532 = vpop.f32.mrb[0].mxu0
      %v533 = vadd.f32 %v313, %v532
      %v534 = vpop.f32.mrb[0].mxu0
      %535 = vmatprep.mubr.f32.mxu0 %v350
      %536 = vmatmul.mubr.f32.gmra.mrb[0].mxu0 %v247
      %v537 = vpop.f32.mrb[0].mxu0
      %v538 = vadd.f32 %v313, %v537
      %v539 = vpop.f32.mrb[0].mxu0
      %540 = vmatprep.mubr.f32.mxu0 %v353
      %541 = vmatmul.mubr.f32.gmra.mrb[0].mxu0 %v249
      %v542 = vpop.f32.mrb[0].mxu0
      %v543 = vadd.f32 %v313, %v542
      %v544 = vpop.f32.mrb[0].mxu0
      %545 = vmatprep.mubr.f32.mxu0 %v356
      %546 = vmatmul.mubr.f32.gmra.mrb[0].mxu0 %v251
      %v547 = vpop.f32.mrb[0].mxu0
      %v548 = vadd.f32 %v313, %v547
      %v549 = vpop.f32.mrb[0].mxu0
      %550 = vmatprep.mubr.f32.mxu0 %v359
      %551 = vmatmul.mubr.f32.gmra.mrb[0].mxu0 %v253
      %v552 = vpop.f32.mrb[0].mxu0
      %v553 = vadd.f32 %v313, %v552
      %v554 = vpop.f32.mrb[0].mxu0
      %555 = vmatprep.mubr.f32.mxu0 %v362
      %556 = vmatmul.mubr.f32.gmra.mrb[0].mxu0 %v255
      %v557 = vpop.f32.mrb[0].mxu0
      %v558 = vadd.f32 %v313, %v557
      %v559 = vpop.f32.mrb[0].mxu0
      %560 = vmatprep.mubr.f32.mxu0 %v365
      %561 = vmatmul.mubr.f32.gmra.mrb[0].mxu0 %v257
      %v562 = vpop.f32.mrb[0].mxu0
      %v563 = vadd.f32 %v313, %v562
      %v564 = vpop.f32.mrb[0].mxu0
      %565 = vmatprep.mubr.f32.mxu0 %v368
      %566 = vmatmul.mubr.f32.gmra.mrb[0].mxu0 %v259
      %v567 = vpop.f32.mrb[0].mxu0
      %v568 = vadd.f32 %v313, %v567
      %v569 = vpop.f32.mrb[0].mxu0
      %570 = vmatprep.mubr.f32.mxu0 %v371
      %571 = vmatmul.mubr.f32.gmra.mrb[0].mxu0 %v261
      %v572 = vpop.f32.mrb[0].mxu0
      %v573 = vadd.f32 %v313, %v572
      %v574 = vpop.f32.mrb[0].mxu0
      %575 = vmatprep.mubr.f32.mxu0 %v374
      %576 = vmatmul.mubr.f32.gmra.mrb[0].mxu0 %v263
      %v577 = vpop.f32.mrb[0].mxu0
      %v578 = vadd.f32 %v313, %v577
      %v579 = vpop.f32.mrb[0].mxu0
      %580 = vmatprep.mubr.f32.mxu0 %v377
      %581 = vmatmul.mubr.f32.gmra.mrb[0].mxu0 %v265
      %v582 = vpop.f32.mrb[0].mxu0
      %v583 = vadd.f32 %v313, %v582
      %v584 = vpop.f32.mrb[0].mxu0
      %585 = vmatprep.mubr.f32.mxu0 %v380
      %586 = vmatmul.mubr.f32.gmra.mrb[0].mxu0 %v267
      %v587 = vpop.f32.mrb[0].mxu0
      %v588 = vadd.f32 %v313, %v587
      %v589 = vpop.f32.mrb[0].mxu0
      %590 = vmatprep.mubr.f32.mxu0 %v383
      %591 = vmatmul.mubr.f32.gmra.mrb[0].mxu0 %v269
      %v592 = vpop.f32.mrb[0].mxu0
      %v593 = vadd.f32 %v313, %v592
      %v594 = vpop.f32.mrb[0].mxu0
      %595 = vmatprep.mubr.f32.mxu0 %v386
      %596 = vmatmul.mubr.f32.gmra.mrb[0].mxu0 %v271
      %v597 = vpop.f32.mrb[0].mxu0
      %v598 = vadd.f32 %v313, %v597
      %v599 = vpop.f32.mrb[0].mxu0
      %600 = vmatprep.mubr.f32.mxu0 %v389
      %601 = vmatmul.mubr.f32.gmra.mrb[0].mxu0 %v273
      %v602 = vpop.f32.mrb[0].mxu0
      %v603 = vadd.f32 %v313, %v602
      %v604 = vpop.f32.mrb[0].mxu0
      %605 = vmatprep.mubr.f32.mxu0 %v392
      %606 = vmatmul.mubr.f32.gmra.mrb[0].mxu0 %v275
      %v607 = vpop.f32.mrb[0].mxu0
      %v608 = vadd.f32 %v313, %v607
      %v609 = vpop.f32.mrb[0].mxu0
      %610 = vmatprep.mubr.f32.mxu0 %v395
      %611 = vmatmul.mubr.f32.gmra.mrb[0].mxu0 %v277
      %v612 = vpop.f32.mrb[0].mxu0
      %v613 = vadd.f32 %v313, %v612
      %v614 = vpop.f32.mrb[0].mxu0
      %615 = vmatprep.mubr.f32.mxu0 %v398
      %616 = vmatmul.mubr.f32.gmra.mrb[0].mxu0 %v279
      %v617 = vpop.f32.mrb[0].mxu0
      %v618 = vadd.f32 %v313, %v617
      %v619 = vpop.f32.mrb[0].mxu0
      %620 = vmatprep.mubr.f32.mxu0 %v401
      %621 = vmatmul.mubr.f32.gmra.mrb[0].mxu0 %v281
      %v622 = vpop.f32.mrb[0].mxu0
      %v623 = vadd.f32 %v313, %v622
      %v624 = vpop.f32.mrb[0].mxu0
      %625 = vmatprep.mubr.f32.mxu0 %v404
      %626 = vmatmul.mubr.f32.gmra.mrb[0].mxu0 %v283
      %v627 = vpop.f32.mrb[0].mxu0
      %v628 = vadd.f32 %v313, %v627
      %v629 = vpop.f32.mrb[0].mxu0
      %630 = vmatprep.mubr.f32.mxu0 %v407
      %631 = vmatmul.mubr.f32.gmra.mrb[0].mxu0 %v285
      %v632 = vpop.f32.mrb[0].mxu0
      %v633 = vadd.f32 %v313, %v632
      %v634 = vpop.f32.mrb[0].mxu0
      %635 = vmatprep.mubr.f32.mxu0 %v410
      %636 = vmatmul.mubr.f32.gmra.mrb[0].mxu0 %v287
      %v637 = vpop.f32.mrb[0].mxu0
      %v638 = vadd.f32 %v313, %v637
      %v639 = vpop.f32.mrb[0].mxu0
      %640 = vdwg.mxu0
      %v641 = vmax.f32 %v483, 0.0
      %v642 = vmax.f32 %v488, 0.0
      %v643 = vmax.f32 %v493, 0.0
      %v644 = vmax.f32 %v498, 0.0
      %v645 = vmax.f32 %v503, 0.0
      %v646 = vmax.f32 %v508, 0.0
      %v647 = vmax.f32 %v513, 0.0
      %v648 = vmax.f32 %v518, 0.0
      %v649 = vmax.f32 %v523, 0.0
      %v650 = vmax.f32 %v528, 0.0
      %v651 = vmax.f32 %v533, 0.0
      %v652 = vmax.f32 %v538, 0.0
      %v653 = vmax.f32 %v543, 0.0
      %v654 = vmax.f32 %v548, 0.0
      %v655 = vmax.f32 %v553, 0.0
      %v656 = vmax.f32 %v558, 0.0
      %v657 = vmax.f32 %v563, 0.0
      %v658 = vmax.f32 %v568, 0.0
      %v659 = vmax.f32 %v573, 0.0
      %v660 = vmax.f32 %v578, 0.0
      %v661 = vmax.f32 %v583, 0.0
      %v662 = vmax.f32 %v588, 0.0
      %v663 = vmax.f32 %v593, 0.0
      %v664 = vmax.f32 %v598, 0.0
      %v665 = vmax.f32 %v603, 0.0
      %v666 = vmax.f32 %v608, 0.0
      %v667 = vmax.f32 %v613, 0.0
      %v668 = vmax.f32 %v618, 0.0
      %v669 = vmax.f32 %v623, 0.0
      %v670 = vmax.f32 %v628, 0.0
      %v671 = vmax.f32 %v633, 0.0
      %v672 = vmax.f32 %v638, 0.0
      %v673 = vmax.f32 %v641, %v649
      %v674 = vmax.f32 %v642, %v650
      %v675 = vmax.f32 %v643, %v651
      %v676 = vmax.f32 %v644, %v652
      %v677 = vmax.f32 %v645, %v653
      %v678 = vmax.f32 %v646, %v654
      %v679 = vmax.f32 %v647, %v655
      %v680 = vmax.f32 %v648, %v656
      %v681 = vmax.f32 %v657, %v665
      %v682 = vmax.f32 %v658, %v666
      %v683 = vmax.f32 %v659, %v667
      %v684 = vmax.f32 %v660, %v668
      %v685 = vmax.f32 %v661, %v669
      %v686 = vmax.f32 %v662, %v670
      %v687 = vmax.f32 %v663, %v671
      %v688 = vmax.f32 %v664, %v672
      %v689 = vmax.f32 %v673, %v681
      %v690 = vmax.f32 %v674, %v682
      %v691 = vmax.f32 %v675, %v683
      %v692 = vmax.f32 %v676, %v684
      %v693 = vmax.f32 %v677, %v685
      %v694 = vmax.f32 %v678, %v686
      %v695 = vmax.f32 %v679, %v687
      %v696 = vmax.f32 %v680, %v688
      %vm697 = vcmask 523264
      %698 = vst.msk [vmem:[#allocation2] sm:$0xff] %vm697, 0.0
      %699 = vst.msk [vmem:[#allocation2 + $0x8] sm:$0xff] %vm697, 0.0
      %700 = vst.msk [vmem:[#allocation2 + $0x10] sm:$0xff] %vm697, 0.0
      %701 = vst.msk [vmem:[#allocation2 + $0x18] sm:$0xff] %vm697, 0.0
      %702 = vst.msk [vmem:[#allocation2 + $0x20] sm:$0xff] %vm697, 0.0
      %703 = vst.msk [vmem:[#allocation2 + $0x28] sm:$0xff] %vm697, 0.0
      %704 = vst.msk [vmem:[#allocation2 + $0x30] sm:$0xff] %vm697, 0.0
      %705 = vst.msk [vmem:[#allocation2 + $0x38] sm:$0xff] %vm697, 0.0
      %706 = vst.msk [vmem:[#allocation2 + $0x40] sm:$0xff] %vm697, 0.0
      %707 = vst.msk [vmem:[#allocation2 + $0x48] sm:$0xff] %vm697, 0.0
      %708 = vst.msk [vmem:[#allocation2 + $0x50] sm:$0xff] %vm697, 0.0
      %709 = vst.msk [vmem:[#allocation2 + $0x58] sm:$0xff] %vm697, 0.0
      %710 = vst.msk [vmem:[#allocation2 + $0x60] sm:$0xff] %vm697, 0.0
      %711 = vst.msk [vmem:[#allocation2 + $0x68] sm:$0xff] %vm697, 0.0
      %712 = vst.msk [vmem:[#allocation2 + $0x70] sm:$0xff] %vm697, 0.0
      %713 = vst.msk [vmem:[#allocation2 + $0x78] sm:$0xff] %vm697, 0.0
      %714 = vst.msk [vmem:[#allocation2 + $0x80] sm:$0xff] %vm697, 0.0
      %715 = vst.msk [vmem:[#allocation2 + $0x88] sm:$0xff] %vm697, 0.0
      %716 = vst.msk [vmem:[#allocation2 + $0x90] sm:$0xff] %vm697, 0.0
      %717 = vst.msk [vmem:[#allocation2 + $0x1a] sm:$0xff] %vm697, %v689
      %718 = vst.msk [vmem:[#allocation2 + $0x26] sm:$0xff] %vm697, %v690
      %719 = vst.msk [vmem:[#allocation2 + $0x32] sm:$0xff] %vm697, %v691
      %720 = vst.msk [vmem:[#allocation2 + $0x3e] sm:$0xff] %vm697, %v692
      %721 = vst.msk [vmem:[#allocation2 + $0x4a] sm:$0xff] %vm697, %v693
      %722 = vst.msk [vmem:[#allocation2 + $0x56] sm:$0xff] %vm697, %v694
      %723 = vst.msk [vmem:[#allocation2 + $0x62] sm:$0xff] %vm697, %v695
      %724 = vst.msk [vmem:[#allocation2 + $0x6e] sm:$0xff] %vm697, %v696
      %v725 = vld [vmem:[#allocation2] sm:$0xff]
      %v726 = vld [vmem:[#allocation2 + $0x8] sm:$0xff]
      %v727 = vld [vmem:[#allocation2 + $0x10] sm:$0xff]
      %v728 = vld [vmem:[#allocation2 + $0x18] sm:$0xff]
      %v729 = vld [vmem:[#allocation2 + $0x20] sm:$0xff]
      %v730 = vld [vmem:[#allocation2 + $0x28] sm:$0xff]
      %v731 = vld [vmem:[#allocation2 + $0x30] sm:$0xff]
      %v732 = vld [vmem:[#allocation2 + $0x38] sm:$0xff]
      %v733 = vld [vmem:[#allocation2 + $0x40] sm:$0xff]
      %v734 = vld [vmem:[#allocation2 + $0x48] sm:$0xff]
      %v735 = vld [vmem:[#allocation2 + $0x50] sm:$0xff]
      %v736 = vld [vmem:[#allocation2 + $0x58] sm:$0xff]
      %v737 = vld [vmem:[%s3] sm:$0xff]
      %v738 = vld [vmem:[%s3 + $0x8] sm:$0xff]
      %v739 = vld [vmem:[%s3 + $0x10] sm:$0xff]
      %v740 = vld [vmem:[%s3 + $0x18] sm:$0xff]
      %v741 = vld [vmem:[%s3 + $0x20] sm:$0xff]
      %v742 = vld [vmem:[%s3 + $0x28] sm:$0xff]
      %v743 = vld [vmem:[%s3 + $0x30] sm:$0xff]
      %v744 = vld [vmem:[%s3 + $0x38] sm:$0xff]
      %v745 = vld [vmem:[#allocation2 + $0x1] sm:$0xff]
      %v746 = vld [vmem:[#allocation2 + $0x9] sm:$0xff]
      %v747 = vld [vmem:[#allocation2 + $0x11] sm:$0xff]
      %v748 = vld [vmem:[#allocation2 + $0x19] sm:$0xff]
      %v749 = vld [vmem:[#allocation2 + $0x21] sm:$0xff]
      %v750 = vld [vmem:[#allocation2 + $0x29] sm:$0xff]
      %v751 = vld [vmem:[#allocation2 + $0x31] sm:$0xff]
      %v752 = vld [vmem:[#allocation2 + $0x39] sm:$0xff]
      %v753 = vld [vmem:[#allocation2 + $0x41] sm:$0xff]
      %v754 = vld [vmem:[#allocation2 + $0x49] sm:$0xff]
      %v755 = vld [vmem:[#allocation2 + $0x51] sm:$0xff]
      %v756 = vld [vmem:[#allocation2 + $0x59] sm:$0xff]
      %v757 = vld [vmem:[%s3 + $0x40] sm:$0xff]
      %v758 = vld [vmem:[%s3 + $0x48] sm:$0xff]
      %v759 = vld [vmem:[%s3 + $0x50] sm:$0xff]
      %v760 = vld [vmem:[%s3 + $0x58] sm:$0xff]
      %v761 = vld [vmem:[%s3 + $0x60] sm:$0xff]
      %v762 = vld [vmem:[%s3 + $0x68] sm:$0xff]
      %v763 = vld [vmem:[%s3 + $0x70] sm:$0xff]
      %v764 = vld [vmem:[%s3 + $0x78] sm:$0xff]
      %v766 = vsel %vm697, %v745, 0
      %v769 = vsel %vm697, %v746, 0
      %v772 = vsel %vm697, %v747, 0
      %v775 = vsel %vm697, %v748, 0
      %v778 = vsel %vm697, %v749, 0
      %v781 = vsel %vm697, %v750, 0
      %v784 = vsel %vm697, %v751, 0
      %v787 = vsel %vm697, %v752, 0
      %v790 = vsel %vm697, %v753, 0
      %v793 = vsel %vm697, %v754, 0
      %v796 = vsel %vm697, %v755, 0
      %v799 = vsel %vm697, %v756, 0
      %801 = vmatprep.subr.mxu0 0.0
      %802 = vmatpush1.msra.mxu0 %v757
      %803 = vmatprep.subr.mxu0 0.0
      %804 = vmatpush1.msra.mxu0 %v758
      %805 = vmatprep.subr.mxu0 0.0
      %806 = vmatpush1.msra.mxu0 %v759
      %807 = vmatprep.subr.mxu0 0.0
      %808 = vmatpush1.msra.mxu0 %v760
      %809 = vmatprep.subr.mxu0 0.0
      %810 = vmatpush1.msra.mxu0 %v761
      %811 = vmatprep.subr.mxu0 0.0
      %812 = vmatpush1.msra.mxu0 %v762
      %813 = vmatprep.subr.mxu0 0.0
      %814 = vmatpush1.msra.mxu0 %v763
      %815 = vmatprep.subr.mxu0 0.0
      %816 = vmatpush1.msra.mxu0 %v764
      %817 = vmatprep.subr.mxu0 0.0
      %818 = vmatpush1.msra.mxu0 0.0
      %819 = vmatprep.subr.mxu0 0.0
      %820 = vmatpush1.msra.mxu0 0.0
      %821 = vmatprep.subr.mxu0 0.0
      %822 = vmatpush1.msra.mxu0 0.0
      %823 = vmatprep.subr.mxu0 0.0
      %824 = vmatpush1.msra.mxu0 0.0
      %825 = vmatprep.subr.mxu0 0.0
      %826 = vmatpush1.msra.mxu0 0.0
      %827 = vmatprep.subr.mxu0 0.0
      %828 = vmatpush1.msra.mxu0 0.0
      %829 = vmatprep.subr.mxu0 0.0
      %830 = vmatpush1.msra.mxu0 0.0
      %831 = vmatprep.subr.mxu0 0.0
      %832 = vmatpush1.msra.mxu0 0.0
      %833 = vmatprep.subr.mxu0 0.0
      %834 = vmatpush1.msra.mxu0 0.0
      %835 = vmatprep.subr.mxu0 0.0
      %836 = vmatpush1.msra.mxu0 0.0
      %837 = vmatprep.subr.mxu0 0.0
      %838 = vmatpush1.msra.mxu0 0.0
      %839 = vmatprep.subr.mxu0 0.0
      %840 = vmatpush1.msra.mxu0 0.0
      %841 = vmatprep.subr.mxu0 0.0
      %842 = vmatpush1.msra.mxu0 0.0
      %843 = vmatprep.subr.mxu0 0.0
      %844 = vmatpush1.msra.mxu0 0.0
      %845 = vmatprep.subr.mxu0 0.0
      %846 = vmatpush1.msra.mxu0 0.0
      %847 = vmatprep.subr.mxu0 0.0
      %848 = vmatpush1.msra.mxu0 0.0
      %849 = vmatprep.subr.mxu0 0.0
      %850 = vmatpush1.msra.mxu0 0.0
      %851 = vmatprep.subr.mxu0 0.0
      %852 = vmatpush1.msra.mxu0 0.0
      %853 = vmatprep.subr.mxu0 0.0
      %854 = vmatpush1.msra.mxu0 0.0
      %855 = vmatprep.subr.mxu0 0.0
      %856 = vmatpush1.msra.mxu0 0.0
      %857 = vmatprep.subr.mxu0 0.0
      %858 = vmatpush1.msra.mxu0 0.0
      %859 = vmatprep.subr.mxu0 0.0
      %860 = vmatpush1.msra.mxu0 0.0
      %861 = vmatprep.subr.mxu0 0.0
      %862 = vmatpush1.msra.mxu0 0.0
      %863 = vmatprep.subr.mxu0 0.0
      %864 = vmatpush1.msra.mxu0 0.0
      %865 = vmatprep.mubr.f32.mxu0 0.0
      %866 = vmatmul.mubr.f32.gmra.mrb[0].mxu0 %v766
      %v867 = vpop.f32.mrb[0].mxu0
      %v868 = vadd.f32 0.0, %v867
      %v869 = vpop.f32.mrb[0].mxu0
      %870 = vmatprep.mubr.f32.mxu0 0.0
      %871 = vmatmul.mubr.f32.gmra.mrb[0].mxu0 %v769
      %v872 = vpop.f32.mrb[0].mxu0
      %v873 = vadd.f32 0.0, %v872
      %v874 = vpop.f32.mrb[0].mxu0
      %875 = vmatprep.mubr.f32.mxu0 0.0
      %876 = vmatmul.mubr.f32.gmra.mrb[0].mxu0 %v772
      %v877 = vpop.f32.mrb[0].mxu0
      %v878 = vadd.f32 0.0, %v877
      %v879 = vpop.f32.mrb[0].mxu0
      %880 = vmatprep.mubr.f32.mxu0 0.0
      %881 = vmatmul.mubr.f32.gmra.mrb[0].mxu0 %v775
      %v882 = vpop.f32.mrb[0].mxu0
      %v883 = vadd.f32 0.0, %v882
      %v884 = vpop.f32.mrb[0].mxu0
      %885 = vmatprep.mubr.f32.mxu0 0.0
      %886 = vmatmul.mubr.f32.gmra.mrb[0].mxu0 %v778
      %v887 = vpop.f32.mrb[0].mxu0
      %v888 = vadd.f32 0.0, %v887
      %v889 = vpop.f32.mrb[0].mxu0
      %890 = vmatprep.mubr.f32.mxu0 0.0
      %891 = vmatmul.mubr.f32.gmra.mrb[0].mxu0 %v781
      %v892 = vpop.f32.mrb[0].mxu0
      %v893 = vadd.f32 0.0, %v892
      %v894 = vpop.f32.mrb[0].mxu0
      %895 = vmatprep.mubr.f32.mxu0 0.0
      %896 = vmatmul.mubr.f32.gmra.mrb[0].mxu0 %v784
      %v897 = vpop.f32.mrb[0].mxu0
      %v898 = vadd.f32 0.0, %v897
      %v899 = vpop.f32.mrb[0].mxu0
      %900 = vmatprep.mubr.f32.mxu0 0.0
      %901 = vmatmul.mubr.f32.gmra.mrb[0].mxu0 %v787
      %v902 = vpop.f32.mrb[0].mxu0
      %v903 = vadd.f32 0.0, %v902
      %v904 = vpop.f32.mrb[0].mxu0
      %905 = vmatprep.mubr.f32.mxu0 0.0
      %906 = vmatmul.mubr.f32.gmra.mrb[0].mxu0 %v790
      %v907 = vpop.f32.mrb[0].mxu0
      %v908 = vadd.f32 0.0, %v907
      %v909 = vpop.f32.mrb[0].mxu0
      %910 = vmatprep.mubr.f32.mxu0 0.0
      %911 = vmatmul.mubr.f32.gmra.mrb[0].mxu0 %v793
      %v912 = vpop.f32.mrb[0].mxu0
      %v913 = vadd.f32 0.0, %v912
      %v914 = vpop.f32.mrb[0].mxu0
      %915 = vmatprep.mubr.f32.mxu0 0.0
      %916 = vmatmul.mubr.f32.gmra.mrb[0].mxu0 %v796
      %v917 = vpop.f32.mrb[0].mxu0
      %v918 = vadd.f32 0.0, %v917
      %v919 = vpop.f32.mrb[0].mxu0
      %920 = vmatprep.mubr.f32.mxu0 0.0
      %921 = vmatmul.mubr.f32.gmra.mrb[0].mxu0 %v799
      %v922 = vpop.f32.mrb[0].mxu0
      %v923 = vadd.f32 0.0, %v922
      %v924 = vpop.f32.mrb[0].mxu0
      %925 = vdwg.mxu0
      %v927 = vsel %vm697, %v725, 0
      %v930 = vsel %vm697, %v726, 0
      %v933 = vsel %vm697, %v727, 0
      %v936 = vsel %vm697, %v728, 0
      %v939 = vsel %vm697, %v729, 0
      %v942 = vsel %vm697, %v730, 0
      %v945 = vsel %vm697, %v731, 0
      %v948 = vsel %vm697, %v732, 0
      %v951 = vsel %vm697, %v733, 0
      %v954 = vsel %vm697, %v734, 0
      %v957 = vsel %vm697, %v735, 0
      %v960 = vsel %vm697, %v736, 0
      %962 = vmatprep.subr.mxu0 0.0
      %963 = vmatpush1.msra.mxu0 %v737
      %964 = vmatprep.subr.mxu0 0.0
      %965 = vmatpush1.msra.mxu0 %v738
      %966 = vmatprep.subr.mxu0 0.0
      %967 = vmatpush1.msra.mxu0 %v739
      %968 = vmatprep.subr.mxu0 0.0
      %969 = vmatpush1.msra.mxu0 %v740
      %970 = vmatprep.subr.mxu0 0.0
      %971 = vmatpush1.msra.mxu0 %v741
      %972 = vmatprep.subr.mxu0 0.0
      %973 = vmatpush1.msra.mxu0 %v742
      %974 = vmatprep.subr.mxu0 0.0
      %975 = vmatpush1.msra.mxu0 %v743
      %976 = vmatprep.subr.mxu0 0.0
      %977 = vmatpush1.msra.mxu0 %v744
      %978 = vmatprep.subr.mxu0 0.0
      %979 = vmatpush1.msra.mxu0 0.0
      %980 = vmatprep.subr.mxu0 0.0
      %981 = vmatpush1.msra.mxu0 0.0
      %982 = vmatprep.subr.mxu0 0.0
      %983 = vmatpush1.msra.mxu0 0.0
      %984 = vmatprep.subr.mxu0 0.0
      %985 = vmatpush1.msra.mxu0 0.0
      %986 = vmatprep.subr.mxu0 0.0
      %987 = vmatpush1.msra.mxu0 0.0
      %988 = vmatprep.subr.mxu0 0.0
      %989 = vmatpush1.msra.mxu0 0.0
      %990 = vmatprep.subr.mxu0 0.0
      %991 = vmatpush1.msra.mxu0 0.0
      %992 = vmatprep.subr.mxu0 0.0
      %993 = vmatpush1.msra.mxu0 0.0
      %994 = vmatprep.subr.mxu0 0.0
      %995 = vmatpush1.msra.mxu0 0.0
      %996 = vmatprep.subr.mxu0 0.0
      %997 = vmatpush1.msra.mxu0 0.0
      %998 = vmatprep.subr.mxu0 0.0
      %999 = vmatpush1.msra.mxu0 0.0
      %1000 = vmatprep.subr.mxu0 0.0
      %1001 = vmatpush1.msra.mxu0 0.0
      %1002 = vmatprep.subr.mxu0 0.0
      %1003 = vmatpush1.msra.mxu0 0.0
      %1004 = vmatprep.subr.mxu0 0.0
      %1005 = vmatpush1.msra.mxu0 0.0
      %1006 = vmatprep.subr.mxu0 0.0
      %1007 = vmatpush1.msra.mxu0 0.0
      %1008 = vmatprep.subr.mxu0 0.0
      %1009 = vmatpush1.msra.mxu0 0.0
      %1010 = vmatprep.subr.mxu0 0.0
      %1011 = vmatpush1.msra.mxu0 0.0
      %1012 = vmatprep.subr.mxu0 0.0
      %1013 = vmatpush1.msra.mxu0 0.0
      %1014 = vmatprep.subr.mxu0 0.0
      %1015 = vmatpush1.msra.mxu0 0.0
      %1016 = vmatprep.subr.mxu0 0.0
      %1017 = vmatpush1.msra.mxu0 0.0
      %1018 = vmatprep.subr.mxu0 0.0
      %1019 = vmatpush1.msra.mxu0 0.0
      %1020 = vmatprep.subr.mxu0 0.0
      %1021 = vmatpush1.msra.mxu0 0.0
      %1022 = vmatprep.subr.mxu0 0.0
      %1023 = vmatpush1.msra.mxu0 0.0
      %1024 = vmatprep.subr.mxu0 0.0
      %1025 = vmatpush1.msra.mxu0 0.0
      %1026 = vmatprep.mubr.f32.mxu0 0.0
      %1027 = vmatmul.mubr.f32.gmra.mrb[0].mxu0 %v927
      %v1028 = vpop.f32.mrb[0].mxu0
      %v1029 = vadd.f32 %v868, %v1028
      %v1030 = vpop.f32.mrb[0].mxu0
      %1031 = vmatprep.mubr.f32.mxu0 0.0
      %1032 = vmatmul.mubr.f32.gmra.mrb[0].mxu0 %v930
      %v1033 = vpop.f32.mrb[0].mxu0
      %v1034 = vadd.f32 %v873, %v1033
      %v1035 = vpop.f32.mrb[0].mxu0
      %1036 = vmatprep.mubr.f32.mxu0 0.0
      %1037 = vmatmul.mubr.f32.gmra.mrb[0].mxu0 %v933
      %v1038 = vpop.f32.mrb[0].mxu0
      %v1039 = vadd.f32 %v878, %v1038
      %v1040 = vpop.f32.mrb[0].mxu0
      %1041 = vmatprep.mubr.f32.mxu0 0.0
      %1042 = vmatmul.mubr.f32.gmra.mrb[0].mxu0 %v936
      %v1043 = vpop.f32.mrb[0].mxu0
      %v1044 = vadd.f32 %v883, %v1043
      %v1045 = vpop.f32.mrb[0].mxu0
      %1046 = vmatprep.mubr.f32.mxu0 0.0
      %1047 = vmatmul.mubr.f32.gmra.mrb[0].mxu0 %v939
      %v1048 = vpop.f32.mrb[0].mxu0
      %v1049 = vadd.f32 %v888, %v1048
      %v1050 = vpop.f32.mrb[0].mxu0
      %1051 = vmatprep.mubr.f32.mxu0 0.0
      %1052 = vmatmul.mubr.f32.gmra.mrb[0].mxu0 %v942
      %v1053 = vpop.f32.mrb[0].mxu0
      %v1054 = vadd.f32 %v893, %v1053
      %v1055 = vpop.f32.mrb[0].mxu0
      %1056 = vmatprep.mubr.f32.mxu0 0.0
      %1057 = vmatmul.mubr.f32.gmra.mrb[0].mxu0 %v945
      %v1058 = vpop.f32.mrb[0].mxu0
      %v1059 = vadd.f32 %v898, %v1058
      %v1060 = vpop.f32.mrb[0].mxu0
      %1061 = vmatprep.mubr.f32.mxu0 0.0
      %1062 = vmatmul.mubr.f32.gmra.mrb[0].mxu0 %v948
      %v1063 = vpop.f32.mrb[0].mxu0
      %v1064 = vadd.f32 %v903, %v1063
      %v1065 = vpop.f32.mrb[0].mxu0
      %1066 = vmatprep.mubr.f32.mxu0 0.0
      %1067 = vmatmul.mubr.f32.gmra.mrb[0].mxu0 %v951
      %v1068 = vpop.f32.mrb[0].mxu0
      %v1069 = vadd.f32 %v908, %v1068
      %v1070 = vpop.f32.mrb[0].mxu0
      %1071 = vmatprep.mubr.f32.mxu0 0.0
      %1072 = vmatmul.mubr.f32.gmra.mrb[0].mxu0 %v954
      %v1073 = vpop.f32.mrb[0].mxu0
      %v1074 = vadd.f32 %v913, %v1073
      %v1075 = vpop.f32.mrb[0].mxu0
      %1076 = vmatprep.mubr.f32.mxu0 0.0
      %1077 = vmatmul.mubr.f32.gmra.mrb[0].mxu0 %v957
      %v1078 = vpop.f32.mrb[0].mxu0
      %v1079 = vadd.f32 %v918, %v1078
      %v1080 = vpop.f32.mrb[0].mxu0
      %1081 = vmatprep.mubr.f32.mxu0 0.0
      %1082 = vmatmul.mubr.f32.gmra.mrb[0].mxu0 %v960
      %v1083 = vpop.f32.mrb[0].mxu0
      %v1084 = vadd.f32 %v923, %v1083
      %v1085 = vpop.f32.mrb[0].mxu0
      %1086 = vdwg.mxu0
      %v1087 = vld [vmem:[#allocation2 + $0x2] sm:$0xff]
      %v1088 = vld [vmem:[#allocation2 + $0xa] sm:$0xff]
      %v1089 = vld [vmem:[#allocation2 + $0x12] sm:$0xff]
      %v1090 = vld [vmem:[#allocation2 + $0x1a] sm:$0xff]
      %v1091 = vld [vmem:[#allocation2 + $0x22] sm:$0xff]
      %v1092 = vld [vmem:[#allocation2 + $0x2a] sm:$0xff]
      %v1093 = vld [vmem:[#allocation2 + $0x32] sm:$0xff]
      %v1094 = vld [vmem:[#allocation2 + $0x3a] sm:$0xff]
      %v1095 = vld [vmem:[#allocation2 + $0x42] sm:$0xff]
      %v1096 = vld [vmem:[#allocation2 + $0x4a] sm:$0xff]
      %v1097 = vld [vmem:[#allocation2 + $0x52] sm:$0xff]
      %v1098 = vld [vmem:[#allocation2 + $0x5a] sm:$0xff]
      %v1099 = vld [vmem:[%s3 + $0x80] sm:$0xff]
      %v1100 = vld [vmem:[%s3 + $0x88] sm:$0xff]
      %v1101 = vld [vmem:[%s3 + $0x90] sm:$0xff]
      %v1102 = vld [vmem:[%s3 + $0x98] sm:$0xff]
      %v1103 = vld [vmem:[%s3 + $0xa0] sm:$0xff]
      %v1104 = vld [vmem:[%s3 + $0xa8] sm:$0xff]
      %v1105 = vld [vmem:[%s3 + $0xb0] sm:$0xff]
      %v1106 = vld [vmem:[%s3 + $0xb8] sm:$0xff]
      %v1108 = vsel %vm697, %v1087, 0
      %v1111 = vsel %vm697, %v1088, 0
      %v1114 = vsel %vm697, %v1089, 0
      %v1117 = vsel %vm697, %v1090, 0
      %v1120 = vsel %vm697, %v1091, 0
      %v1123 = vsel %vm697, %v1092, 0
      %v1126 = vsel %vm697, %v1093, 0
      %v1129 = vsel %vm697, %v1094, 0
      %v1132 = vsel %vm697, %v1095, 0
      %v1135 = vsel %vm697, %v1096, 0
      %v1138 = vsel %vm697, %v1097, 0
      %v1141 = vsel %vm697, %v1098, 0
      %1143 = vmatprep.subr.mxu0 0.0
      %1144 = vmatpush1.msra.mxu0 %v1099
      %1145 = vmatprep.subr.mxu0 0.0
      %1146 = vmatpush1.msra.mxu0 %v1100
      %1147 = vmatprep.subr.mxu0 0.0
      %1148 = vmatpush1.msra.mxu0 %v1101
      %1149 = vmatprep.subr.mxu0 0.0
      %1150 = vmatpush1.msra.mxu0 %v1102
      %1151 = vmatprep.subr.mxu0 0.0
      %1152 = vmatpush1.msra.mxu0 %v1103
      %1153 = vmatprep.subr.mxu0 0.0
      %1154 = vmatpush1.msra.mxu0 %v1104
      %1155 = vmatprep.subr.mxu0 0.0
      %1156 = vmatpush1.msra.mxu0 %v1105
      %1157 = vmatprep.subr.mxu0 0.0
      %1158 = vmatpush1.msra.mxu0 %v1106
      %1159 = vmatprep.subr.mxu0 0.0
      %1160 = vmatpush1.msra.mxu0 0.0
      %1161 = vmatprep.subr.mxu0 0.0
      %1162 = vmatpush1.msra.mxu0 0.0
      %1163 = vmatprep.subr.mxu0 0.0
      %1164 = vmatpush1.msra.mxu0 0.0
      %1165 = vmatprep.subr.mxu0 0.0
      %1166 = vmatpush1.msra.mxu0 0.0
      %1167 = vmatprep.subr.mxu0 0.0
      %1168 = vmatpush1.msra.mxu0 0.0
      %1169 = vmatprep.subr.mxu0 0.0
      %1170 = vmatpush1.msra.mxu0 0.0
      %1171 = vmatprep.subr.mxu0 0.0
      %1172 = vmatpush1.msra.mxu0 0.0
      %1173 = vmatprep.subr.mxu0 0.0
      %1174 = vmatpush1.msra.mxu0 0.0
      %1175 = vmatprep.subr.mxu0 0.0
      %1176 = vmatpush1.msra.mxu0 0.0
      %1177 = vmatprep.subr.mxu0 0.0
      %1178 = vmatpush1.msra.mxu0 0.0
      %1179 = vmatprep.subr.mxu0 0.0
      %1180 = vmatpush1.msra.mxu0 0.0
      %1181 = vmatprep.subr.mxu0 0.0
      %1182 = vmatpush1.msra.mxu0 0.0
      %1183 = vmatprep.subr.mxu0 0.0
      %1184 = vmatpush1.msra.mxu0 0.0
      %1185 = vmatprep.subr.mxu0 0.0
      %1186 = vmatpush1.msra.mxu0 0.0
      %1187 = vmatprep.subr.mxu0 0.0
      %1188 = vmatpush1.msra.mxu0 0.0
      %1189 = vmatprep.subr.mxu0 0.0
      %1190 = vmatpush1.msra.mxu0 0.0
      %1191 = vmatprep.subr.mxu0 0.0
      %1192 = vmatpush1.msra.mxu0 0.0
      %1193 = vmatprep.subr.mxu0 0.0
      %1194 = vmatpush1.msra.mxu0 0.0
      %1195 = vmatprep.subr.mxu0 0.0
      %1196 = vmatpush1.msra.mxu0 0.0
      %1197 = vmatprep.subr.mxu0 0.0
      %1198 = vmatpush1.msra.mxu0 0.0
      %1199 = vmatprep.subr.mxu0 0.0
      %1200 = vmatpush1.msra.mxu0 0.0
      %1201 = vmatprep.subr.mxu0 0.0
      %1202 = vmatpush1.msra.mxu0 0.0
      %1203 = vmatprep.subr.mxu0 0.0
      %1204 = vmatpush1.msra.mxu0 0.0
      %1205 = vmatprep.subr.mxu0 0.0
      %1206 = vmatpush1.msra.mxu0 0.0
      %1207 = vmatprep.mubr.f32.mxu0 0.0
      %1208 = vmatmul.mubr.f32.gmra.mrb[0].mxu0 %v1108
      %v1209 = vpop.f32.mrb[0].mxu0
      %v1210 = vadd.f32 0.0, %v1209
      %v1211 = vpop.f32.mrb[0].mxu0
      %1212 = vmatprep.mubr.f32.mxu0 0.0
      %1213 = vmatmul.mubr.f32.gmra.mrb[0].mxu0 %v1111
      %v1214 = vpop.f32.mrb[0].mxu0
      %v1215 = vadd.f32 0.0, %v1214
      %v1216 = vpop.f32.mrb[0].mxu0
      %1217 = vmatprep.mubr.f32.mxu0 0.0
      %1218 = vmatmul.mubr.f32.gmra.mrb[0].mxu0 %v1114
      %v1219 = vpop.f32.mrb[0].mxu0
      %v1220 = vadd.f32 0.0, %v1219
      %v1221 = vpop.f32.mrb[0].mxu0
      %1222 = vmatprep.mubr.f32.mxu0 0.0
      %1223 = vmatmul.mubr.f32.gmra.mrb[0].mxu0 %v1117
      %v1224 = vpop.f32.mrb[0].mxu0
      %v1225 = vadd.f32 0.0, %v1224
      %v1226 = vpop.f32.mrb[0].mxu0
      %1227 = vmatprep.mubr.f32.mxu0 0.0
      %1228 = vmatmul.mubr.f32.gmra.mrb[0].mxu0 %v1120
      %v1229 = vpop.f32.mrb[0].mxu0
      %v1230 = vadd.f32 0.0, %v1229
      %v1231 = vpop.f32.mrb[0].mxu0
      %1232 = vmatprep.mubr.f32.mxu0 0.0
      %1233 = vmatmul.mubr.f32.gmra.mrb[0].mxu0 %v1123
      %v1234 = vpop.f32.mrb[0].mxu0
      %v1235 = vadd.f32 0.0, %v1234
      %v1236 = vpop.f32.mrb[0].mxu0
      %1237 = vmatprep.mubr.f32.mxu0 0.0
      %1238 = vmatmul.mubr.f32.gmra.mrb[0].mxu0 %v1126
      %v1239 = vpop.f32.mrb[0].mxu0
      %v1240 = vadd.f32 0.0, %v1239
      %v1241 = vpop.f32.mrb[0].mxu0
      %1242 = vmatprep.mubr.f32.mxu0 0.0
      %1243 = vmatmul.mubr.f32.gmra.mrb[0].mxu0 %v1129
      %v1244 = vpop.f32.mrb[0].mxu0
      %v1245 = vadd.f32 0.0, %v1244
      %v1246 = vpop.f32.mrb[0].mxu0
      %1247 = vmatprep.mubr.f32.mxu0 0.0
      %1248 = vmatmul.mubr.f32.gmra.mrb[0].mxu0 %v1132
      %v1249 = vpop.f32.mrb[0].mxu0
      %v1250 = vadd.f32 0.0, %v1249
      %v1251 = vpop.f32.mrb[0].mxu0
      %1252 = vmatprep.mubr.f32.mxu0 0.0
      %1253 = vmatmul.mubr.f32.gmra.mrb[0].mxu0 %v1135
      %v1254 = vpop.f32.mrb[0].mxu0
      %v1255 = vadd.f32 0.0, %v1254
      %v1256 = vpop.f32.mrb[0].mxu0
      %1257 = vmatprep.mubr.f32.mxu0 0.0
      %1258 = vmatmul.mubr.f32.gmra.mrb[0].mxu0 %v1138
      %v1259 = vpop.f32.mrb[0].mxu0
      %v1260 = vadd.f32 0.0, %v1259
      %v1261 = vpop.f32.mrb[0].mxu0
      %1262 = vmatprep.mubr.f32.mxu0 0.0
      %1263 = vmatmul.mubr.f32.gmra.mrb[0].mxu0 %v1141
      %v1264 = vpop.f32.mrb[0].mxu0
      %v1265 = vadd.f32 0.0, %v1264
      %v1266 = vpop.f32.mrb[0].mxu0
      %1267 = vdwg.mxu0
      %v1268 = vadd.f32 %v1029, %v1210
      %v1269 = vadd.f32 %v1034, %v1215
      %v1270 = vadd.f32 %v1039, %v1220
      %v1271 = vadd.f32 %v1044, %v1225
      %v1272 = vadd.f32 %v1049, %v1230
      %v1273 = vadd.f32 %v1054, %v1235
      %v1274 = vadd.f32 %v1059, %v1240
      %v1275 = vadd.f32 %v1064, %v1245
      %v1276 = vadd.f32 %v1069, %v1250
      %v1277 = vadd.f32 %v1074, %v1255
      %v1278 = vadd.f32 %v1079, %v1260
      %v1279 = vadd.f32 %v1084, %v1265
      %v1280 = vld [vmem:[#allocation2 + $0x3] sm:$0xff]
      %v1281 = vld [vmem:[#allocation2 + $0xb] sm:$0xff]
      %v1282 = vld [vmem:[#allocation2 + $0x13] sm:$0xff]
      %v1283 = vld [vmem:[#allocation2 + $0x1b] sm:$0xff]
      %v1284 = vld [vmem:[#allocation2 + $0x23] sm:$0xff]
      %v1285 = vld [vmem:[#allocation2 + $0x2b] sm:$0xff]
      %v1286 = vld [vmem:[#allocation2 + $0x33] sm:$0xff]
      %v1287 = vld [vmem:[#allocation2 + $0x3b] sm:$0xff]
      %v1288 = vld [vmem:[#allocation2 + $0x43] sm:$0xff]
      %v1289 = vld [vmem:[#allocation2 + $0x4b] sm:$0xff]
      %v1290 = vld [vmem:[#allocation2 + $0x53] sm:$0xff]
      %v1291 = vld [vmem:[#allocation2 + $0x5b] sm:$0xff]
      %v1292 = vld [vmem:[%s3 + $0xc0] sm:$0xff]
      %v1293 = vld [vmem:[%s3 + $0xc8] sm:$0xff]
      %v1294 = vld [vmem:[%s3 + $0xd0] sm:$0xff]
      %v1295 = vld [vmem:[%s3 + $0xd8] sm:$0xff]
      %v1296 = vld [vmem:[%s3 + $0xe0] sm:$0xff]
      %v1297 = vld [vmem:[%s3 + $0xe8] sm:$0xff]
      %v1298 = vld [vmem:[%s3 + $0xf0] sm:$0xff]
      %v1299 = vld [vmem:[%s3 + $0xf8] sm:$0xff]
      %v1301 = vsel %vm697, %v1280, 0
      %v1304 = vsel %vm697, %v1281, 0
      %v1307 = vsel %vm697, %v1282, 0
      %v1310 = vsel %vm697, %v1283, 0
      %v1313 = vsel %vm697, %v1284, 0
      %v1316 = vsel %vm697, %v1285, 0
      %v1319 = vsel %vm697, %v1286, 0
      %v1322 = vsel %vm697, %v1287, 0
      %v1325 = vsel %vm697, %v1288, 0
      %v1328 = vsel %vm697, %v1289, 0
      %v1331 = vsel %vm697, %v1290, 0
      %v1334 = vsel %vm697, %v1291, 0
      %1336 = vmatprep.subr.mxu0 0.0
      %1337 = vmatpush1.msra.mxu0 %v1292
      %1338 = vmatprep.subr.mxu0 0.0
      %1339 = vmatpush1.msra.mxu0 %v1293
      %1340 = vmatprep.subr.mxu0 0.0
      %1341 = vmatpush1.msra.mxu0 %v1294
      %1342 = vmatprep.subr.mxu0 0.0
      %1343 = vmatpush1.msra.mxu0 %v1295
      %1344 = vmatprep.subr.mxu0 0.0
      %1345 = vmatpush1.msra.mxu0 %v1296
      %1346 = vmatprep.subr.mxu0 0.0
      %1347 = vmatpush1.msra.mxu0 %v1297
      %1348 = vmatprep.subr.mxu0 0.0
      %1349 = vmatpush1.msra.mxu0 %v1298
      %1350 = vmatprep.subr.mxu0 0.0
      %1351 = vmatpush1.msra.mxu0 %v1299
      %1352 = vmatprep.subr.mxu0 0.0
      %1353 = vmatpush1.msra.mxu0 0.0
      %1354 = vmatprep.subr.mxu0 0.0
      %1355 = vmatpush1.msra.mxu0 0.0
      %1356 = vmatprep.subr.mxu0 0.0
      %1357 = vmatpush1.msra.mxu0 0.0
      %1358 = vmatprep.subr.mxu0 0.0
      %1359 = vmatpush1.msra.mxu0 0.0
      %1360 = vmatprep.subr.mxu0 0.0
      %1361 = vmatpush1.msra.mxu0 0.0
      %1362 = vmatprep.subr.mxu0 0.0
      %1363 = vmatpush1.msra.mxu0 0.0
      %1364 = vmatprep.subr.mxu0 0.0
      %1365 = vmatpush1.msra.mxu0 0.0
      %1366 = vmatprep.subr.mxu0 0.0
      %1367 = vmatpush1.msra.mxu0 0.0
      %1368 = vmatprep.subr.mxu0 0.0
      %1369 = vmatpush1.msra.mxu0 0.0
      %1370 = vmatprep.subr.mxu0 0.0
      %1371 = vmatpush1.msra.mxu0 0.0
      %1372 = vmatprep.subr.mxu0 0.0
      %1373 = vmatpush1.msra.mxu0 0.0
      %1374 = vmatprep.subr.mxu0 0.0
      %1375 = vmatpush1.msra.mxu0 0.0
      %1376 = vmatprep.subr.mxu0 0.0
      %1377 = vmatpush1.msra.mxu0 0.0
      %1378 = vmatprep.subr.mxu0 0.0
      %1379 = vmatpush1.msra.mxu0 0.0
      %1380 = vmatprep.subr.mxu0 0.0
      %1381 = vmatpush1.msra.mxu0 0.0
      %1382 = vmatprep.subr.mxu0 0.0
      %1383 = vmatpush1.msra.mxu0 0.0
      %1384 = vmatprep.subr.mxu0 0.0
      %1385 = vmatpush1.msra.mxu0 0.0
      %1386 = vmatprep.subr.mxu0 0.0
      %1387 = vmatpush1.msra.mxu0 0.0
      %1388 = vmatprep.subr.mxu0 0.0
      %1389 = vmatpush1.msra.mxu0 0.0
      %1390 = vmatprep.subr.mxu0 0.0
      %1391 = vmatpush1.msra.mxu0 0.0
      %1392 = vmatprep.subr.mxu0 0.0
      %1393 = vmatpush1.msra.mxu0 0.0
      %1394 = vmatprep.subr.mxu0 0.0
      %1395 = vmatpush1.msra.mxu0 0.0
      %1396 = vmatprep.subr.mxu0 0.0
      %1397 = vmatpush1.msra.mxu0 0.0
      %1398 = vmatprep.subr.mxu0 0.0
      %1399 = vmatpush1.msra.mxu0 0.0
      %1400 = vmatprep.mubr.f32.mxu0 0.0
      %1401 = vmatmul.mubr.f32.gmra.mrb[0].mxu0 %v1301
      %v1402 = vpop.f32.mrb[0].mxu0
      %v1403 = vadd.f32 0.0, %v1402
      %v1404 = vpop.f32.mrb[0].mxu0
      %1405 = vmatprep.mubr.f32.mxu0 0.0
      %1406 = vmatmul.mubr.f32.gmra.mrb[0].mxu0 %v1304
      %v1407 = vpop.f32.mrb[0].mxu0
      %v1408 = vadd.f32 0.0, %v1407
      %v1409 = vpop.f32.mrb[0].mxu0
      %1410 = vmatprep.mubr.f32.mxu0 0.0
      %1411 = vmatmul.mubr.f32.gmra.mrb[0].mxu0 %v1307
      %v1412 = vpop.f32.mrb[0].mxu0
      %v1413 = vadd.f32 0.0, %v1412
      %v1414 = vpop.f32.mrb[0].mxu0
      %1415 = vmatprep.mubr.f32.mxu0 0.0
      %1416 = vmatmul.mubr.f32.gmra.mrb[0].mxu0 %v1310
      %v1417 = vpop.f32.mrb[0].mxu0
      %v1418 = vadd.f32 0.0, %v1417
      %v1419 = vpop.f32.mrb[0].mxu0
      %1420 = vmatprep.mubr.f32.mxu0 0.0
      %1421 = vmatmul.mubr.f32.gmra.mrb[0].mxu0 %v1313
      %v1422 = vpop.f32.mrb[0].mxu0
      %v1423 = vadd.f32 0.0, %v1422
      %v1424 = vpop.f32.mrb[0].mxu0
      %1425 = vmatprep.mubr.f32.mxu0 0.0
      %1426 = vmatmul.mubr.f32.gmra.mrb[0].mxu0 %v1316
      %v1427 = vpop.f32.mrb[0].mxu0
      %v1428 = vadd.f32 0.0, %v1427
      %v1429 = vpop.f32.mrb[0].mxu0
      %1430 = vmatprep.mubr.f32.mxu0 0.0
      %1431 = vmatmul.mubr.f32.gmra.mrb[0].mxu0 %v1319
      %v1432 = vpop.f32.mrb[0].mxu0
      %v1433 = vadd.f32 0.0, %v1432
      %v1434 = vpop.f32.mrb[0].mxu0
      %1435 = vmatprep.mubr.f32.mxu0 0.0
      %1436 = vmatmul.mubr.f32.gmra.mrb[0].mxu0 %v1322
      %v1437 = vpop.f32.mrb[0].mxu0
      %v1438 = vadd.f32 0.0, %v1437
      %v1439 = vpop.f32.mrb[0].mxu0
      %1440 = vmatprep.mubr.f32.mxu0 0.0
      %1441 = vmatmul.mubr.f32.gmra.mrb[0].mxu0 %v1325
      %v1442 = vpop.f32.mrb[0].mxu0
      %v1443 = vadd.f32 0.0, %v1442
      %v1444 = vpop.f32.mrb[0].mxu0
      %1445 = vmatprep.mubr.f32.mxu0 0.0
      %1446 = vmatmul.mubr.f32.gmra.mrb[0].mxu0 %v1328
      %v1447 = vpop.f32.mrb[0].mxu0
      %v1448 = vadd.f32 0.0, %v1447
      %v1449 = vpop.f32.mrb[0].mxu0
      %1450 = vmatprep.mubr.f32.mxu0 0.0
      %1451 = vmatmul.mubr.f32.gmra.mrb[0].mxu0 %v1331
      %v1452 = vpop.f32.mrb[0].mxu0
      %v1453 = vadd.f32 0.0, %v1452
      %v1454 = vpop.f32.mrb[0].mxu0
      %1455 = vmatprep.mubr.f32.mxu0 0.0
      %1456 = vmatmul.mubr.f32.gmra.mrb[0].mxu0 %v1334
      %v1457 = vpop.f32.mrb[0].mxu0
      %v1458 = vadd.f32 0.0, %v1457
      %v1459 = vpop.f32.mrb[0].mxu0
      %1460 = vdwg.mxu0
      %v1461 = vadd.f32 %v1268, %v1403
      %v1462 = vadd.f32 %v1269, %v1408
      %v1463 = vadd.f32 %v1270, %v1413
      %v1464 = vadd.f32 %v1271, %v1418
      %v1465 = vadd.f32 %v1272, %v1423
      %v1466 = vadd.f32 %v1273, %v1428
      %v1467 = vadd.f32 %v1274, %v1433
      %v1468 = vadd.f32 %v1275, %v1438
      %v1469 = vadd.f32 %v1276, %v1443
      %v1470 = vadd.f32 %v1277, %v1448
      %v1471 = vadd.f32 %v1278, %v1453
      %v1472 = vadd.f32 %v1279, %v1458
      %v1473 = vld [vmem:[#allocation2 + $0x4] sm:$0xff]
      %v1474 = vld [vmem:[#allocation2 + $0xc] sm:$0xff]
      %v1475 = vld [vmem:[#allocation2 + $0x14] sm:$0xff]
      %v1476 = vld [vmem:[#allocation2 + $0x1c] sm:$0xff]
      %v1477 = vld [vmem:[#allocation2 + $0x24] sm:$0xff]
      %v1478 = vld [vmem:[#allocation2 + $0x2c] sm:$0xff]
      %v1479 = vld [vmem:[#allocation2 + $0x34] sm:$0xff]
      %v1480 = vld [vmem:[#allocation2 + $0x3c] sm:$0xff]
      %v1481 = vld [vmem:[#allocation2 + $0x44] sm:$0xff]
      %v1482 = vld [vmem:[#allocation2 + $0x4c] sm:$0xff]
      %v1483 = vld [vmem:[#allocation2 + $0x54] sm:$0xff]
      %v1484 = vld [vmem:[#allocation2 + $0x5c] sm:$0xff]
      %v1485 = vld [vmem:[%s3 + $0x100] sm:$0xff]
      %v1486 = vld [vmem:[%s3 + $0x108] sm:$0xff]
      %v1487 = vld [vmem:[%s3 + $0x110] sm:$0xff]
      %v1488 = vld [vmem:[%s3 + $0x118] sm:$0xff]
      %v1489 = vld [vmem:[%s3 + $0x120] sm:$0xff]
      %v1490 = vld [vmem:[%s3 + $0x128] sm:$0xff]
      %v1491 = vld [vmem:[%s3 + $0x130] sm:$0xff]
      %v1492 = vld [vmem:[%s3 + $0x138] sm:$0xff]
      %v1494 = vsel %vm697, %v1473, 0
      %v1497 = vsel %vm697, %v1474, 0
      %v1500 = vsel %vm697, %v1475, 0
      %v1503 = vsel %vm697, %v1476, 0
      %v1506 = vsel %vm697, %v1477, 0
      %v1509 = vsel %vm697, %v1478, 0
      %v1512 = vsel %vm697, %v1479, 0
      %v1515 = vsel %vm697, %v1480, 0
      %v1518 = vsel %vm697, %v1481, 0
      %v1521 = vsel %vm697, %v1482, 0
      %v1524 = vsel %vm697, %v1483, 0
      %v1527 = vsel %vm697, %v1484, 0
      %1529 = vmatprep.subr.mxu0 0.0
      %1530 = vmatpush1.msra.mxu0 %v1485
      %1531 = vmatprep.subr.mxu0 0.0
      %1532 = vmatpush1.msra.mxu0 %v1486
      %1533 = vmatprep.subr.mxu0 0.0
      %1534 = vmatpush1.msra.mxu0 %v1487
      %1535 = vmatprep.subr.mxu0 0.0
      %1536 = vmatpush1.msra.mxu0 %v1488
      %1537 = vmatprep.subr.mxu0 0.0
      %1538 = vmatpush1.msra.mxu0 %v1489
      %1539 = vmatprep.subr.mxu0 0.0
      %1540 = vmatpush1.msra.mxu0 %v1490
      %1541 = vmatprep.subr.mxu0 0.0
      %1542 = vmatpush1.msra.mxu0 %v1491
      %1543 = vmatprep.subr.mxu0 0.0
      %1544 = vmatpush1.msra.mxu0 %v1492
      %1545 = vmatprep.subr.mxu0 0.0
      %1546 = vmatpush1.msra.mxu0 0.0
      %1547 = vmatprep.subr.mxu0 0.0
      %1548 = vmatpush1.msra.mxu0 0.0
      %1549 = vmatprep.subr.mxu0 0.0
      %1550 = vmatpush1.msra.mxu0 0.0
      %1551 = vmatprep.subr.mxu0 0.0
      %1552 = vmatpush1.msra.mxu0 0.0
      %1553 = vmatprep.subr.mxu0 0.0
      %1554 = vmatpush1.msra.mxu0 0.0
      %1555 = vmatprep.subr.mxu0 0.0
      %1556 = vmatpush1.msra.mxu0 0.0
      %1557 = vmatprep.subr.mxu0 0.0
      %1558 = vmatpush1.msra.mxu0 0.0
      %1559 = vmatprep.subr.mxu0 0.0
      %1560 = vmatpush1.msra.mxu0 0.0
      %1561 = vmatprep.subr.mxu0 0.0
      %1562 = vmatpush1.msra.mxu0 0.0
      %1563 = vmatprep.subr.mxu0 0.0
      %1564 = vmatpush1.msra.mxu0 0.0
      %1565 = vmatprep.subr.mxu0 0.0
      %1566 = vmatpush1.msra.mxu0 0.0
      %1567 = vmatprep.subr.mxu0 0.0
      %1568 = vmatpush1.msra.mxu0 0.0
      %1569 = vmatprep.subr.mxu0 0.0
      %1570 = vmatpush1.msra.mxu0 0.0
      %1571 = vmatprep.subr.mxu0 0.0
      %1572 = vmatpush1.msra.mxu0 0.0
      %1573 = vmatprep.subr.mxu0 0.0
      %1574 = vmatpush1.msra.mxu0 0.0
      %1575 = vmatprep.subr.mxu0 0.0
      %1576 = vmatpush1.msra.mxu0 0.0
      %1577 = vmatprep.subr.mxu0 0.0
      %1578 = vmatpush1.msra.mxu0 0.0
      %1579 = vmatprep.subr.mxu0 0.0
      %1580 = vmatpush1.msra.mxu0 0.0
      %1581 = vmatprep.subr.mxu0 0.0
      %1582 = vmatpush1.msra.mxu0 0.0
      %1583 = vmatprep.subr.mxu0 0.0
      %1584 = vmatpush1.msra.mxu0 0.0
      %1585 = vmatprep.subr.mxu0 0.0
      %1586 = vmatpush1.msra.mxu0 0.0
      %1587 = vmatprep.subr.mxu0 0.0
      %1588 = vmatpush1.msra.mxu0 0.0
      %1589 = vmatprep.subr.mxu0 0.0
      %1590 = vmatpush1.msra.mxu0 0.0
      %1591 = vmatprep.subr.mxu0 0.0
      %1592 = vmatpush1.msra.mxu0 0.0
      %1593 = vmatprep.mubr.f32.mxu0 0.0
      %1594 = vmatmul.mubr.f32.gmra.mrb[0].mxu0 %v1494
      %v1595 = vpop.f32.mrb[0].mxu0
      %v1596 = vadd.f32 0.0, %v1595
      %v1597 = vpop.f32.mrb[0].mxu0
      %1598 = vmatprep.mubr.f32.mxu0 0.0
      %1599 = vmatmul.mubr.f32.gmra.mrb[0].mxu0 %v1497
      %v1600 = vpop.f32.mrb[0].mxu0
      %v1601 = vadd.f32 0.0, %v1600
      %v1602 = vpop.f32.mrb[0].mxu0
      %1603 = vmatprep.mubr.f32.mxu0 0.0
      %1604 = vmatmul.mubr.f32.gmra.mrb[0].mxu0 %v1500
      %v1605 = vpop.f32.mrb[0].mxu0
      %v1606 = vadd.f32 0.0, %v1605
      %v1607 = vpop.f32.mrb[0].mxu0
      %1608 = vmatprep.mubr.f32.mxu0 0.0
      %1609 = vmatmul.mubr.f32.gmra.mrb[0].mxu0 %v1503
      %v1610 = vpop.f32.mrb[0].mxu0
      %v1611 = vadd.f32 0.0, %v1610
      %v1612 = vpop.f32.mrb[0].mxu0
      %1613 = vmatprep.mubr.f32.mxu0 0.0
      %1614 = vmatmul.mubr.f32.gmra.mrb[0].mxu0 %v1506
      %v1615 = vpop.f32.mrb[0].mxu0
      %v1616 = vadd.f32 0.0, %v1615
      %v1617 = vpop.f32.mrb[0].mxu0
      %1618 = vmatprep.mubr.f32.mxu0 0.0
      %1619 = vmatmul.mubr.f32.gmra.mrb[0].mxu0 %v1509
      %v1620 = vpop.f32.mrb[0].mxu0
      %v1621 = vadd.f32 0.0, %v1620
      %v1622 = vpop.f32.mrb[0].mxu0
      %1623 = vmatprep.mubr.f32.mxu0 0.0
      %1624 = vmatmul.mubr.f32.gmra.mrb[0].mxu0 %v1512
      %v1625 = vpop.f32.mrb[0].mxu0
      %v1626 = vadd.f32 0.0, %v1625
      %v1627 = vpop.f32.mrb[0].mxu0
      %1628 = vmatprep.mubr.f32.mxu0 0.0
      %1629 = vmatmul.mubr.f32.gmra.mrb[0].mxu0 %v1515
      %v1630 = vpop.f32.mrb[0].mxu0
      %v1631 = vadd.f32 0.0, %v1630
      %v1632 = vpop.f32.mrb[0].mxu0
      %1633 = vmatprep.mubr.f32.mxu0 0.0
      %1634 = vmatmul.mubr.f32.gmra.mrb[0].mxu0 %v1518
      %v1635 = vpop.f32.mrb[0].mxu0
      %v1636 = vadd.f32 0.0, %v1635
      %v1637 = vpop.f32.mrb[0].mxu0
      %1638 = vmatprep.mubr.f32.mxu0 0.0
      %1639 = vmatmul.mubr.f32.gmra.mrb[0].mxu0 %v1521
      %v1640 = vpop.f32.mrb[0].mxu0
      %v1641 = vadd.f32 0.0, %v1640
      %v1642 = vpop.f32.mrb[0].mxu0
      %1643 = vmatprep.mubr.f32.mxu0 0.0
      %1644 = vmatmul.mubr.f32.gmra.mrb[0].mxu0 %v1524
      %v1645 = vpop.f32.mrb[0].mxu0
      %v1646 = vadd.f32 0.0, %v1645
      %v1647 = vpop.f32.mrb[0].mxu0
      %1648 = vmatprep.mubr.f32.mxu0 0.0
      %1649 = vmatmul.mubr.f32.gmra.mrb[0].mxu0 %v1527
      %v1650 = vpop.f32.mrb[0].mxu0
      %v1651 = vadd.f32 0.0, %v1650
      %v1652 = vpop.f32.mrb[0].mxu0
      %1653 = vdwg.mxu0
      %v1654 = vadd.f32 %v1461, %v1596
      %v1655 = vadd.f32 %v1462, %v1601
      %v1656 = vadd.f32 %v1463, %v1606
      %v1657 = vadd.f32 %v1464, %v1611
      %v1658 = vadd.f32 %v1465, %v1616
      %v1659 = vadd.f32 %v1466, %v1621
      %v1660 = vadd.f32 %v1467, %v1626
      %v1661 = vadd.f32 %v1468, %v1631
      %v1662 = vadd.f32 %v1469, %v1636
      %v1663 = vadd.f32 %v1470, %v1641
      %v1664 = vadd.f32 %v1471, %v1646
      %v1665 = vadd.f32 %v1472, %v1651
      %v1666 = vld [vmem:[#allocation2 + $0xc] sm:$0xff]
      %v1667 = vld [vmem:[#allocation2 + $0x14] sm:$0xff]
      %v1668 = vld [vmem:[#allocation2 + $0x1c] sm:$0xff]
      %v1669 = vld [vmem:[#allocation2 + $0x24] sm:$0xff]
      %v1670 = vld [vmem:[#allocation2 + $0x2c] sm:$0xff]
      %v1671 = vld [vmem:[#allocation2 + $0x34] sm:$0xff]
      %v1672 = vld [vmem:[#allocation2 + $0x3c] sm:$0xff]
      %v1673 = vld [vmem:[#allocation2 + $0x44] sm:$0xff]
      %v1674 = vld [vmem:[#allocation2 + $0x4c] sm:$0xff]
      %v1675 = vld [vmem:[#allocation2 + $0x54] sm:$0xff]
      %v1676 = vld [vmem:[#allocation2 + $0x5c] sm:$0xff]
      %v1677 = vld [vmem:[#allocation2 + $0x64] sm:$0xff]
      %v1678 = vld [vmem:[%s3 + $0x140] sm:$0xff]
      %v1679 = vld [vmem:[%s3 + $0x148] sm:$0xff]
      %v1680 = vld [vmem:[%s3 + $0x150] sm:$0xff]
      %v1681 = vld [vmem:[%s3 + $0x158] sm:$0xff]
      %v1682 = vld [vmem:[%s3 + $0x160] sm:$0xff]
      %v1683 = vld [vmem:[%s3 + $0x168] sm:$0xff]
      %v1684 = vld [vmem:[%s3 + $0x170] sm:$0xff]
      %v1685 = vld [vmem:[%s3 + $0x178] sm:$0xff]
      %v1687 = vsel %vm697, %v1666, 0
      %v1690 = vsel %vm697, %v1667, 0
      %v1693 = vsel %vm697, %v1668, 0
      %v1696 = vsel %vm697, %v1669, 0
      %v1699 = vsel %vm697, %v1670, 0
      %v1702 = vsel %vm697, %v1671, 0
      %v1705 = vsel %vm697, %v1672, 0
      %v1708 = vsel %vm697, %v1673, 0
      %v1711 = vsel %vm697, %v1674, 0
      %v1714 = vsel %vm697, %v1675, 0
      %v1717 = vsel %vm697, %v1676, 0
      %v1720 = vsel %vm697, %v1677, 0
      %1722 = vmatprep.subr.mxu0 0.0
      %1723 = vmatpush1.msra.mxu0 %v1678
      %1724 = vmatprep.subr.mxu0 0.0
      %1725 = vmatpush1.msra.mxu0 %v1679
      %1726 = vmatprep.subr.mxu0 0.0
      %1727 = vmatpush1.msra.mxu0 %v1680
      %1728 = vmatprep.subr.mxu0 0.0
      %1729 = vmatpush1.msra.mxu0 %v1681
      %1730 = vmatprep.subr.mxu0 0.0
      %1731 = vmatpush1.msra.mxu0 %v1682
      %1732 = vmatprep.subr.mxu0 0.0
      %1733 = vmatpush1.msra.mxu0 %v1683
      %1734 = vmatprep.subr.mxu0 0.0
      %1735 = vmatpush1.msra.mxu0 %v1684
      %1736 = vmatprep.subr.mxu0 0.0
      %1737 = vmatpush1.msra.mxu0 %v1685
      %1738 = vmatprep.subr.mxu0 0.0
      %1739 = vmatpush1.msra.mxu0 0.0
      %1740 = vmatprep.subr.mxu0 0.0
      %1741 = vmatpush1.msra.mxu0 0.0
      %1742 = vmatprep.subr.mxu0 0.0
      %1743 = vmatpush1.msra.mxu0 0.0
      %1744 = vmatprep.subr.mxu0 0.0
      %1745 = vmatpush1.msra.mxu0 0.0
      %1746 = vmatprep.subr.mxu0 0.0
      %1747 = vmatpush1.msra.mxu0 0.0
      %1748 = vmatprep.subr.mxu0 0.0
      %1749 = vmatpush1.msra.mxu0 0.0
      %1750 = vmatprep.subr.mxu0 0.0
      %1751 = vmatpush1.msra.mxu0 0.0
      %1752 = vmatprep.subr.mxu0 0.0
      %1753 = vmatpush1.msra.mxu0 0.0
      %1754 = vmatprep.subr.mxu0 0.0
      %1755 = vmatpush1.msra.mxu0 0.0
      %1756 = vmatprep.subr.mxu0 0.0
      %1757 = vmatpush1.msra.mxu0 0.0
      %1758 = vmatprep.subr.mxu0 0.0
      %1759 = vmatpush1.msra.mxu0 0.0
      %1760 = vmatprep.subr.mxu0 0.0
      %1761 = vmatpush1.msra.mxu0 0.0
      %1762 = vmatprep.subr.mxu0 0.0
      %1763 = vmatpush1.msra.mxu0 0.0
      %1764 = vmatprep.subr.mxu0 0.0
      %1765 = vmatpush1.msra.mxu0 0.0
      %1766 = vmatprep.subr.mxu0 0.0
      %1767 = vmatpush1.msra.mxu0 0.0
      %1768 = vmatprep.subr.mxu0 0.0
      %1769 = vmatpush1.msra.mxu0 0.0
      %1770 = vmatprep.subr.mxu0 0.0
      %1771 = vmatpush1.msra.mxu0 0.0
      %1772 = vmatprep.subr.mxu0 0.0
      %1773 = vmatpush1.msra.mxu0 0.0
      %1774 = vmatprep.subr.mxu0 0.0
      %1775 = vmatpush1.msra.mxu0 0.0
      %1776 = vmatprep.subr.mxu0 0.0
      %1777 = vmatpush1.msra.mxu0 0.0
      %1778 = vmatprep.subr.mxu0 0.0
      %1779 = vmatpush1.msra.mxu0 0.0
      %1780 = vmatprep.subr.mxu0 0.0
      %1781 = vmatpush1.msra.mxu0 0.0
      %1782 = vmatprep.subr.mxu0 0.0
      %1783 = vmatpush1.msra.mxu0 0.0
      %1784 = vmatprep.subr.mxu0 0.0
      %1785 = vmatpush1.msra.mxu0 0.0
      %1786 = vmatprep.mubr.f32.mxu0 0.0
      %1787 = vmatmul.mubr.f32.gmra.mrb[0].mxu0 %v1687
      %v1788 = vpop.f32.mrb[0].mxu0
      %v1789 = vadd.f32 0.0, %v1788
      %v1790 = vpop.f32.mrb[0].mxu0
      %1791 = vmatprep.mubr.f32.mxu0 0.0
      %1792 = vmatmul.mubr.f32.gmra.mrb[0].mxu0 %v1690
      %v1793 = vpop.f32.mrb[0].mxu0
      %v1794 = vadd.f32 0.0, %v1793
      %v1795 = vpop.f32.mrb[0].mxu0
      %1796 = vmatprep.mubr.f32.mxu0 0.0
      %1797 = vmatmul.mubr.f32.gmra.mrb[0].mxu0 %v1693
      %v1798 = vpop.f32.mrb[0].mxu0
      %v1799 = vadd.f32 0.0, %v1798
      %v1800 = vpop.f32.mrb[0].mxu0
      %1801 = vmatprep.mubr.f32.mxu0 0.0
      %1802 = vmatmul.mubr.f32.gmra.mrb[0].mxu0 %v1696
      %v1803 = vpop.f32.mrb[0].mxu0
      %v1804 = vadd.f32 0.0, %v1803
      %v1805 = vpop.f32.mrb[0].mxu0
      %1806 = vmatprep.mubr.f32.mxu0 0.0
      %1807 = vmatmul.mubr.f32.gmra.mrb[0].mxu0 %v1699
      %v1808 = vpop.f32.mrb[0].mxu0
      %v1809 = vadd.f32 0.0, %v1808
      %v1810 = vpop.f32.mrb[0].mxu0
      %1811 = vmatprep.mubr.f32.mxu0 0.0
      %1812 = vmatmul.mubr.f32.gmra.mrb[0].mxu0 %v1702
      %v1813 = vpop.f32.mrb[0].mxu0
      %v1814 = vadd.f32 0.0, %v1813
      %v1815 = vpop.f32.mrb[0].mxu0
      %1816 = vmatprep.mubr.f32.mxu0 0.0
      %1817 = vmatmul.mubr.f32.gmra.mrb[0].mxu0 %v1705
      %v1818 = vpop.f32.mrb[0].mxu0
      %v1819 = vadd.f32 0.0, %v1818
      %v1820 = vpop.f32.mrb[0].mxu0
      %1821 = vmatprep.mubr.f32.mxu0 0.0
      %1822 = vmatmul.mubr.f32.gmra.mrb[0].mxu0 %v1708
      %v1823 = vpop.f32.mrb[0].mxu0
      %v1824 = vadd.f32 0.0, %v1823
      %v1825 = vpop.f32.mrb[0].mxu0
      %1826 = vmatprep.mubr.f32.mxu0 0.0
      %1827 = vmatmul.mubr.f32.gmra.mrb[0].mxu0 %v1711
      %v1828 = vpop.f32.mrb[0].mxu0
      %v1829 = vadd.f32 0.0, %v1828
      %v1830 = vpop.f32.mrb[0].mxu0
      %1831 = vmatprep.mubr.f32.mxu0 0.0
      %1832 = vmatmul.mubr.f32.gmra.mrb[0].mxu0 %v1714
      %v1833 = vpop.f32.mrb[0].mxu0
      %v1834 = vadd.f32 0.0, %v1833
      %v1835 = vpop.f32.mrb[0].mxu0
      %1836 = vmatprep.mubr.f32.mxu0 0.0
      %1837 = vmatmul.mubr.f32.gmra.mrb[0].mxu0 %v1717
      %v1838 = vpop.f32.mrb[0].mxu0
      %v1839 = vadd.f32 0.0, %v1838
      %v1840 = vpop.f32.mrb[0].mxu0
      %1841 = vmatprep.mubr.f32.mxu0 0.0
      %1842 = vmatmul.mubr.f32.gmra.mrb[0].mxu0 %v1720
      %v1843 = vpop.f32.mrb[0].mxu0
      %v1844 = vadd.f32 0.0, %v1843
      %v1845 = vpop.f32.mrb[0].mxu0
      %1846 = vdwg.mxu0
      %v1847 = vadd.f32 %v1654, %v1789
      %v1848 = vadd.f32 %v1655, %v1794
      %v1849 = vadd.f32 %v1656, %v1799
      %v1850 = vadd.f32 %v1657, %v1804
      %v1851 = vadd.f32 %v1658, %v1809
      %v1852 = vadd.f32 %v1659, %v1814
      %v1853 = vadd.f32 %v1660, %v1819
      %v1854 = vadd.f32 %v1661, %v1824
      %v1855 = vadd.f32 %v1662, %v1829
      %v1856 = vadd.f32 %v1663, %v1834
      %v1857 = vadd.f32 %v1664, %v1839
      %v1858 = vadd.f32 %v1665, %v1844
      %v1859 = vld [vmem:[#allocation2 + $0xd] sm:$0xff]
      %v1860 = vld [vmem:[#allocation2 + $0x15] sm:$0xff]
      %v1861 = vld [vmem:[#allocation2 + $0x1d] sm:$0xff]
      %v1862 = vld [vmem:[#allocation2 + $0x25] sm:$0xff]
      %v1863 = vld [vmem:[#allocation2 + $0x2d] sm:$0xff]
      %v1864 = vld [vmem:[#allocation2 + $0x35] sm:$0xff]
      %v1865 = vld [vmem:[#allocation2 + $0x3d] sm:$0xff]
      %v1866 = vld [vmem:[#allocation2 + $0x45] sm:$0xff]
      %v1867 = vld [vmem:[#allocation2 + $0x4d] sm:$0xff]
      %v1868 = vld [vmem:[#allocation2 + $0x55] sm:$0xff]
      %v1869 = vld [vmem:[#allocation2 + $0x5d] sm:$0xff]
      %v1870 = vld [vmem:[#allocation2 + $0x65] sm:$0xff]
      %v1871 = vld [vmem:[%s3 + $0x180] sm:$0xff]
      %v1872 = vld [vmem:[%s3 + $0x188] sm:$0xff]
      %v1873 = vld [vmem:[%s3 + $0x190] sm:$0xff]
      %v1874 = vld [vmem:[%s3 + $0x198] sm:$0xff]
      %v1875 = vld [vmem:[%s3 + $0x1a0] sm:$0xff]
      %v1876 = vld [vmem:[%s3 + $0x1a8] sm:$0xff]
      %v1877 = vld [vmem:[%s3 + $0x1b0] sm:$0xff]
      %v1878 = vld [vmem:[%s3 + $0x1b8] sm:$0xff]
      %v1880 = vsel %vm697, %v1859, 0
      %v1883 = vsel %vm697, %v1860, 0
      %v1886 = vsel %vm697, %v1861, 0
      %v1889 = vsel %vm697, %v1862, 0
      %v1892 = vsel %vm697, %v1863, 0
      %v1895 = vsel %vm697, %v1864, 0
      %v1898 = vsel %vm697, %v1865, 0
      %v1901 = vsel %vm697, %v1866, 0
      %v1904 = vsel %vm697, %v1867, 0
      %v1907 = vsel %vm697, %v1868, 0
      %v1910 = vsel %vm697, %v1869, 0
      %v1913 = vsel %vm697, %v1870, 0
      %1915 = vmatprep.subr.mxu0 0.0
      %1916 = vmatpush1.msra.mxu0 %v1871
      %1917 = vmatprep.subr.mxu0 0.0
      %1918 = vmatpush1.msra.mxu0 %v1872
      %1919 = vmatprep.subr.mxu0 0.0
      %1920 = vmatpush1.msra.mxu0 %v1873
      %1921 = vmatprep.subr.mxu0 0.0
      %1922 = vmatpush1.msra.mxu0 %v1874
      %1923 = vmatprep.subr.mxu0 0.0
      %1924 = vmatpush1.msra.mxu0 %v1875
      %1925 = vmatprep.subr.mxu0 0.0
      %1926 = vmatpush1.msra.mxu0 %v1876
      %1927 = vmatprep.subr.mxu0 0.0
      %1928 = vmatpush1.msra.mxu0 %v1877
      %1929 = vmatprep.subr.mxu0 0.0
      %1930 = vmatpush1.msra.mxu0 %v1878
      %1931 = vmatprep.subr.mxu0 0.0
      %1932 = vmatpush1.msra.mxu0 0.0
      %1933 = vmatprep.subr.mxu0 0.0
      %1934 = vmatpush1.msra.mxu0 0.0
      %1935 = vmatprep.subr.mxu0 0.0
      %1936 = vmatpush1.msra.mxu0 0.0
      %1937 = vmatprep.subr.mxu0 0.0
      %1938 = vmatpush1.msra.mxu0 0.0
      %1939 = vmatprep.subr.mxu0 0.0
      %1940 = vmatpush1.msra.mxu0 0.0
      %1941 = vmatprep.subr.mxu0 0.0
      %1942 = vmatpush1.msra.mxu0 0.0
      %1943 = vmatprep.subr.mxu0 0.0
      %1944 = vmatpush1.msra.mxu0 0.0
      %1945 = vmatprep.subr.mxu0 0.0
      %1946 = vmatpush1.msra.mxu0 0.0
      %1947 = vmatprep.subr.mxu0 0.0
      %1948 = vmatpush1.msra.mxu0 0.0
      %1949 = vmatprep.subr.mxu0 0.0
      %1950 = vmatpush1.msra.mxu0 0.0
      %1951 = vmatprep.subr.mxu0 0.0
      %1952 = vmatpush1.msra.mxu0 0.0
      %1953 = vmatprep.subr.mxu0 0.0
      %1954 = vmatpush1.msra.mxu0 0.0
      %1955 = vmatprep.subr.mxu0 0.0
      %1956 = vmatpush1.msra.mxu0 0.0
      %1957 = vmatprep.subr.mxu0 0.0
      %1958 = vmatpush1.msra.mxu0 0.0
      %1959 = vmatprep.subr.mxu0 0.0
      %1960 = vmatpush1.msra.mxu0 0.0
      %1961 = vmatprep.subr.mxu0 0.0
      %1962 = vmatpush1.msra.mxu0 0.0
      %1963 = vmatprep.subr.mxu0 0.0
      %1964 = vmatpush1.msra.mxu0 0.0
      %1965 = vmatprep.subr.mxu0 0.0
      %1966 = vmatpush1.msra.mxu0 0.0
      %1967 = vmatprep.subr.mxu0 0.0
      %1968 = vmatpush1.msra.mxu0 0.0
      %1969 = vmatprep.subr.mxu0 0.0
      %1970 = vmatpush1.msra.mxu0 0.0
      %1971 = vmatprep.subr.mxu0 0.0
      %1972 = vmatpush1.msra.mxu0 0.0
      %1973 = vmatprep.subr.mxu0 0.0
      %1974 = vmatpush1.msra.mxu0 0.0
      %1975 = vmatprep.subr.mxu0 0.0
      %1976 = vmatpush1.msra.mxu0 0.0
      %1977 = vmatprep.subr.mxu0 0.0
      %1978 = vmatpush1.msra.mxu0 0.0
      %1979 = vmatprep.mubr.f32.mxu0 0.0
      %1980 = vmatmul.mubr.f32.gmra.mrb[0].mxu0 %v1880
      %v1981 = vpop.f32.mrb[0].mxu0
      %v1982 = vadd.f32 0.0, %v1981
      %v1983 = vpop.f32.mrb[0].mxu0
      %1984 = vmatprep.mubr.f32.mxu0 0.0
      %1985 = vmatmul.mubr.f32.gmra.mrb[0].mxu0 %v1883
      %v1986 = vpop.f32.mrb[0].mxu0
      %v1987 = vadd.f32 0.0, %v1986
      %v1988 = vpop.f32.mrb[0].mxu0
      %1989 = vmatprep.mubr.f32.mxu0 0.0
      %1990 = vmatmul.mubr.f32.gmra.mrb[0].mxu0 %v1886
      %v1991 = vpop.f32.mrb[0].mxu0
      %v1992 = vadd.f32 0.0, %v1991
      %v1993 = vpop.f32.mrb[0].mxu0
      %1994 = vmatprep.mubr.f32.mxu0 0.0
      %1995 = vmatmul.mubr.f32.gmra.mrb[0].mxu0 %v1889
      %v1996 = vpop.f32.mrb[0].mxu0
      %v1997 = vadd.f32 0.0, %v1996
      %v1998 = vpop.f32.mrb[0].mxu0
      %1999 = vmatprep.mubr.f32.mxu0 0.0
      %2000 = vmatmul.mubr.f32.gmra.mrb[0].mxu0 %v1892
      %v2001 = vpop.f32.mrb[0].mxu0
      %v2002 = vadd.f32 0.0, %v2001
      %v2003 = vpop.f32.mrb[0].mxu0
      %2004 = vmatprep.mubr.f32.mxu0 0.0
      %2005 = vmatmul.mubr.f32.gmra.mrb[0].mxu0 %v1895
      %v2006 = vpop.f32.mrb[0].mxu0
      %v2007 = vadd.f32 0.0, %v2006
      %v2008 = vpop.f32.mrb[0].mxu0
      %2009 = vmatprep.mubr.f32.mxu0 0.0
      %2010 = vmatmul.mubr.f32.gmra.mrb[0].mxu0 %v1898
      %v2011 = vpop.f32.mrb[0].mxu0
      %v2012 = vadd.f32 0.0, %v2011
      %v2013 = vpop.f32.mrb[0].mxu0
      %2014 = vmatprep.mubr.f32.mxu0 0.0
      %2015 = vmatmul.mubr.f32.gmra.mrb[0].mxu0 %v1901
      %v2016 = vpop.f32.mrb[0].mxu0
      %v2017 = vadd.f32 0.0, %v2016
      %v2018 = vpop.f32.mrb[0].mxu0
      %2019 = vmatprep.mubr.f32.mxu0 0.0
      %2020 = vmatmul.mubr.f32.gmra.mrb[0].mxu0 %v1904
      %v2021 = vpop.f32.mrb[0].mxu0
      %v2022 = vadd.f32 0.0, %v2021
      %v2023 = vpop.f32.mrb[0].mxu0
      %2024 = vmatprep.mubr.f32.mxu0 0.0
      %2025 = vmatmul.mubr.f32.gmra.mrb[0].mxu0 %v1907
      %v2026 = vpop.f32.mrb[0].mxu0
      %v2027 = vadd.f32 0.0, %v2026
      %v2028 = vpop.f32.mrb[0].mxu0
      %2029 = vmatprep.mubr.f32.mxu0 0.0
      %2030 = vmatmul.mubr.f32.gmra.mrb[0].mxu0 %v1910
      %v2031 = vpop.f32.mrb[0].mxu0
      %v2032 = vadd.f32 0.0, %v2031
      %v2033 = vpop.f32.mrb[0].mxu0
      %2034 = vmatprep.mubr.f32.mxu0 0.0
      %2035 = vmatmul.mubr.f32.gmra.mrb[0].mxu0 %v1913
      %v2036 = vpop.f32.mrb[0].mxu0
      %v2037 = vadd.f32 0.0, %v2036
      %v2038 = vpop.f32.mrb[0].mxu0
      %2039 = vdwg.mxu0
      %v2040 = vadd.f32 %v1847, %v1982
      %v2041 = vadd.f32 %v1848, %v1987
      %v2042 = vadd.f32 %v1849, %v1992
      %v2043 = vadd.f32 %v1850, %v1997
      %v2044 = vadd.f32 %v1851, %v2002
      %v2045 = vadd.f32 %v1852, %v2007
      %v2046 = vadd.f32 %v1853, %v2012
      %v2047 = vadd.f32 %v1854, %v2017
      %v2048 = vadd.f32 %v1855, %v2022
      %v2049 = vadd.f32 %v1856, %v2027
      %v2050 = vadd.f32 %v1857, %v2032
      %v2051 = vadd.f32 %v1858, %v2037
      %v2052 = vld [vmem:[#allocation2 + $0xe] sm:$0xff]
      %v2053 = vld [vmem:[#allocation2 + $0x16] sm:$0xff]
      %v2054 = vld [vmem:[#allocation2 + $0x1e] sm:$0xff]
      %v2055 = vld [vmem:[#allocation2 + $0x26] sm:$0xff]
      %v2056 = vld [vmem:[#allocation2 + $0x2e] sm:$0xff]
      %v2057 = vld [vmem:[#allocation2 + $0x36] sm:$0xff]
      %v2058 = vld [vmem:[#allocation2 + $0x3e] sm:$0xff]
      %v2059 = vld [vmem:[#allocation2 + $0x46] sm:$0xff]
      %v2060 = vld [vmem:[#allocation2 + $0x4e] sm:$0xff]
      %v2061 = vld [vmem:[#allocation2 + $0x56] sm:$0xff]
      %v2062 = vld [vmem:[#allocation2 + $0x5e] sm:$0xff]
      %v2063 = vld [vmem:[#allocation2 + $0x66] sm:$0xff]
      %v2064 = vld [vmem:[%s3 + $0x1c0] sm:$0xff]
      %v2065 = vld [vmem:[%s3 + $0x1c8] sm:$0xff]
      %v2066 = vld [vmem:[%s3 + $0x1d0] sm:$0xff]
      %v2067 = vld [vmem:[%s3 + $0x1d8] sm:$0xff]
      %v2068 = vld [vmem:[%s3 + $0x1e0] sm:$0xff]
      %v2069 = vld [vmem:[%s3 + $0x1e8] sm:$0xff]
      %v2070 = vld [vmem:[%s3 + $0x1f0] sm:$0xff]
      %v2071 = vld [vmem:[%s3 + $0x1f8] sm:$0xff]
      %v2073 = vsel %vm697, %v2052, 0
      %v2076 = vsel %vm697, %v2053, 0
      %v2079 = vsel %vm697, %v2054, 0
      %v2082 = vsel %vm697, %v2055, 0
      %v2085 = vsel %vm697, %v2056, 0
      %v2088 = vsel %vm697, %v2057, 0
      %v2091 = vsel %vm697, %v2058, 0
      %v2094 = vsel %vm697, %v2059, 0
      %v2097 = vsel %vm697, %v2060, 0
      %v2100 = vsel %vm697, %v2061, 0
      %v2103 = vsel %vm697, %v2062, 0
      %v2106 = vsel %vm697, %v2063, 0
      %2108 = vmatprep.subr.mxu0 0.0
      %2109 = vmatpush1.msra.mxu0 %v2064
      %2110 = vmatprep.subr.mxu0 0.0
      %2111 = vmatpush1.msra.mxu0 %v2065
      %2112 = vmatprep.subr.mxu0 0.0
      %2113 = vmatpush1.msra.mxu0 %v2066
      %2114 = vmatprep.subr.mxu0 0.0
      %2115 = vmatpush1.msra.mxu0 %v2067
      %2116 = vmatprep.subr.mxu0 0.0
      %2117 = vmatpush1.msra.mxu0 %v2068
      %2118 = vmatprep.subr.mxu0 0.0
      %2119 = vmatpush1.msra.mxu0 %v2069
      %2120 = vmatprep.subr.mxu0 0.0
      %2121 = vmatpush1.msra.mxu0 %v2070
      %2122 = vmatprep.subr.mxu0 0.0
      %2123 = vmatpush1.msra.mxu0 %v2071
      %2124 = vmatprep.subr.mxu0 0.0
      %2125 = vmatpush1.msra.mxu0 0.0
      %2126 = vmatprep.subr.mxu0 0.0
      %2127 = vmatpush1.msra.mxu0 0.0
      %2128 = vmatprep.subr.mxu0 0.0
      %2129 = vmatpush1.msra.mxu0 0.0
      %2130 = vmatprep.subr.mxu0 0.0
      %2131 = vmatpush1.msra.mxu0 0.0
      %2132 = vmatprep.subr.mxu0 0.0
      %2133 = vmatpush1.msra.mxu0 0.0
      %2134 = vmatprep.subr.mxu0 0.0
      %2135 = vmatpush1.msra.mxu0 0.0
      %2136 = vmatprep.subr.mxu0 0.0
      %2137 = vmatpush1.msra.mxu0 0.0
      %2138 = vmatprep.subr.mxu0 0.0
      %2139 = vmatpush1.msra.mxu0 0.0
      %2140 = vmatprep.subr.mxu0 0.0
      %2141 = vmatpush1.msra.mxu0 0.0
      %2142 = vmatprep.subr.mxu0 0.0
      %2143 = vmatpush1.msra.mxu0 0.0
      %2144 = vmatprep.subr.mxu0 0.0
      %2145 = vmatpush1.msra.mxu0 0.0
      %2146 = vmatprep.subr.mxu0 0.0
      %2147 = vmatpush1.msra.mxu0 0.0
      %2148 = vmatprep.subr.mxu0 0.0
      %2149 = vmatpush1.msra.mxu0 0.0
      %2150 = vmatprep.subr.mxu0 0.0
      %2151 = vmatpush1.msra.mxu0 0.0
      %2152 = vmatprep.subr.mxu0 0.0
      %2153 = vmatpush1.msra.mxu0 0.0
      %2154 = vmatprep.subr.mxu0 0.0
      %2155 = vmatpush1.msra.mxu0 0.0
      %2156 = vmatprep.subr.mxu0 0.0
      %2157 = vmatpush1.msra.mxu0 0.0
      %2158 = vmatprep.subr.mxu0 0.0
      %2159 = vmatpush1.msra.mxu0 0.0
      %2160 = vmatprep.subr.mxu0 0.0
      %2161 = vmatpush1.msra.mxu0 0.0
      %2162 = vmatprep.subr.mxu0 0.0
      %2163 = vmatpush1.msra.mxu0 0.0
      %2164 = vmatprep.subr.mxu0 0.0
      %2165 = vmatpush1.msra.mxu0 0.0
      %2166 = vmatprep.subr.mxu0 0.0
      %2167 = vmatpush1.msra.mxu0 0.0
      %2168 = vmatprep.subr.mxu0 0.0
      %2169 = vmatpush1.msra.mxu0 0.0
      %2170 = vmatprep.subr.mxu0 0.0
      %2171 = vmatpush1.msra.mxu0 0.0
      %2172 = vmatprep.mubr.f32.mxu0 0.0
      %2173 = vmatmul.mubr.f32.gmra.mrb[0].mxu0 %v2073
      %v2174 = vpop.f32.mrb[0].mxu0
      %v2175 = vadd.f32 0.0, %v2174
      %v2176 = vpop.f32.mrb[0].mxu0
      %2177 = vmatprep.mubr.f32.mxu0 0.0
      %2178 = vmatmul.mubr.f32.gmra.mrb[0].mxu0 %v2076
      %v2179 = vpop.f32.mrb[0].mxu0
      %v2180 = vadd.f32 0.0, %v2179
      %v2181 = vpop.f32.mrb[0].mxu0
      %2182 = vmatprep.mubr.f32.mxu0 0.0
      %2183 = vmatmul.mubr.f32.gmra.mrb[0].mxu0 %v2079
      %v2184 = vpop.f32.mrb[0].mxu0
      %v2185 = vadd.f32 0.0, %v2184
      %v2186 = vpop.f32.mrb[0].mxu0
      %2187 = vmatprep.mubr.f32.mxu0 0.0
      %2188 = vmatmul.mubr.f32.gmra.mrb[0].mxu0 %v2082
      %v2189 = vpop.f32.mrb[0].mxu0
      %v2190 = vadd.f32 0.0, %v2189
      %v2191 = vpop.f32.mrb[0].mxu0
      %2192 = vmatprep.mubr.f32.mxu0 0.0
      %2193 = vmatmul.mubr.f32.gmra.mrb[0].mxu0 %v2085
      %v2194 = vpop.f32.mrb[0].mxu0
      %v2195 = vadd.f32 0.0, %v2194
      %v2196 = vpop.f32.mrb[0].mxu0
      %2197 = vmatprep.mubr.f32.mxu0 0.0
      %2198 = vmatmul.mubr.f32.gmra.mrb[0].mxu0 %v2088
      %v2199 = vpop.f32.mrb[0].mxu0
      %v2200 = vadd.f32 0.0, %v2199
      %v2201 = vpop.f32.mrb[0].mxu0
      %2202 = vmatprep.mubr.f32.mxu0 0.0
      %2203 = vmatmul.mubr.f32.gmra.mrb[0].mxu0 %v2091
      %v2204 = vpop.f32.mrb[0].mxu0
      %v2205 = vadd.f32 0.0, %v2204
      %v2206 = vpop.f32.mrb[0].mxu0
      %2207 = vmatprep.mubr.f32.mxu0 0.0
      %2208 = vmatmul.mubr.f32.gmra.mrb[0].mxu0 %v2094
      %v2209 = vpop.f32.mrb[0].mxu0
      %v2210 = vadd.f32 0.0, %v2209
      %v2211 = vpop.f32.mrb[0].mxu0
      %2212 = vmatprep.mubr.f32.mxu0 0.0
      %2213 = vmatmul.mubr.f32.gmra.mrb[0].mxu0 %v2097
      %v2214 = vpop.f32.mrb[0].mxu0
      %v2215 = vadd.f32 0.0, %v2214
      %v2216 = vpop.f32.mrb[0].mxu0
      %2217 = vmatprep.mubr.f32.mxu0 0.0
      %2218 = vmatmul.mubr.f32.gmra.mrb[0].mxu0 %v2100
      %v2219 = vpop.f32.mrb[0].mxu0
      %v2220 = vadd.f32 0.0, %v2219
      %v2221 = vpop.f32.mrb[0].mxu0
      %2222 = vmatprep.mubr.f32.mxu0 0.0
      %2223 = vmatmul.mubr.f32.gmra.mrb[0].mxu0 %v2103
      %v2224 = vpop.f32.mrb[0].mxu0
      %v2225 = vadd.f32 0.0, %v2224
      %v2226 = vpop.f32.mrb[0].mxu0
      %2227 = vmatprep.mubr.f32.mxu0 0.0
      %2228 = vmatmul.mubr.f32.gmra.mrb[0].mxu0 %v2106
      %v2229 = vpop.f32.mrb[0].mxu0
      %v2230 = vadd.f32 0.0, %v2229
      %v2231 = vpop.f32.mrb[0].mxu0
      %2232 = vdwg.mxu0
      %v2233 = vadd.f32 %v2040, %v2175
      %v2234 = vadd.f32 %v2041, %v2180
      %v2235 = vadd.f32 %v2042, %v2185
      %v2236 = vadd.f32 %v2043, %v2190
      %v2237 = vadd.f32 %v2044, %v2195
      %v2238 = vadd.f32 %v2045, %v2200
      %v2239 = vadd.f32 %v2046, %v2205
      %v2240 = vadd.f32 %v2047, %v2210
      %v2241 = vadd.f32 %v2048, %v2215
      %v2242 = vadd.f32 %v2049, %v2220
      %v2243 = vadd.f32 %v2050, %v2225
      %v2244 = vadd.f32 %v2051, %v2230
      %v2245 = vld [vmem:[#allocation2 + $0xf] sm:$0xff]
      %v2246 = vld [vmem:[#allocation2 + $0x17] sm:$0xff]
      %v2247 = vld [vmem:[#allocation2 + $0x1f] sm:$0xff]
      %v2248 = vld [vmem:[#allocation2 + $0x27] sm:$0xff]
      %v2249 = vld [vmem:[#allocation2 + $0x2f] sm:$0xff]
      %v2250 = vld [vmem:[#allocation2 + $0x37] sm:$0xff]
      %v2251 = vld [vmem:[#allocation2 + $0x3f] sm:$0xff]
      %v2252 = vld [vmem:[#allocation2 + $0x47] sm:$0xff]
      %v2253 = vld [vmem:[#allocation2 + $0x4f] sm:$0xff]
      %v2254 = vld [vmem:[#allocation2 + $0x57] sm:$0xff]
      %v2255 = vld [vmem:[#allocation2 + $0x5f] sm:$0xff]
      %v2256 = vld [vmem:[#allocation2 + $0x67] sm:$0xff]
      %v2257 = vld [vmem:[%s3 + $0x200] sm:$0xff]
      %v2258 = vld [vmem:[%s3 + $0x208] sm:$0xff]
      %v2259 = vld [vmem:[%s3 + $0x210] sm:$0xff]
      %v2260 = vld [vmem:[%s3 + $0x218] sm:$0xff]
      %v2261 = vld [vmem:[%s3 + $0x220] sm:$0xff]
      %v2262 = vld [vmem:[%s3 + $0x228] sm:$0xff]
      %v2263 = vld [vmem:[%s3 + $0x230] sm:$0xff]
      %v2264 = vld [vmem:[%s3 + $0x238] sm:$0xff]
      %v2266 = vsel %vm697, %v2245, 0
      %v2269 = vsel %vm697, %v2246, 0
      %v2272 = vsel %vm697, %v2247, 0
      %v2275 = vsel %vm697, %v2248, 0
      %v2278 = vsel %vm697, %v2249, 0
      %v2281 = vsel %vm697, %v2250, 0
      %v2284 = vsel %vm697, %v2251, 0
      %v2287 = vsel %vm697, %v2252, 0
      %v2290 = vsel %vm697, %v2253, 0
      %v2293 = vsel %vm697, %v2254, 0
      %v2296 = vsel %vm697, %v2255, 0
      %v2299 = vsel %vm697, %v2256, 0
      %2301 = vmatprep.subr.mxu0 0.0
      %2302 = vmatpush1.msra.mxu0 %v2257
      %2303 = vmatprep.subr.mxu0 0.0
      %2304 = vmatpush1.msra.mxu0 %v2258
      %2305 = vmatprep.subr.mxu0 0.0
      %2306 = vmatpush1.msra.mxu0 %v2259
      %2307 = vmatprep.subr.mxu0 0.0
      %2308 = vmatpush1.msra.mxu0 %v2260
      %2309 = vmatprep.subr.mxu0 0.0
      %2310 = vmatpush1.msra.mxu0 %v2261
      %2311 = vmatprep.subr.mxu0 0.0
      %2312 = vmatpush1.msra.mxu0 %v2262
      %2313 = vmatprep.subr.mxu0 0.0
      %2314 = vmatpush1.msra.mxu0 %v2263
      %2315 = vmatprep.subr.mxu0 0.0
      %2316 = vmatpush1.msra.mxu0 %v2264
      %2317 = vmatprep.subr.mxu0 0.0
      %2318 = vmatpush1.msra.mxu0 0.0
      %2319 = vmatprep.subr.mxu0 0.0
      %2320 = vmatpush1.msra.mxu0 0.0
      %2321 = vmatprep.subr.mxu0 0.0
      %2322 = vmatpush1.msra.mxu0 0.0
      %2323 = vmatprep.subr.mxu0 0.0
      %2324 = vmatpush1.msra.mxu0 0.0
      %2325 = vmatprep.subr.mxu0 0.0
      %2326 = vmatpush1.msra.mxu0 0.0
      %2327 = vmatprep.subr.mxu0 0.0
      %2328 = vmatpush1.msra.mxu0 0.0
      %2329 = vmatprep.subr.mxu0 0.0
      %2330 = vmatpush1.msra.mxu0 0.0
      %2331 = vmatprep.subr.mxu0 0.0
      %2332 = vmatpush1.msra.mxu0 0.0
      %2333 = vmatprep.subr.mxu0 0.0
      %2334 = vmatpush1.msra.mxu0 0.0
      %2335 = vmatprep.subr.mxu0 0.0
      %2336 = vmatpush1.msra.mxu0 0.0
      %2337 = vmatprep.subr.mxu0 0.0
      %2338 = vmatpush1.msra.mxu0 0.0
      %2339 = vmatprep.subr.mxu0 0.0
      %2340 = vmatpush1.msra.mxu0 0.0
      %2341 = vmatprep.subr.mxu0 0.0
      %2342 = vmatpush1.msra.mxu0 0.0
      %2343 = vmatprep.subr.mxu0 0.0
      %2344 = vmatpush1.msra.mxu0 0.0
      %2345 = vmatprep.subr.mxu0 0.0
      %2346 = vmatpush1.msra.mxu0 0.0
      %2347 = vmatprep.subr.mxu0 0.0
      %2348 = vmatpush1.msra.mxu0 0.0
      %2349 = vmatprep.subr.mxu0 0.0
      %2350 = vmatpush1.msra.mxu0 0.0
      %2351 = vmatprep.subr.mxu0 0.0
      %2352 = vmatpush1.msra.mxu0 0.0
      %2353 = vmatprep.subr.mxu0 0.0
      %2354 = vmatpush1.msra.mxu0 0.0
      %2355 = vmatprep.subr.mxu0 0.0
      %2356 = vmatpush1.msra.mxu0 0.0
      %2357 = vmatprep.subr.mxu0 0.0
      %2358 = vmatpush1.msra.mxu0 0.0
      %2359 = vmatprep.subr.mxu0 0.0
      %2360 = vmatpush1.msra.mxu0 0.0
      %2361 = vmatprep.subr.mxu0 0.0
      %2362 = vmatpush1.msra.mxu0 0.0
      %2363 = vmatprep.subr.mxu0 0.0
      %2364 = vmatpush1.msra.mxu0 0.0
      %2365 = vmatprep.mubr.f32.mxu0 0.0
      %2366 = vmatmul.mubr.f32.gmra.mrb[0].mxu0 %v2266
      %v2367 = vpop.f32.mrb[0].mxu0
      %v2368 = vadd.f32 0.0, %v2367
      %v2369 = vpop.f32.mrb[0].mxu0
      %2370 = vmatprep.mubr.f32.mxu0 0.0
      %2371 = vmatmul.mubr.f32.gmra.mrb[0].mxu0 %v2269
      %v2372 = vpop.f32.mrb[0].mxu0
      %v2373 = vadd.f32 0.0, %v2372
      %v2374 = vpop.f32.mrb[0].mxu0
      %2375 = vmatprep.mubr.f32.mxu0 0.0
      %2376 = vmatmul.mubr.f32.gmra.mrb[0].mxu0 %v2272
      %v2377 = vpop.f32.mrb[0].mxu0
      %v2378 = vadd.f32 0.0, %v2377
      %v2379 = vpop.f32.mrb[0].mxu0
      %2380 = vmatprep.mubr.f32.mxu0 0.0
      %2381 = vmatmul.mubr.f32.gmra.mrb[0].mxu0 %v2275
      %v2382 = vpop.f32.mrb[0].mxu0
      %v2383 = vadd.f32 0.0, %v2382
      %v2384 = vpop.f32.mrb[0].mxu0
      %2385 = vmatprep.mubr.f32.mxu0 0.0
      %2386 = vmatmul.mubr.f32.gmra.mrb[0].mxu0 %v2278
      %v2387 = vpop.f32.mrb[0].mxu0
      %v2388 = vadd.f32 0.0, %v2387
      %v2389 = vpop.f32.mrb[0].mxu0
      %2390 = vmatprep.mubr.f32.mxu0 0.0
      %2391 = vmatmul.mubr.f32.gmra.mrb[0].mxu0 %v2281
      %v2392 = vpop.f32.mrb[0].mxu0
      %v2393 = vadd.f32 0.0, %v2392
      %v2394 = vpop.f32.mrb[0].mxu0
      %2395 = vmatprep.mubr.f32.mxu0 0.0
      %2396 = vmatmul.mubr.f32.gmra.mrb[0].mxu0 %v2284
      %v2397 = vpop.f32.mrb[0].mxu0
      %v2398 = vadd.f32 0.0, %v2397
      %v2399 = vpop.f32.mrb[0].mxu0
      %2400 = vmatprep.mubr.f32.mxu0 0.0
      %2401 = vmatmul.mubr.f32.gmra.mrb[0].mxu0 %v2287
      %v2402 = vpop.f32.mrb[0].mxu0
      %v2403 = vadd.f32 0.0, %v2402
      %v2404 = vpop.f32.mrb[0].mxu0
      %2405 = vmatprep.mubr.f32.mxu0 0.0
      %2406 = vmatmul.mubr.f32.gmra.mrb[0].mxu0 %v2290
      %v2407 = vpop.f32.mrb[0].mxu0
      %v2408 = vadd.f32 0.0, %v2407
      %v2409 = vpop.f32.mrb[0].mxu0
      %2410 = vmatprep.mubr.f32.mxu0 0.0
      %2411 = vmatmul.mubr.f32.gmra.mrb[0].mxu0 %v2293
      %v2412 = vpop.f32.mrb[0].mxu0
      %v2413 = vadd.f32 0.0, %v2412
      %v2414 = vpop.f32.mrb[0].mxu0
      %2415 = vmatprep.mubr.f32.mxu0 0.0
      %2416 = vmatmul.mubr.f32.gmra.mrb[0].mxu0 %v2296
      %v2417 = vpop.f32.mrb[0].mxu0
      %v2418 = vadd.f32 0.0, %v2417
      %v2419 = vpop.f32.mrb[0].mxu0
      %2420 = vmatprep.mubr.f32.mxu0 0.0
      %2421 = vmatmul.mubr.f32.gmra.mrb[0].mxu0 %v2299
      %v2422 = vpop.f32.mrb[0].mxu0
      %v2423 = vadd.f32 0.0, %v2422
      %v2424 = vpop.f32.mrb[0].mxu0
      %2425 = vdwg.mxu0
      %v2426 = vadd.f32 %v2233, %v2368
      %v2427 = vadd.f32 %v2234, %v2373
      %v2428 = vadd.f32 %v2235, %v2378
      %v2429 = vadd.f32 %v2236, %v2383
      %v2430 = vadd.f32 %v2237, %v2388
      %v2431 = vadd.f32 %v2238, %v2393
      %v2432 = vadd.f32 %v2239, %v2398
      %v2433 = vadd.f32 %v2240, %v2403
      %v2434 = vadd.f32 %v2241, %v2408
      %v2435 = vadd.f32 %v2242, %v2413
      %v2436 = vadd.f32 %v2243, %v2418
      %v2437 = vadd.f32 %v2244, %v2423
      %v2438 = vld [vmem:[#allocation2 + $0x10] sm:$0xff]
      %v2439 = vld [vmem:[#allocation2 + $0x18] sm:$0xff]
      %v2440 = vld [vmem:[#allocation2 + $0x20] sm:$0xff]
      %v2441 = vld [vmem:[#allocation2 + $0x28] sm:$0xff]
      %v2442 = vld [vmem:[#allocation2 + $0x30] sm:$0xff]
      %v2443 = vld [vmem:[#allocation2 + $0x38] sm:$0xff]
      %v2444 = vld [vmem:[#allocation2 + $0x40] sm:$0xff]
      %v2445 = vld [vmem:[#allocation2 + $0x48] sm:$0xff]
      %v2446 = vld [vmem:[#allocation2 + $0x50] sm:$0xff]
      %v2447 = vld [vmem:[#allocation2 + $0x58] sm:$0xff]
      %v2448 = vld [vmem:[#allocation2 + $0x60] sm:$0xff]
      %v2449 = vld [vmem:[#allocation2 + $0x68] sm:$0xff]
      %v2450 = vld [vmem:[%s3 + $0x240] sm:$0xff]
      %v2451 = vld [vmem:[%s3 + $0x248] sm:$0xff]
      %v2452 = vld [vmem:[%s3 + $0x250] sm:$0xff]
      %v2453 = vld [vmem:[%s3 + $0x258] sm:$0xff]
      %v2454 = vld [vmem:[%s3 + $0x260] sm:$0xff]
      %v2455 = vld [vmem:[%s3 + $0x268] sm:$0xff]
      %v2456 = vld [vmem:[%s3 + $0x270] sm:$0xff]
      %v2457 = vld [vmem:[%s3 + $0x278] sm:$0xff]
      %v2459 = vsel %vm697, %v2438, 0
      %v2462 = vsel %vm697, %v2439, 0
      %v2465 = vsel %vm697, %v2440, 0
      %v2468 = vsel %vm697, %v2441, 0
      %v2471 = vsel %vm697, %v2442, 0
      %v2474 = vsel %vm697, %v2443, 0
      %v2477 = vsel %vm697, %v2444, 0
      %v2480 = vsel %vm697, %v2445, 0
      %v2483 = vsel %vm697, %v2446, 0
      %v2486 = vsel %vm697, %v2447, 0
      %v2489 = vsel %vm697, %v2448, 0
      %v2492 = vsel %vm697, %v2449, 0
      %2494 = vmatprep.subr.mxu0 0.0
      %2495 = vmatpush1.msra.mxu0 %v2450
      %2496 = vmatprep.subr.mxu0 0.0
      %2497 = vmatpush1.msra.mxu0 %v2451
      %2498 = vmatprep.subr.mxu0 0.0
      %2499 = vmatpush1.msra.mxu0 %v2452
      %2500 = vmatprep.subr.mxu0 0.0
      %2501 = vmatpush1.msra.mxu0 %v2453
      %2502 = vmatprep.subr.mxu0 0.0
      %2503 = vmatpush1.msra.mxu0 %v2454
      %2504 = vmatprep.subr.mxu0 0.0
      %2505 = vmatpush1.msra.mxu0 %v2455
      %2506 = vmatprep.subr.mxu0 0.0
      %2507 = vmatpush1.msra.mxu0 %v2456
      %2508 = vmatprep.subr.mxu0 0.0
      %2509 = vmatpush1.msra.mxu0 %v2457
      %2510 = vmatprep.subr.mxu0 0.0
      %2511 = vmatpush1.msra.mxu0 0.0
      %2512 = vmatprep.subr.mxu0 0.0
      %2513 = vmatpush1.msra.mxu0 0.0
      %2514 = vmatprep.subr.mxu0 0.0
      %2515 = vmatpush1.msra.mxu0 0.0
      %2516 = vmatprep.subr.mxu0 0.0
      %2517 = vmatpush1.msra.mxu0 0.0
      %2518 = vmatprep.subr.mxu0 0.0
      %2519 = vmatpush1.msra.mxu0 0.0
      %2520 = vmatprep.subr.mxu0 0.0
      %2521 = vmatpush1.msra.mxu0 0.0
      %2522 = vmatprep.subr.mxu0 0.0
      %2523 = vmatpush1.msra.mxu0 0.0
      %2524 = vmatprep.subr.mxu0 0.0
      %2525 = vmatpush1.msra.mxu0 0.0
      %2526 = vmatprep.subr.mxu0 0.0
      %2527 = vmatpush1.msra.mxu0 0.0
      %2528 = vmatprep.subr.mxu0 0.0
      %2529 = vmatpush1.msra.mxu0 0.0
      %2530 = vmatprep.subr.mxu0 0.0
      %2531 = vmatpush1.msra.mxu0 0.0
      %2532 = vmatprep.subr.mxu0 0.0
      %2533 = vmatpush1.msra.mxu0 0.0
      %2534 = vmatprep.subr.mxu0 0.0
      %2535 = vmatpush1.msra.mxu0 0.0
      %2536 = vmatprep.subr.mxu0 0.0
      %2537 = vmatpush1.msra.mxu0 0.0
      %2538 = vmatprep.subr.mxu0 0.0
      %2539 = vmatpush1.msra.mxu0 0.0
      %2540 = vmatprep.subr.mxu0 0.0
      %2541 = vmatpush1.msra.mxu0 0.0
      %2542 = vmatprep.subr.mxu0 0.0
      %2543 = vmatpush1.msra.mxu0 0.0
      %2544 = vmatprep.subr.mxu0 0.0
      %2545 = vmatpush1.msra.mxu0 0.0
      %2546 = vmatprep.subr.mxu0 0.0
      %2547 = vmatpush1.msra.mxu0 0.0
      %2548 = vmatprep.subr.mxu0 0.0
      %2549 = vmatpush1.msra.mxu0 0.0
      %2550 = vmatprep.subr.mxu0 0.0
      %2551 = vmatpush1.msra.mxu0 0.0
      %2552 = vmatprep.subr.mxu0 0.0
      %2553 = vmatpush1.msra.mxu0 0.0
      %2554 = vmatprep.subr.mxu0 0.0
      %2555 = vmatpush1.msra.mxu0 0.0
      %2556 = vmatprep.subr.mxu0 0.0
      %2557 = vmatpush1.msra.mxu0 0.0
      %2558 = vmatprep.mubr.f32.mxu0 0.0
      %2559 = vmatmul.mubr.f32.gmra.mrb[0].mxu0 %v2459
      %v2560 = vpop.f32.mrb[0].mxu0
      %v2561 = vadd.f32 0.0, %v2560
      %v2562 = vpop.f32.mrb[0].mxu0
      %2563 = vmatprep.mubr.f32.mxu0 0.0
      %2564 = vmatmul.mubr.f32.gmra.mrb[0].mxu0 %v2462
      %v2565 = vpop.f32.mrb[0].mxu0
      %v2566 = vadd.f32 0.0, %v2565
      %v2567 = vpop.f32.mrb[0].mxu0
      %2568 = vmatprep.mubr.f32.mxu0 0.0
      %2569 = vmatmul.mubr.f32.gmra.mrb[0].mxu0 %v2465
      %v2570 = vpop.f32.mrb[0].mxu0
      %v2571 = vadd.f32 0.0, %v2570
      %v2572 = vpop.f32.mrb[0].mxu0
      %2573 = vmatprep.mubr.f32.mxu0 0.0
      %2574 = vmatmul.mubr.f32.gmra.mrb[0].mxu0 %v2468
      %v2575 = vpop.f32.mrb[0].mxu0
      %v2576 = vadd.f32 0.0, %v2575
      %v2577 = vpop.f32.mrb[0].mxu0
      %2578 = vmatprep.mubr.f32.mxu0 0.0
      %2579 = vmatmul.mubr.f32.gmra.mrb[0].mxu0 %v2471
      %v2580 = vpop.f32.mrb[0].mxu0
      %v2581 = vadd.f32 0.0, %v2580
      %v2582 = vpop.f32.mrb[0].mxu0
      %2583 = vmatprep.mubr.f32.mxu0 0.0
      %2584 = vmatmul.mubr.f32.gmra.mrb[0].mxu0 %v2474
      %v2585 = vpop.f32.mrb[0].mxu0
      %v2586 = vadd.f32 0.0, %v2585
      %v2587 = vpop.f32.mrb[0].mxu0
      %2588 = vmatprep.mubr.f32.mxu0 0.0
      %2589 = vmatmul.mubr.f32.gmra.mrb[0].mxu0 %v2477
      %v2590 = vpop.f32.mrb[0].mxu0
      %v2591 = vadd.f32 0.0, %v2590
      %v2592 = vpop.f32.mrb[0].mxu0
      %2593 = vmatprep.mubr.f32.mxu0 0.0
      %2594 = vmatmul.mubr.f32.gmra.mrb[0].mxu0 %v2480
      %v2595 = vpop.f32.mrb[0].mxu0
      %v2596 = vadd.f32 0.0, %v2595
      %v2597 = vpop.f32.mrb[0].mxu0
      %2598 = vmatprep.mubr.f32.mxu0 0.0
      %2599 = vmatmul.mubr.f32.gmra.mrb[0].mxu0 %v2483
      %v2600 = vpop.f32.mrb[0].mxu0
      %v2601 = vadd.f32 0.0, %v2600
      %v2602 = vpop.f32.mrb[0].mxu0
      %2603 = vmatprep.mubr.f32.mxu0 0.0
      %2604 = vmatmul.mubr.f32.gmra.mrb[0].mxu0 %v2486
      %v2605 = vpop.f32.mrb[0].mxu0
      %v2606 = vadd.f32 0.0, %v2605
      %v2607 = vpop.f32.mrb[0].mxu0
      %2608 = vmatprep.mubr.f32.mxu0 0.0
      %2609 = vmatmul.mubr.f32.gmra.mrb[0].mxu0 %v2489
      %v2610 = vpop.f32.mrb[0].mxu0
      %v2611 = vadd.f32 0.0, %v2610
      %v2612 = vpop.f32.mrb[0].mxu0
      %2613 = vmatprep.mubr.f32.mxu0 0.0
      %2614 = vmatmul.mubr.f32.gmra.mrb[0].mxu0 %v2492
      %v2615 = vpop.f32.mrb[0].mxu0
      %v2616 = vadd.f32 0.0, %v2615
      %v2617 = vpop.f32.mrb[0].mxu0
      %2618 = vdwg.mxu0
      %v2619 = vadd.f32 %v2426, %v2561
      %v2620 = vadd.f32 %v2427, %v2566
      %v2621 = vadd.f32 %v2428, %v2571
      %v2622 = vadd.f32 %v2429, %v2576
      %v2623 = vadd.f32 %v2430, %v2581
      %v2624 = vadd.f32 %v2431, %v2586
      %v2625 = vadd.f32 %v2432, %v2591
      %v2626 = vadd.f32 %v2433, %v2596
      %v2627 = vadd.f32 %v2434, %v2601
      %v2628 = vadd.f32 %v2435, %v2606
      %v2629 = vadd.f32 %v2436, %v2611
      %v2630 = vadd.f32 %v2437, %v2616
      %v2631 = vld [vmem:[#allocation2 + $0x18] sm:$0xff]
      %v2632 = vld [vmem:[#allocation2 + $0x20] sm:$0xff]
      %v2633 = vld [vmem:[#allocation2 + $0x28] sm:$0xff]
      %v2634 = vld [vmem:[#allocation2 + $0x30] sm:$0xff]
      %v2635 = vld [vmem:[#allocation2 + $0x38] sm:$0xff]
      %v2636 = vld [vmem:[#allocation2 + $0x40] sm:$0xff]
      %v2637 = vld [vmem:[#allocation2 + $0x48] sm:$0xff]
      %v2638 = vld [vmem:[#allocation2 + $0x50] sm:$0xff]
      %v2639 = vld [vmem:[#allocation2 + $0x58] sm:$0xff]
      %v2640 = vld [vmem:[#allocation2 + $0x60] sm:$0xff]
      %v2641 = vld [vmem:[#allocation2 + $0x68] sm:$0xff]
      %v2642 = vld [vmem:[#allocation2 + $0x70] sm:$0xff]
      %v2643 = vld [vmem:[%s3 + $0x280] sm:$0xff]
      %v2644 = vld [vmem:[%s3 + $0x288] sm:$0xff]
      %v2645 = vld [vmem:[%s3 + $0x290] sm:$0xff]
      %v2646 = vld [vmem:[%s3 + $0x298] sm:$0xff]
      %v2647 = vld [vmem:[%s3 + $0x2a0] sm:$0xff]
      %v2648 = vld [vmem:[%s3 + $0x2a8] sm:$0xff]
      %v2649 = vld [vmem:[%s3 + $0x2b0] sm:$0xff]
      %v2650 = vld [vmem:[%s3 + $0x2b8] sm:$0xff]
      %v2652 = vsel %vm697, %v2631, 0
      %v2655 = vsel %vm697, %v2632, 0
      %v2658 = vsel %vm697, %v2633, 0
      %v2661 = vsel %vm697, %v2634, 0
      %v2664 = vsel %vm697, %v2635, 0
      %v2667 = vsel %vm697, %v2636, 0
      %v2670 = vsel %vm697, %v2637, 0
      %v2673 = vsel %vm697, %v2638, 0
      %v2676 = vsel %vm697, %v2639, 0
      %v2679 = vsel %vm697, %v2640, 0
      %v2682 = vsel %vm697, %v2641, 0
      %v2685 = vsel %vm697, %v2642, 0
      %2687 = vmatprep.subr.mxu0 0.0
      %2688 = vmatpush1.msra.mxu0 %v2643
      %2689 = vmatprep.subr.mxu0 0.0
      %2690 = vmatpush1.msra.mxu0 %v2644
      %2691 = vmatprep.subr.mxu0 0.0
      %2692 = vmatpush1.msra.mxu0 %v2645
      %2693 = vmatprep.subr.mxu0 0.0
      %2694 = vmatpush1.msra.mxu0 %v2646
      %2695 = vmatprep.subr.mxu0 0.0
      %2696 = vmatpush1.msra.mxu0 %v2647
      %2697 = vmatprep.subr.mxu0 0.0
      %2698 = vmatpush1.msra.mxu0 %v2648
      %2699 = vmatprep.subr.mxu0 0.0
      %2700 = vmatpush1.msra.mxu0 %v2649
      %2701 = vmatprep.subr.mxu0 0.0
      %2702 = vmatpush1.msra.mxu0 %v2650
      %2703 = vmatprep.subr.mxu0 0.0
      %2704 = vmatpush1.msra.mxu0 0.0
      %2705 = vmatprep.subr.mxu0 0.0
      %2706 = vmatpush1.msra.mxu0 0.0
      %2707 = vmatprep.subr.mxu0 0.0
      %2708 = vmatpush1.msra.mxu0 0.0
      %2709 = vmatprep.subr.mxu0 0.0
      %2710 = vmatpush1.msra.mxu0 0.0
      %2711 = vmatprep.subr.mxu0 0.0
      %2712 = vmatpush1.msra.mxu0 0.0
      %2713 = vmatprep.subr.mxu0 0.0
      %2714 = vmatpush1.msra.mxu0 0.0
      %2715 = vmatprep.subr.mxu0 0.0
      %2716 = vmatpush1.msra.mxu0 0.0
      %2717 = vmatprep.subr.mxu0 0.0
      %2718 = vmatpush1.msra.mxu0 0.0
      %2719 = vmatprep.subr.mxu0 0.0
      %2720 = vmatpush1.msra.mxu0 0.0
      %2721 = vmatprep.subr.mxu0 0.0
      %2722 = vmatpush1.msra.mxu0 0.0
      %2723 = vmatprep.subr.mxu0 0.0
      %2724 = vmatpush1.msra.mxu0 0.0
      %2725 = vmatprep.subr.mxu0 0.0
      %2726 = vmatpush1.msra.mxu0 0.0
      %2727 = vmatprep.subr.mxu0 0.0
      %2728 = vmatpush1.msra.mxu0 0.0
      %2729 = vmatprep.subr.mxu0 0.0
      %2730 = vmatpush1.msra.mxu0 0.0
      %2731 = vmatprep.subr.mxu0 0.0
      %2732 = vmatpush1.msra.mxu0 0.0
      %2733 = vmatprep.subr.mxu0 0.0
      %2734 = vmatpush1.msra.mxu0 0.0
      %2735 = vmatprep.subr.mxu0 0.0
      %2736 = vmatpush1.msra.mxu0 0.0
      %2737 = vmatprep.subr.mxu0 0.0
      %2738 = vmatpush1.msra.mxu0 0.0
      %2739 = vmatprep.subr.mxu0 0.0
      %2740 = vmatpush1.msra.mxu0 0.0
      %2741 = vmatprep.subr.mxu0 0.0
      %2742 = vmatpush1.msra.mxu0 0.0
      %2743 = vmatprep.subr.mxu0 0.0
      %2744 = vmatpush1.msra.mxu0 0.0
      %2745 = vmatprep.subr.mxu0 0.0
      %2746 = vmatpush1.msra.mxu0 0.0
      %2747 = vmatprep.subr.mxu0 0.0
      %2748 = vmatpush1.msra.mxu0 0.0
      %2749 = vmatprep.subr.mxu0 0.0
      %2750 = vmatpush1.msra.mxu0 0.0
      %2751 = vmatprep.mubr.f32.mxu0 0.0
      %2752 = vmatmul.mubr.f32.gmra.mrb[0].mxu0 %v2652
      %v2753 = vpop.f32.mrb[0].mxu0
      %v2754 = vadd.f32 0.0, %v2753
      %v2755 = vpop.f32.mrb[0].mxu0
      %2756 = vmatprep.mubr.f32.mxu0 0.0
      %2757 = vmatmul.mubr.f32.gmra.mrb[0].mxu0 %v2655
      %v2758 = vpop.f32.mrb[0].mxu0
      %v2759 = vadd.f32 0.0, %v2758
      %v2760 = vpop.f32.mrb[0].mxu0
      %2761 = vmatprep.mubr.f32.mxu0 0.0
      %2762 = vmatmul.mubr.f32.gmra.mrb[0].mxu0 %v2658
      %v2763 = vpop.f32.mrb[0].mxu0
      %v2764 = vadd.f32 0.0, %v2763
      %v2765 = vpop.f32.mrb[0].mxu0
      %2766 = vmatprep.mubr.f32.mxu0 0.0
      %2767 = vmatmul.mubr.f32.gmra.mrb[0].mxu0 %v2661
      %v2768 = vpop.f32.mrb[0].mxu0
      %v2769 = vadd.f32 0.0, %v2768
      %v2770 = vpop.f32.mrb[0].mxu0
      %2771 = vmatprep.mubr.f32.mxu0 0.0
      %2772 = vmatmul.mubr.f32.gmra.mrb[0].mxu0 %v2664
      %v2773 = vpop.f32.mrb[0].mxu0
      %v2774 = vadd.f32 0.0, %v2773
      %v2775 = vpop.f32.mrb[0].mxu0
      %2776 = vmatprep.mubr.f32.mxu0 0.0
      %2777 = vmatmul.mubr.f32.gmra.mrb[0].mxu0 %v2667
      %v2778 = vpop.f32.mrb[0].mxu0
      %v2779 = vadd.f32 0.0, %v2778
      %v2780 = vpop.f32.mrb[0].mxu0
      %2781 = vmatprep.mubr.f32.mxu0 0.0
      %2782 = vmatmul.mubr.f32.gmra.mrb[0].mxu0 %v2670
      %v2783 = vpop.f32.mrb[0].mxu0
      %v2784 = vadd.f32 0.0, %v2783
      %v2785 = vpop.f32.mrb[0].mxu0
      %2786 = vmatprep.mubr.f32.mxu0 0.0
      %2787 = vmatmul.mubr.f32.gmra.mrb[0].mxu0 %v2673
      %v2788 = vpop.f32.mrb[0].mxu0
      %v2789 = vadd.f32 0.0, %v2788
      %v2790 = vpop.f32.mrb[0].mxu0
      %2791 = vmatprep.mubr.f32.mxu0 0.0
      %2792 = vmatmul.mubr.f32.gmra.mrb[0].mxu0 %v2676
      %v2793 = vpop.f32.mrb[0].mxu0
      %v2794 = vadd.f32 0.0, %v2793
      %v2795 = vpop.f32.mrb[0].mxu0
      %2796 = vmatprep.mubr.f32.mxu0 0.0
      %2797 = vmatmul.mubr.f32.gmra.mrb[0].mxu0 %v2679
      %v2798 = vpop.f32.mrb[0].mxu0
      %v2799 = vadd.f32 0.0, %v2798
      %v2800 = vpop.f32.mrb[0].mxu0
      %2801 = vmatprep.mubr.f32.mxu0 0.0
      %2802 = vmatmul.mubr.f32.gmra.mrb[0].mxu0 %v2682
      %v2803 = vpop.f32.mrb[0].mxu0
      %v2804 = vadd.f32 0.0, %v2803
      %v2805 = vpop.f32.mrb[0].mxu0
      %2806 = vmatprep.mubr.f32.mxu0 0.0
      %2807 = vmatmul.mubr.f32.gmra.mrb[0].mxu0 %v2685
      %v2808 = vpop.f32.mrb[0].mxu0
      %v2809 = vadd.f32 0.0, %v2808
      %v2810 = vpop.f32.mrb[0].mxu0
      %2811 = vdwg.mxu0
      %v2812 = vadd.f32 %v2619, %v2754
      %v2813 = vadd.f32 %v2620, %v2759
      %v2814 = vadd.f32 %v2621, %v2764
      %v2815 = vadd.f32 %v2622, %v2769
      %v2816 = vadd.f32 %v2623, %v2774
      %v2817 = vadd.f32 %v2624, %v2779
      %v2818 = vadd.f32 %v2625, %v2784
      %v2819 = vadd.f32 %v2626, %v2789
      %v2820 = vadd.f32 %v2627, %v2794
      %v2821 = vadd.f32 %v2628, %v2799
      %v2822 = vadd.f32 %v2629, %v2804
      %v2823 = vadd.f32 %v2630, %v2809
      %v2824 = vld [vmem:[#allocation2 + $0x19] sm:$0xff]
      %v2825 = vld [vmem:[#allocation2 + $0x21] sm:$0xff]
      %v2826 = vld [vmem:[#allocation2 + $0x29] sm:$0xff]
      %v2827 = vld [vmem:[#allocation2 + $0x31] sm:$0xff]
      %v2828 = vld [vmem:[#allocation2 + $0x39] sm:$0xff]
      %v2829 = vld [vmem:[#allocation2 + $0x41] sm:$0xff]
      %v2830 = vld [vmem:[#allocation2 + $0x49] sm:$0xff]
      %v2831 = vld [vmem:[#allocation2 + $0x51] sm:$0xff]
      %v2832 = vld [vmem:[#allocation2 + $0x59] sm:$0xff]
      %v2833 = vld [vmem:[#allocation2 + $0x61] sm:$0xff]
      %v2834 = vld [vmem:[#allocation2 + $0x69] sm:$0xff]
      %v2835 = vld [vmem:[#allocation2 + $0x71] sm:$0xff]
      %v2836 = vld [vmem:[%s3 + $0x2c0] sm:$0xff]
      %v2837 = vld [vmem:[%s3 + $0x2c8] sm:$0xff]
      %v2838 = vld [vmem:[%s3 + $0x2d0] sm:$0xff]
      %v2839 = vld [vmem:[%s3 + $0x2d8] sm:$0xff]
      %v2840 = vld [vmem:[%s3 + $0x2e0] sm:$0xff]
      %v2841 = vld [vmem:[%s3 + $0x2e8] sm:$0xff]
      %v2842 = vld [vmem:[%s3 + $0x2f0] sm:$0xff]
      %v2843 = vld [vmem:[%s3 + $0x2f8] sm:$0xff]
      %v2845 = vsel %vm697, %v2824, 0
      %v2848 = vsel %vm697, %v2825, 0
      %v2851 = vsel %vm697, %v2826, 0
      %v2854 = vsel %vm697, %v2827, 0
      %v2857 = vsel %vm697, %v2828, 0
      %v2860 = vsel %vm697, %v2829, 0
      %v2863 = vsel %vm697, %v2830, 0
      %v2866 = vsel %vm697, %v2831, 0
      %v2869 = vsel %vm697, %v2832, 0
      %v2872 = vsel %vm697, %v2833, 0
      %v2875 = vsel %vm697, %v2834, 0
      %v2878 = vsel %vm697, %v2835, 0
      %2880 = vmatprep.subr.mxu0 0.0
      %2881 = vmatpush1.msra.mxu0 %v2836
      %2882 = vmatprep.subr.mxu0 0.0
      %2883 = vmatpush1.msra.mxu0 %v2837
      %2884 = vmatprep.subr.mxu0 0.0
      %2885 = vmatpush1.msra.mxu0 %v2838
      %2886 = vmatprep.subr.mxu0 0.0
      %2887 = vmatpush1.msra.mxu0 %v2839
      %2888 = vmatprep.subr.mxu0 0.0
      %2889 = vmatpush1.msra.mxu0 %v2840
      %2890 = vmatprep.subr.mxu0 0.0
      %2891 = vmatpush1.msra.mxu0 %v2841
      %2892 = vmatprep.subr.mxu0 0.0
      %2893 = vmatpush1.msra.mxu0 %v2842
      %2894 = vmatprep.subr.mxu0 0.0
      %2895 = vmatpush1.msra.mxu0 %v2843
      %2896 = vmatprep.subr.mxu0 0.0
      %2897 = vmatpush1.msra.mxu0 0.0
      %2898 = vmatprep.subr.mxu0 0.0
      %2899 = vmatpush1.msra.mxu0 0.0
      %2900 = vmatprep.subr.mxu0 0.0
      %2901 = vmatpush1.msra.mxu0 0.0
      %2902 = vmatprep.subr.mxu0 0.0
      %2903 = vmatpush1.msra.mxu0 0.0
      %2904 = vmatprep.subr.mxu0 0.0
      %2905 = vmatpush1.msra.mxu0 0.0
      %2906 = vmatprep.subr.mxu0 0.0
      %2907 = vmatpush1.msra.mxu0 0.0
      %2908 = vmatprep.subr.mxu0 0.0
      %2909 = vmatpush1.msra.mxu0 0.0
      %2910 = vmatprep.subr.mxu0 0.0
      %2911 = vmatpush1.msra.mxu0 0.0
      %2912 = vmatprep.subr.mxu0 0.0
      %2913 = vmatpush1.msra.mxu0 0.0
      %2914 = vmatprep.subr.mxu0 0.0
      %2915 = vmatpush1.msra.mxu0 0.0
      %2916 = vmatprep.subr.mxu0 0.0
      %2917 = vmatpush1.msra.mxu0 0.0
      %2918 = vmatprep.subr.mxu0 0.0
      %2919 = vmatpush1.msra.mxu0 0.0
      %2920 = vmatprep.subr.mxu0 0.0
      %2921 = vmatpush1.msra.mxu0 0.0
      %2922 = vmatprep.subr.mxu0 0.0
      %2923 = vmatpush1.msra.mxu0 0.0
      %2924 = vmatprep.subr.mxu0 0.0
      %2925 = vmatpush1.msra.mxu0 0.0
      %2926 = vmatprep.subr.mxu0 0.0
      %2927 = vmatpush1.msra.mxu0 0.0
      %2928 = vmatprep.subr.mxu0 0.0
      %2929 = vmatpush1.msra.mxu0 0.0
      %2930 = vmatprep.subr.mxu0 0.0
      %2931 = vmatpush1.msra.mxu0 0.0
      %2932 = vmatprep.subr.mxu0 0.0
      %2933 = vmatpush1.msra.mxu0 0.0
      %2934 = vmatprep.subr.mxu0 0.0
      %2935 = vmatpush1.msra.mxu0 0.0
      %2936 = vmatprep.subr.mxu0 0.0
      %2937 = vmatpush1.msra.mxu0 0.0
      %2938 = vmatprep.subr.mxu0 0.0
      %2939 = vmatpush1.msra.mxu0 0.0
      %2940 = vmatprep.subr.mxu0 0.0
      %2941 = vmatpush1.msra.mxu0 0.0
      %2942 = vmatprep.subr.mxu0 0.0
      %2943 = vmatpush1.msra.mxu0 0.0
      %2944 = vmatprep.mubr.f32.mxu0 0.0
      %2945 = vmatmul.mubr.f32.gmra.mrb[0].mxu0 %v2845
      %v2946 = vpop.f32.mrb[0].mxu0
      %v2947 = vadd.f32 0.0, %v2946
      %v2948 = vpop.f32.mrb[0].mxu0
      %2949 = vmatprep.mubr.f32.mxu0 0.0
      %2950 = vmatmul.mubr.f32.gmra.mrb[0].mxu0 %v2848
      %v2951 = vpop.f32.mrb[0].mxu0
      %v2952 = vadd.f32 0.0, %v2951
      %v2953 = vpop.f32.mrb[0].mxu0
      %2954 = vmatprep.mubr.f32.mxu0 0.0
      %2955 = vmatmul.mubr.f32.gmra.mrb[0].mxu0 %v2851
      %v2956 = vpop.f32.mrb[0].mxu0
      %v2957 = vadd.f32 0.0, %v2956
      %v2958 = vpop.f32.mrb[0].mxu0
      %2959 = vmatprep.mubr.f32.mxu0 0.0
      %2960 = vmatmul.mubr.f32.gmra.mrb[0].mxu0 %v2854
      %v2961 = vpop.f32.mrb[0].mxu0
      %v2962 = vadd.f32 0.0, %v2961
      %v2963 = vpop.f32.mrb[0].mxu0
      %2964 = vmatprep.mubr.f32.mxu0 0.0
      %2965 = vmatmul.mubr.f32.gmra.mrb[0].mxu0 %v2857
      %v2966 = vpop.f32.mrb[0].mxu0
      %v2967 = vadd.f32 0.0, %v2966
      %v2968 = vpop.f32.mrb[0].mxu0
      %2969 = vmatprep.mubr.f32.mxu0 0.0
      %2970 = vmatmul.mubr.f32.gmra.mrb[0].mxu0 %v2860
      %v2971 = vpop.f32.mrb[0].mxu0
      %v2972 = vadd.f32 0.0, %v2971
      %v2973 = vpop.f32.mrb[0].mxu0
      %2974 = vmatprep.mubr.f32.mxu0 0.0
      %2975 = vmatmul.mubr.f32.gmra.mrb[0].mxu0 %v2863
      %v2976 = vpop.f32.mrb[0].mxu0
      %v2977 = vadd.f32 0.0, %v2976
      %v2978 = vpop.f32.mrb[0].mxu0
      %2979 = vmatprep.mubr.f32.mxu0 0.0
      %2980 = vmatmul.mubr.f32.gmra.mrb[0].mxu0 %v2866
      %v2981 = vpop.f32.mrb[0].mxu0
      %v2982 = vadd.f32 0.0, %v2981
      %v2983 = vpop.f32.mrb[0].mxu0
      %2984 = vmatprep.mubr.f32.mxu0 0.0
      %2985 = vmatmul.mubr.f32.gmra.mrb[0].mxu0 %v2869
      %v2986 = vpop.f32.mrb[0].mxu0
      %v2987 = vadd.f32 0.0, %v2986
      %v2988 = vpop.f32.mrb[0].mxu0
      %2989 = vmatprep.mubr.f32.mxu0 0.0
      %2990 = vmatmul.mubr.f32.gmra.mrb[0].mxu0 %v2872
      %v2991 = vpop.f32.mrb[0].mxu0
      %v2992 = vadd.f32 0.0, %v2991
      %v2993 = vpop.f32.mrb[0].mxu0
      %2994 = vmatprep.mubr.f32.mxu0 0.0
      %2995 = vmatmul.mubr.f32.gmra.mrb[0].mxu0 %v2875
      %v2996 = vpop.f32.mrb[0].mxu0
      %v2997 = vadd.f32 0.0, %v2996
      %v2998 = vpop.f32.mrb[0].mxu0
      %2999 = vmatprep.mubr.f32.mxu0 0.0
      %3000 = vmatmul.mubr.f32.gmra.mrb[0].mxu0 %v2878
      %v3001 = vpop.f32.mrb[0].mxu0
      %v3002 = vadd.f32 0.0, %v3001
      %v3003 = vpop.f32.mrb[0].mxu0
      %3004 = vdwg.mxu0
      %v3005 = vadd.f32 %v2812, %v2947
      %v3006 = vadd.f32 %v2813, %v2952
      %v3007 = vadd.f32 %v2814, %v2957
      %v3008 = vadd.f32 %v2815, %v2962
      %v3009 = vadd.f32 %v2816, %v2967
      %v3010 = vadd.f32 %v2817, %v2972
      %v3011 = vadd.f32 %v2818, %v2977
      %v3012 = vadd.f32 %v2819, %v2982
      %v3013 = vadd.f32 %v2820, %v2987
      %v3014 = vadd.f32 %v2821, %v2992
      %v3015 = vadd.f32 %v2822, %v2997
      %v3016 = vadd.f32 %v2823, %v3002
      %v3017 = vld [vmem:[#allocation2 + $0x1a] sm:$0xff]
      %v3018 = vld [vmem:[#allocation2 + $0x22] sm:$0xff]
      %v3019 = vld [vmem:[#allocation2 + $0x2a] sm:$0xff]
      %v3020 = vld [vmem:[#allocation2 + $0x32] sm:$0xff]
      %v3021 = vld [vmem:[#allocation2 + $0x3a] sm:$0xff]
      %v3022 = vld [vmem:[#allocation2 + $0x42] sm:$0xff]
      %v3023 = vld [vmem:[#allocation2 + $0x4a] sm:$0xff]
      %v3024 = vld [vmem:[#allocation2 + $0x52] sm:$0xff]
      %v3025 = vld [vmem:[#allocation2 + $0x5a] sm:$0xff]
      %v3026 = vld [vmem:[#allocation2 + $0x62] sm:$0xff]
      %v3027 = vld [vmem:[#allocation2 + $0x6a] sm:$0xff]
      %v3028 = vld [vmem:[#allocation2 + $0x72] sm:$0xff]
      %v3029 = vld [vmem:[%s3 + $0x300] sm:$0xff]
      %v3030 = vld [vmem:[%s3 + $0x308] sm:$0xff]
      %v3031 = vld [vmem:[%s3 + $0x310] sm:$0xff]
      %v3032 = vld [vmem:[%s3 + $0x318] sm:$0xff]
      %v3033 = vld [vmem:[%s3 + $0x320] sm:$0xff]
      %v3034 = vld [vmem:[%s3 + $0x328] sm:$0xff]
      %v3035 = vld [vmem:[%s3 + $0x330] sm:$0xff]
      %v3036 = vld [vmem:[%s3 + $0x338] sm:$0xff]
      %v3038 = vsel %vm697, %v3017, 0
      %v3041 = vsel %vm697, %v3018, 0
      %v3044 = vsel %vm697, %v3019, 0
      %v3047 = vsel %vm697, %v3020, 0
      %v3050 = vsel %vm697, %v3021, 0
      %v3053 = vsel %vm697, %v3022, 0
      %v3056 = vsel %vm697, %v3023, 0
      %v3059 = vsel %vm697, %v3024, 0
      %v3062 = vsel %vm697, %v3025, 0
      %v3065 = vsel %vm697, %v3026, 0
      %v3068 = vsel %vm697, %v3027, 0
      %v3071 = vsel %vm697, %v3028, 0
      %3073 = vmatprep.subr.mxu0 0.0
      %3074 = vmatpush1.msra.mxu0 %v3029
      %3075 = vmatprep.subr.mxu0 0.0
      %3076 = vmatpush1.msra.mxu0 %v3030
      %3077 = vmatprep.subr.mxu0 0.0
      %3078 = vmatpush1.msra.mxu0 %v3031
      %3079 = vmatprep.subr.mxu0 0.0
      %3080 = vmatpush1.msra.mxu0 %v3032
      %3081 = vmatprep.subr.mxu0 0.0
      %3082 = vmatpush1.msra.mxu0 %v3033
      %3083 = vmatprep.subr.mxu0 0.0
      %3084 = vmatpush1.msra.mxu0 %v3034
      %3085 = vmatprep.subr.mxu0 0.0
      %3086 = vmatpush1.msra.mxu0 %v3035
      %3087 = vmatprep.subr.mxu0 0.0
      %3088 = vmatpush1.msra.mxu0 %v3036
      %3089 = vmatprep.subr.mxu0 0.0
      %3090 = vmatpush1.msra.mxu0 0.0
      %3091 = vmatprep.subr.mxu0 0.0
      %3092 = vmatpush1.msra.mxu0 0.0
      %3093 = vmatprep.subr.mxu0 0.0
      %3094 = vmatpush1.msra.mxu0 0.0
      %3095 = vmatprep.subr.mxu0 0.0
      %3096 = vmatpush1.msra.mxu0 0.0
      %3097 = vmatprep.subr.mxu0 0.0
      %3098 = vmatpush1.msra.mxu0 0.0
      %3099 = vmatprep.subr.mxu0 0.0
      %3100 = vmatpush1.msra.mxu0 0.0
      %3101 = vmatprep.subr.mxu0 0.0
      %3102 = vmatpush1.msra.mxu0 0.0
      %3103 = vmatprep.subr.mxu0 0.0
      %3104 = vmatpush1.msra.mxu0 0.0
      %3105 = vmatprep.subr.mxu0 0.0
      %3106 = vmatpush1.msra.mxu0 0.0
      %3107 = vmatprep.subr.mxu0 0.0
      %3108 = vmatpush1.msra.mxu0 0.0
      %3109 = vmatprep.subr.mxu0 0.0
      %3110 = vmatpush1.msra.mxu0 0.0
      %3111 = vmatprep.subr.mxu0 0.0
      %3112 = vmatpush1.msra.mxu0 0.0
      %3113 = vmatprep.subr.mxu0 0.0
      %3114 = vmatpush1.msra.mxu0 0.0
      %3115 = vmatprep.subr.mxu0 0.0
      %3116 = vmatpush1.msra.mxu0 0.0
      %3117 = vmatprep.subr.mxu0 0.0
      %3118 = vmatpush1.msra.mxu0 0.0
      %3119 = vmatprep.subr.mxu0 0.0
      %3120 = vmatpush1.msra.mxu0 0.0
      %3121 = vmatprep.subr.mxu0 0.0
      %3122 = vmatpush1.msra.mxu0 0.0
      %3123 = vmatprep.subr.mxu0 0.0
      %3124 = vmatpush1.msra.mxu0 0.0
      %3125 = vmatprep.subr.mxu0 0.0
      %3126 = vmatpush1.msra.mxu0 0.0
      %3127 = vmatprep.subr.mxu0 0.0
      %3128 = vmatpush1.msra.mxu0 0.0
      %3129 = vmatprep.subr.mxu0 0.0
      %3130 = vmatpush1.msra.mxu0 0.0
      %3131 = vmatprep.subr.mxu0 0.0
      %3132 = vmatpush1.msra.mxu0 0.0
      %3133 = vmatprep.subr.mxu0 0.0
      %3134 = vmatpush1.msra.mxu0 0.0
      %3135 = vmatprep.subr.mxu0 0.0
      %3136 = vmatpush1.msra.mxu0 0.0
      %3137 = vmatprep.mubr.f32.mxu0 0.0
      %3138 = vmatmul.mubr.f32.gmra.mrb[0].mxu0 %v3038
      %v3139 = vpop.f32.mrb[0].mxu0
      %v3140 = vadd.f32 0.0, %v3139
      %v3141 = vpop.f32.mrb[0].mxu0
      %3142 = vmatprep.mubr.f32.mxu0 0.0
      %3143 = vmatmul.mubr.f32.gmra.mrb[0].mxu0 %v3041
      %v3144 = vpop.f32.mrb[0].mxu0
      %v3145 = vadd.f32 0.0, %v3144
      %v3146 = vpop.f32.mrb[0].mxu0
      %3147 = vmatprep.mubr.f32.mxu0 0.0
      %3148 = vmatmul.mubr.f32.gmra.mrb[0].mxu0 %v3044
      %v3149 = vpop.f32.mrb[0].mxu0
      %v3150 = vadd.f32 0.0, %v3149
      %v3151 = vpop.f32.mrb[0].mxu0
      %3152 = vmatprep.mubr.f32.mxu0 0.0
      %3153 = vmatmul.mubr.f32.gmra.mrb[0].mxu0 %v3047
      %v3154 = vpop.f32.mrb[0].mxu0
      %v3155 = vadd.f32 0.0, %v3154
      %v3156 = vpop.f32.mrb[0].mxu0
      %3157 = vmatprep.mubr.f32.mxu0 0.0
      %3158 = vmatmul.mubr.f32.gmra.mrb[0].mxu0 %v3050
      %v3159 = vpop.f32.mrb[0].mxu0
      %v3160 = vadd.f32 0.0, %v3159
      %v3161 = vpop.f32.mrb[0].mxu0
      %3162 = vmatprep.mubr.f32.mxu0 0.0
      %3163 = vmatmul.mubr.f32.gmra.mrb[0].mxu0 %v3053
      %v3164 = vpop.f32.mrb[0].mxu0
      %v3165 = vadd.f32 0.0, %v3164
      %v3166 = vpop.f32.mrb[0].mxu0
      %3167 = vmatprep.mubr.f32.mxu0 0.0
      %3168 = vmatmul.mubr.f32.gmra.mrb[0].mxu0 %v3056
      %v3169 = vpop.f32.mrb[0].mxu0
      %v3170 = vadd.f32 0.0, %v3169
      %v3171 = vpop.f32.mrb[0].mxu0
      %3172 = vmatprep.mubr.f32.mxu0 0.0
      %3173 = vmatmul.mubr.f32.gmra.mrb[0].mxu0 %v3059
      %v3174 = vpop.f32.mrb[0].mxu0
      %v3175 = vadd.f32 0.0, %v3174
      %v3176 = vpop.f32.mrb[0].mxu0
      %3177 = vmatprep.mubr.f32.mxu0 0.0
      %3178 = vmatmul.mubr.f32.gmra.mrb[0].mxu0 %v3062
      %v3179 = vpop.f32.mrb[0].mxu0
      %v3180 = vadd.f32 0.0, %v3179
      %v3181 = vpop.f32.mrb[0].mxu0
      %3182 = vmatprep.mubr.f32.mxu0 0.0
      %3183 = vmatmul.mubr.f32.gmra.mrb[0].mxu0 %v3065
      %v3184 = vpop.f32.mrb[0].mxu0
      %v3185 = vadd.f32 0.0, %v3184
      %v3186 = vpop.f32.mrb[0].mxu0
      %3187 = vmatprep.mubr.f32.mxu0 0.0
      %3188 = vmatmul.mubr.f32.gmra.mrb[0].mxu0 %v3068
      %v3189 = vpop.f32.mrb[0].mxu0
      %v3190 = vadd.f32 0.0, %v3189
      %v3191 = vpop.f32.mrb[0].mxu0
      %3192 = vmatprep.mubr.f32.mxu0 0.0
      %3193 = vmatmul.mubr.f32.gmra.mrb[0].mxu0 %v3071
      %v3194 = vpop.f32.mrb[0].mxu0
      %v3195 = vadd.f32 0.0, %v3194
      %v3196 = vpop.f32.mrb[0].mxu0
      %3197 = vdwg.mxu0
      %v3198 = vadd.f32 %v3005, %v3140
      %v3199 = vadd.f32 %v3006, %v3145
      %v3200 = vadd.f32 %v3007, %v3150
      %v3201 = vadd.f32 %v3008, %v3155
      %v3202 = vadd.f32 %v3009, %v3160
      %v3203 = vadd.f32 %v3010, %v3165
      %v3204 = vadd.f32 %v3011, %v3170
      %v3205 = vadd.f32 %v3012, %v3175
      %v3206 = vadd.f32 %v3013, %v3180
      %v3207 = vadd.f32 %v3014, %v3185
      %v3208 = vadd.f32 %v3015, %v3190
      %v3209 = vadd.f32 %v3016, %v3195
      %v3210 = vld [vmem:[#allocation2 + $0x1b] sm:$0xff]
      %v3211 = vld [vmem:[#allocation2 + $0x23] sm:$0xff]
      %v3212 = vld [vmem:[#allocation2 + $0x2b] sm:$0xff]
      %v3213 = vld [vmem:[#allocation2 + $0x33] sm:$0xff]
      %v3214 = vld [vmem:[#allocation2 + $0x3b] sm:$0xff]
      %v3215 = vld [vmem:[#allocation2 + $0x43] sm:$0xff]
      %v3216 = vld [vmem:[#allocation2 + $0x4b] sm:$0xff]
      %v3217 = vld [vmem:[#allocation2 + $0x53] sm:$0xff]
      %v3218 = vld [vmem:[#allocation2 + $0x5b] sm:$0xff]
      %v3219 = vld [vmem:[#allocation2 + $0x63] sm:$0xff]
      %v3220 = vld [vmem:[#allocation2 + $0x6b] sm:$0xff]
      %v3221 = vld [vmem:[#allocation2 + $0x73] sm:$0xff]
      %v3222 = vld [vmem:[%s3 + $0x340] sm:$0xff]
      %v3223 = vld [vmem:[%s3 + $0x348] sm:$0xff]
      %v3224 = vld [vmem:[%s3 + $0x350] sm:$0xff]
      %v3225 = vld [vmem:[%s3 + $0x358] sm:$0xff]
      %v3226 = vld [vmem:[%s3 + $0x360] sm:$0xff]
      %v3227 = vld [vmem:[%s3 + $0x368] sm:$0xff]
      %v3228 = vld [vmem:[%s3 + $0x370] sm:$0xff]
      %v3229 = vld [vmem:[%s3 + $0x378] sm:$0xff]
      %v3231 = vsel %vm697, %v3210, 0
      %v3234 = vsel %vm697, %v3211, 0
      %v3237 = vsel %vm697, %v3212, 0
      %v3240 = vsel %vm697, %v3213, 0
      %v3243 = vsel %vm697, %v3214, 0
      %v3246 = vsel %vm697, %v3215, 0
      %v3249 = vsel %vm697, %v3216, 0
      %v3252 = vsel %vm697, %v3217, 0
      %v3255 = vsel %vm697, %v3218, 0
      %v3258 = vsel %vm697, %v3219, 0
      %v3261 = vsel %vm697, %v3220, 0
      %v3264 = vsel %vm697, %v3221, 0
      %3266 = vmatprep.subr.mxu0 0.0
      %3267 = vmatpush1.msra.mxu0 %v3222
      %3268 = vmatprep.subr.mxu0 0.0
      %3269 = vmatpush1.msra.mxu0 %v3223
      %3270 = vmatprep.subr.mxu0 0.0
      %3271 = vmatpush1.msra.mxu0 %v3224
      %3272 = vmatprep.subr.mxu0 0.0
      %3273 = vmatpush1.msra.mxu0 %v3225
      %3274 = vmatprep.subr.mxu0 0.0
      %3275 = vmatpush1.msra.mxu0 %v3226
      %3276 = vmatprep.subr.mxu0 0.0
      %3277 = vmatpush1.msra.mxu0 %v3227
      %3278 = vmatprep.subr.mxu0 0.0
      %3279 = vmatpush1.msra.mxu0 %v3228
      %3280 = vmatprep.subr.mxu0 0.0
      %3281 = vmatpush1.msra.mxu0 %v3229
      %3282 = vmatprep.subr.mxu0 0.0
      %3283 = vmatpush1.msra.mxu0 0.0
      %3284 = vmatprep.subr.mxu0 0.0
      %3285 = vmatpush1.msra.mxu0 0.0
      %3286 = vmatprep.subr.mxu0 0.0
      %3287 = vmatpush1.msra.mxu0 0.0
      %3288 = vmatprep.subr.mxu0 0.0
      %3289 = vmatpush1.msra.mxu0 0.0
      %3290 = vmatprep.subr.mxu0 0.0
      %3291 = vmatpush1.msra.mxu0 0.0
      %3292 = vmatprep.subr.mxu0 0.0
      %3293 = vmatpush1.msra.mxu0 0.0
      %3294 = vmatprep.subr.mxu0 0.0
      %3295 = vmatpush1.msra.mxu0 0.0
      %3296 = vmatprep.subr.mxu0 0.0
      %3297 = vmatpush1.msra.mxu0 0.0
      %3298 = vmatprep.subr.mxu0 0.0
      %3299 = vmatpush1.msra.mxu0 0.0
      %3300 = vmatprep.subr.mxu0 0.0
      %3301 = vmatpush1.msra.mxu0 0.0
      %3302 = vmatprep.subr.mxu0 0.0
      %3303 = vmatpush1.msra.mxu0 0.0
      %3304 = vmatprep.subr.mxu0 0.0
      %3305 = vmatpush1.msra.mxu0 0.0
      %3306 = vmatprep.subr.mxu0 0.0
      %3307 = vmatpush1.msra.mxu0 0.0
      %3308 = vmatprep.subr.mxu0 0.0
      %3309 = vmatpush1.msra.mxu0 0.0
      %3310 = vmatprep.subr.mxu0 0.0
      %3311 = vmatpush1.msra.mxu0 0.0
      %3312 = vmatprep.subr.mxu0 0.0
      %3313 = vmatpush1.msra.mxu0 0.0
      %3314 = vmatprep.subr.mxu0 0.0
      %3315 = vmatpush1.msra.mxu0 0.0
      %3316 = vmatprep.subr.mxu0 0.0
      %3317 = vmatpush1.msra.mxu0 0.0
      %3318 = vmatprep.subr.mxu0 0.0
      %3319 = vmatpush1.msra.mxu0 0.0
      %3320 = vmatprep.subr.mxu0 0.0
      %3321 = vmatpush1.msra.mxu0 0.0
      %3322 = vmatprep.subr.mxu0 0.0
      %3323 = vmatpush1.msra.mxu0 0.0
      %3324 = vmatprep.subr.mxu0 0.0
      %3325 = vmatpush1.msra.mxu0 0.0
      %3326 = vmatprep.subr.mxu0 0.0
      %3327 = vmatpush1.msra.mxu0 0.0
      %3328 = vmatprep.subr.mxu0 0.0
      %3329 = vmatpush1.msra.mxu0 0.0
      %3330 = vmatprep.mubr.f32.mxu0 0.0
      %3331 = vmatmul.mubr.f32.gmra.mrb[0].mxu0 %v3231
      %v3332 = vpop.f32.mrb[0].mxu0
      %v3333 = vadd.f32 0.0, %v3332
      %v3334 = vpop.f32.mrb[0].mxu0
      %3335 = vmatprep.mubr.f32.mxu0 0.0
      %3336 = vmatmul.mubr.f32.gmra.mrb[0].mxu0 %v3234
      %v3337 = vpop.f32.mrb[0].mxu0
      %v3338 = vadd.f32 0.0, %v3337
      %v3339 = vpop.f32.mrb[0].mxu0
      %3340 = vmatprep.mubr.f32.mxu0 0.0
      %3341 = vmatmul.mubr.f32.gmra.mrb[0].mxu0 %v3237
      %v3342 = vpop.f32.mrb[0].mxu0
      %v3343 = vadd.f32 0.0, %v3342
      %v3344 = vpop.f32.mrb[0].mxu0
      %3345 = vmatprep.mubr.f32.mxu0 0.0
      %3346 = vmatmul.mubr.f32.gmra.mrb[0].mxu0 %v3240
      %v3347 = vpop.f32.mrb[0].mxu0
      %v3348 = vadd.f32 0.0, %v3347
      %v3349 = vpop.f32.mrb[0].mxu0
      %3350 = vmatprep.mubr.f32.mxu0 0.0
      %3351 = vmatmul.mubr.f32.gmra.mrb[0].mxu0 %v3243
      %v3352 = vpop.f32.mrb[0].mxu0
      %v3353 = vadd.f32 0.0, %v3352
      %v3354 = vpop.f32.mrb[0].mxu0
      %3355 = vmatprep.mubr.f32.mxu0 0.0
      %3356 = vmatmul.mubr.f32.gmra.mrb[0].mxu0 %v3246
      %v3357 = vpop.f32.mrb[0].mxu0
      %v3358 = vadd.f32 0.0, %v3357
      %v3359 = vpop.f32.mrb[0].mxu0
      %3360 = vmatprep.mubr.f32.mxu0 0.0
      %3361 = vmatmul.mubr.f32.gmra.mrb[0].mxu0 %v3249
      %v3362 = vpop.f32.mrb[0].mxu0
      %v3363 = vadd.f32 0.0, %v3362
      %v3364 = vpop.f32.mrb[0].mxu0
      %3365 = vmatprep.mubr.f32.mxu0 0.0
      %3366 = vmatmul.mubr.f32.gmra.mrb[0].mxu0 %v3252
      %v3367 = vpop.f32.mrb[0].mxu0
      %v3368 = vadd.f32 0.0, %v3367
      %v3369 = vpop.f32.mrb[0].mxu0
      %3370 = vmatprep.mubr.f32.mxu0 0.0
      %3371 = vmatmul.mubr.f32.gmra.mrb[0].mxu0 %v3255
      %v3372 = vpop.f32.mrb[0].mxu0
      %v3373 = vadd.f32 0.0, %v3372
      %v3374 = vpop.f32.mrb[0].mxu0
      %3375 = vmatprep.mubr.f32.mxu0 0.0
      %3376 = vmatmul.mubr.f32.gmra.mrb[0].mxu0 %v3258
      %v3377 = vpop.f32.mrb[0].mxu0
      %v3378 = vadd.f32 0.0, %v3377
      %v3379 = vpop.f32.mrb[0].mxu0
      %3380 = vmatprep.mubr.f32.mxu0 0.0
      %3381 = vmatmul.mubr.f32.gmra.mrb[0].mxu0 %v3261
      %v3382 = vpop.f32.mrb[0].mxu0
      %v3383 = vadd.f32 0.0, %v3382
      %v3384 = vpop.f32.mrb[0].mxu0
      %3385 = vmatprep.mubr.f32.mxu0 0.0
      %3386 = vmatmul.mubr.f32.gmra.mrb[0].mxu0 %v3264
      %v3387 = vpop.f32.mrb[0].mxu0
      %v3388 = vadd.f32 0.0, %v3387
      %v3389 = vpop.f32.mrb[0].mxu0
      %3390 = vdwg.mxu0
      %v3391 = vadd.f32 %v3198, %v3333
      %v3392 = vadd.f32 %v3199, %v3338
      %v3393 = vadd.f32 %v3200, %v3343
      %v3394 = vadd.f32 %v3201, %v3348
      %v3395 = vadd.f32 %v3202, %v3353
      %v3396 = vadd.f32 %v3203, %v3358
      %v3397 = vadd.f32 %v3204, %v3363
      %v3398 = vadd.f32 %v3205, %v3368
      %v3399 = vadd.f32 %v3206, %v3373
      %v3400 = vadd.f32 %v3207, %v3378
      %v3401 = vadd.f32 %v3208, %v3383
      %v3402 = vadd.f32 %v3209, %v3388
      %v3403 = vld [vmem:[#allocation2 + $0x1c] sm:$0xff]
      %v3404 = vld [vmem:[#allocation2 + $0x24] sm:$0xff]
      %v3405 = vld [vmem:[#allocation2 + $0x2c] sm:$0xff]
      %v3406 = vld [vmem:[#allocation2 + $0x34] sm:$0xff]
      %v3407 = vld [vmem:[#allocation2 + $0x3c] sm:$0xff]
      %v3408 = vld [vmem:[#allocation2 + $0x44] sm:$0xff]
      %v3409 = vld [vmem:[#allocation2 + $0x4c] sm:$0xff]
      %v3410 = vld [vmem:[#allocation2 + $0x54] sm:$0xff]
      %v3411 = vld [vmem:[#allocation2 + $0x5c] sm:$0xff]
      %v3412 = vld [vmem:[#allocation2 + $0x64] sm:$0xff]
      %v3413 = vld [vmem:[#allocation2 + $0x6c] sm:$0xff]
      %v3414 = vld [vmem:[#allocation2 + $0x74] sm:$0xff]
      %v3415 = vld [vmem:[%s3 + $0x380] sm:$0xff]
      %v3416 = vld [vmem:[%s3 + $0x388] sm:$0xff]
      %v3417 = vld [vmem:[%s3 + $0x390] sm:$0xff]
      %v3418 = vld [vmem:[%s3 + $0x398] sm:$0xff]
      %v3419 = vld [vmem:[%s3 + $0x3a0] sm:$0xff]
      %v3420 = vld [vmem:[%s3 + $0x3a8] sm:$0xff]
      %v3421 = vld [vmem:[%s3 + $0x3b0] sm:$0xff]
      %v3422 = vld [vmem:[%s3 + $0x3b8] sm:$0xff]
      %v3424 = vsel %vm697, %v3403, 0
      %v3427 = vsel %vm697, %v3404, 0
      %v3430 = vsel %vm697, %v3405, 0
      %v3433 = vsel %vm697, %v3406, 0
      %v3436 = vsel %vm697, %v3407, 0
      %v3439 = vsel %vm697, %v3408, 0
      %v3442 = vsel %vm697, %v3409, 0
      %v3445 = vsel %vm697, %v3410, 0
      %v3448 = vsel %vm697, %v3411, 0
      %v3451 = vsel %vm697, %v3412, 0
      %v3454 = vsel %vm697, %v3413, 0
      %v3457 = vsel %vm697, %v3414, 0
      %3459 = vmatprep.subr.mxu0 0.0
      %3460 = vmatpush1.msra.mxu0 %v3415
      %3461 = vmatprep.subr.mxu0 0.0
      %3462 = vmatpush1.msra.mxu0 %v3416
      %3463 = vmatprep.subr.mxu0 0.0
      %3464 = vmatpush1.msra.mxu0 %v3417
      %3465 = vmatprep.subr.mxu0 0.0
      %3466 = vmatpush1.msra.mxu0 %v3418
      %3467 = vmatprep.subr.mxu0 0.0
      %3468 = vmatpush1.msra.mxu0 %v3419
      %3469 = vmatprep.subr.mxu0 0.0
      %3470 = vmatpush1.msra.mxu0 %v3420
      %3471 = vmatprep.subr.mxu0 0.0
      %3472 = vmatpush1.msra.mxu0 %v3421
      %3473 = vmatprep.subr.mxu0 0.0
      %3474 = vmatpush1.msra.mxu0 %v3422
      %3475 = vmatprep.subr.mxu0 0.0
      %3476 = vmatpush1.msra.mxu0 0.0
      %3477 = vmatprep.subr.mxu0 0.0
      %3478 = vmatpush1.msra.mxu0 0.0
      %3479 = vmatprep.subr.mxu0 0.0
      %3480 = vmatpush1.msra.mxu0 0.0
      %3481 = vmatprep.subr.mxu0 0.0
      %3482 = vmatpush1.msra.mxu0 0.0
      %3483 = vmatprep.subr.mxu0 0.0
      %3484 = vmatpush1.msra.mxu0 0.0
      %3485 = vmatprep.subr.mxu0 0.0
      %3486 = vmatpush1.msra.mxu0 0.0
      %3487 = vmatprep.subr.mxu0 0.0
      %3488 = vmatpush1.msra.mxu0 0.0
      %3489 = vmatprep.subr.mxu0 0.0
      %3490 = vmatpush1.msra.mxu0 0.0
      %3491 = vmatprep.subr.mxu0 0.0
      %3492 = vmatpush1.msra.mxu0 0.0
      %3493 = vmatprep.subr.mxu0 0.0
      %3494 = vmatpush1.msra.mxu0 0.0
      %3495 = vmatprep.subr.mxu0 0.0
      %3496 = vmatpush1.msra.mxu0 0.0
      %3497 = vmatprep.subr.mxu0 0.0
      %3498 = vmatpush1.msra.mxu0 0.0
      %3499 = vmatprep.subr.mxu0 0.0
      %3500 = vmatpush1.msra.mxu0 0.0
      %3501 = vmatprep.subr.mxu0 0.0
      %3502 = vmatpush1.msra.mxu0 0.0
      %3503 = vmatprep.subr.mxu0 0.0
      %3504 = vmatpush1.msra.mxu0 0.0
      %3505 = vmatprep.subr.mxu0 0.0
      %3506 = vmatpush1.msra.mxu0 0.0
      %3507 = vmatprep.subr.mxu0 0.0
      %3508 = vmatpush1.msra.mxu0 0.0
      %3509 = vmatprep.subr.mxu0 0.0
      %3510 = vmatpush1.msra.mxu0 0.0
      %3511 = vmatprep.subr.mxu0 0.0
      %3512 = vmatpush1.msra.mxu0 0.0
      %3513 = vmatprep.subr.mxu0 0.0
      %3514 = vmatpush1.msra.mxu0 0.0
      %3515 = vmatprep.subr.mxu0 0.0
      %3516 = vmatpush1.msra.mxu0 0.0
      %3517 = vmatprep.subr.mxu0 0.0
      %3518 = vmatpush1.msra.mxu0 0.0
      %3519 = vmatprep.subr.mxu0 0.0
      %3520 = vmatpush1.msra.mxu0 0.0
      %3521 = vmatprep.subr.mxu0 0.0
      %3522 = vmatpush1.msra.mxu0 0.0
      %3523 = vmatprep.mubr.f32.mxu0 0.0
      %3524 = vmatmul.mubr.f32.gmra.mrb[0].mxu0 %v3424
      %v3525 = vpop.f32.mrb[0].mxu0
      %v3526 = vadd.f32 0.0, %v3525
      %v3527 = vpop.f32.mrb[0].mxu0
      %3528 = vmatprep.mubr.f32.mxu0 0.0
      %3529 = vmatmul.mubr.f32.gmra.mrb[0].mxu0 %v3427
      %v3530 = vpop.f32.mrb[0].mxu0
      %v3531 = vadd.f32 0.0, %v3530
      %v3532 = vpop.f32.mrb[0].mxu0
      %3533 = vmatprep.mubr.f32.mxu0 0.0
      %3534 = vmatmul.mubr.f32.gmra.mrb[0].mxu0 %v3430
      %v3535 = vpop.f32.mrb[0].mxu0
      %v3536 = vadd.f32 0.0, %v3535
      %v3537 = vpop.f32.mrb[0].mxu0
      %3538 = vmatprep.mubr.f32.mxu0 0.0
      %3539 = vmatmul.mubr.f32.gmra.mrb[0].mxu0 %v3433
      %v3540 = vpop.f32.mrb[0].mxu0
      %v3541 = vadd.f32 0.0, %v3540
      %v3542 = vpop.f32.mrb[0].mxu0
      %3543 = vmatprep.mubr.f32.mxu0 0.0
      %3544 = vmatmul.mubr.f32.gmra.mrb[0].mxu0 %v3436
      %v3545 = vpop.f32.mrb[0].mxu0
      %v3546 = vadd.f32 0.0, %v3545
      %v3547 = vpop.f32.mrb[0].mxu0
      %3548 = vmatprep.mubr.f32.mxu0 0.0
      %3549 = vmatmul.mubr.f32.gmra.mrb[0].mxu0 %v3439
      %v3550 = vpop.f32.mrb[0].mxu0
      %v3551 = vadd.f32 0.0, %v3550
      %v3552 = vpop.f32.mrb[0].mxu0
      %3553 = vmatprep.mubr.f32.mxu0 0.0
      %3554 = vmatmul.mubr.f32.gmra.mrb[0].mxu0 %v3442
      %v3555 = vpop.f32.mrb[0].mxu0
      %v3556 = vadd.f32 0.0, %v3555
      %v3557 = vpop.f32.mrb[0].mxu0
      %3558 = vmatprep.mubr.f32.mxu0 0.0
      %3559 = vmatmul.mubr.f32.gmra.mrb[0].mxu0 %v3445
      %v3560 = vpop.f32.mrb[0].mxu0
      %v3561 = vadd.f32 0.0, %v3560
      %v3562 = vpop.f32.mrb[0].mxu0
      %3563 = vmatprep.mubr.f32.mxu0 0.0
      %3564 = vmatmul.mubr.f32.gmra.mrb[0].mxu0 %v3448
      %v3565 = vpop.f32.mrb[0].mxu0
      %v3566 = vadd.f32 0.0, %v3565
      %v3567 = vpop.f32.mrb[0].mxu0
      %3568 = vmatprep.mubr.f32.mxu0 0.0
      %3569 = vmatmul.mubr.f32.gmra.mrb[0].mxu0 %v3451
      %v3570 = vpop.f32.mrb[0].mxu0
      %v3571 = vadd.f32 0.0, %v3570
      %v3572 = vpop.f32.mrb[0].mxu0
      %3573 = vmatprep.mubr.f32.mxu0 0.0
      %3574 = vmatmul.mubr.f32.gmra.mrb[0].mxu0 %v3454
      %v3575 = vpop.f32.mrb[0].mxu0
      %v3576 = vadd.f32 0.0, %v3575
      %v3577 = vpop.f32.mrb[0].mxu0
      %3578 = vmatprep.mubr.f32.mxu0 0.0
      %3579 = vmatmul.mubr.f32.gmra.mrb[0].mxu0 %v3457
      %v3580 = vpop.f32.mrb[0].mxu0
      %v3581 = vadd.f32 0.0, %v3580
      %v3582 = vpop.f32.mrb[0].mxu0
      %3583 = vdwg.mxu0
      %v3584 = vadd.f32 %v3391, %v3526
      %v3585 = vadd.f32 %v3392, %v3531
      %v3586 = vadd.f32 %v3393, %v3536
      %v3587 = vadd.f32 %v3394, %v3541
      %v3588 = vadd.f32 %v3395, %v3546
      %v3589 = vadd.f32 %v3396, %v3551
      %v3590 = vadd.f32 %v3397, %v3556
      %v3591 = vadd.f32 %v3398, %v3561
      %v3592 = vadd.f32 %v3399, %v3566
      %v3593 = vadd.f32 %v3400, %v3571
      %v3594 = vadd.f32 %v3401, %v3576
      %v3595 = vadd.f32 %v3402, %v3581
      %v3596 = vld [vmem:[#allocation2 + $0x24] sm:$0xff]
      %v3597 = vld [vmem:[#allocation2 + $0x2c] sm:$0xff]
      %v3598 = vld [vmem:[#allocation2 + $0x34] sm:$0xff]
      %v3599 = vld [vmem:[#allocation2 + $0x3c] sm:$0xff]
      %v3600 = vld [vmem:[#allocation2 + $0x44] sm:$0xff]
      %v3601 = vld [vmem:[#allocation2 + $0x4c] sm:$0xff]
      %v3602 = vld [vmem:[#allocation2 + $0x54] sm:$0xff]
      %v3603 = vld [vmem:[#allocation2 + $0x5c] sm:$0xff]
      %v3604 = vld [vmem:[#allocation2 + $0x64] sm:$0xff]
      %v3605 = vld [vmem:[#allocation2 + $0x6c] sm:$0xff]
      %v3606 = vld [vmem:[#allocation2 + $0x74] sm:$0xff]
      %v3607 = vld [vmem:[#allocation2 + $0x7c] sm:$0xff]
      %v3608 = vld [vmem:[%s3 + $0x3c0] sm:$0xff]
      %v3609 = vld [vmem:[%s3 + $0x3c8] sm:$0xff]
      %v3610 = vld [vmem:[%s3 + $0x3d0] sm:$0xff]
      %v3611 = vld [vmem:[%s3 + $0x3d8] sm:$0xff]
      %v3612 = vld [vmem:[%s3 + $0x3e0] sm:$0xff]
      %v3613 = vld [vmem:[%s3 + $0x3e8] sm:$0xff]
      %v3614 = vld [vmem:[%s3 + $0x3f0] sm:$0xff]
      %v3615 = vld [vmem:[%s3 + $0x3f8] sm:$0xff]
      %v3617 = vsel %vm697, %v3596, 0
      %v3620 = vsel %vm697, %v3597, 0
      %v3623 = vsel %vm697, %v3598, 0
      %v3626 = vsel %vm697, %v3599, 0
      %v3629 = vsel %vm697, %v3600, 0
      %v3632 = vsel %vm697, %v3601, 0
      %v3635 = vsel %vm697, %v3602, 0
      %v3638 = vsel %vm697, %v3603, 0
      %v3641 = vsel %vm697, %v3604, 0
      %v3644 = vsel %vm697, %v3605, 0
      %v3647 = vsel %vm697, %v3606, 0
      %v3650 = vsel %vm697, %v3607, 0
      %3652 = vmatprep.subr.mxu0 0.0
      %3653 = vmatpush1.msra.mxu0 %v3608
      %3654 = vmatprep.subr.mxu0 0.0
      %3655 = vmatpush1.msra.mxu0 %v3609
      %3656 = vmatprep.subr.mxu0 0.0
      %3657 = vmatpush1.msra.mxu0 %v3610
      %3658 = vmatprep.subr.mxu0 0.0
      %3659 = vmatpush1.msra.mxu0 %v3611
      %3660 = vmatprep.subr.mxu0 0.0
      %3661 = vmatpush1.msra.mxu0 %v3612
      %3662 = vmatprep.subr.mxu0 0.0
      %3663 = vmatpush1.msra.mxu0 %v3613
      %3664 = vmatprep.subr.mxu0 0.0
      %3665 = vmatpush1.msra.mxu0 %v3614
      %3666 = vmatprep.subr.mxu0 0.0
      %3667 = vmatpush1.msra.mxu0 %v3615
      %3668 = vmatprep.subr.mxu0 0.0
      %3669 = vmatpush1.msra.mxu0 0.0
      %3670 = vmatprep.subr.mxu0 0.0
      %3671 = vmatpush1.msra.mxu0 0.0
      %3672 = vmatprep.subr.mxu0 0.0
      %3673 = vmatpush1.msra.mxu0 0.0
      %3674 = vmatprep.subr.mxu0 0.0
      %3675 = vmatpush1.msra.mxu0 0.0
      %3676 = vmatprep.subr.mxu0 0.0
      %3677 = vmatpush1.msra.mxu0 0.0
      %3678 = vmatprep.subr.mxu0 0.0
      %3679 = vmatpush1.msra.mxu0 0.0
      %3680 = vmatprep.subr.mxu0 0.0
      %3681 = vmatpush1.msra.mxu0 0.0
      %3682 = vmatprep.subr.mxu0 0.0
      %3683 = vmatpush1.msra.mxu0 0.0
      %3684 = vmatprep.subr.mxu0 0.0
      %3685 = vmatpush1.msra.mxu0 0.0
      %3686 = vmatprep.subr.mxu0 0.0
      %3687 = vmatpush1.msra.mxu0 0.0
      %3688 = vmatprep.subr.mxu0 0.0
      %3689 = vmatpush1.msra.mxu0 0.0
      %3690 = vmatprep.subr.mxu0 0.0
      %3691 = vmatpush1.msra.mxu0 0.0
      %3692 = vmatprep.subr.mxu0 0.0
      %3693 = vmatpush1.msra.mxu0 0.0
      %3694 = vmatprep.subr.mxu0 0.0
      %3695 = vmatpush1.msra.mxu0 0.0
      %3696 = vmatprep.subr.mxu0 0.0
      %3697 = vmatpush1.msra.mxu0 0.0
      %3698 = vmatprep.subr.mxu0 0.0
      %3699 = vmatpush1.msra.mxu0 0.0
      %3700 = vmatprep.subr.mxu0 0.0
      %3701 = vmatpush1.msra.mxu0 0.0
      %3702 = vmatprep.subr.mxu0 0.0
      %3703 = vmatpush1.msra.mxu0 0.0
      %3704 = vmatprep.subr.mxu0 0.0
      %3705 = vmatpush1.msra.mxu0 0.0
      %3706 = vmatprep.subr.mxu0 0.0
      %3707 = vmatpush1.msra.mxu0 0.0
      %3708 = vmatprep.subr.mxu0 0.0
      %3709 = vmatpush1.msra.mxu0 0.0
      %3710 = vmatprep.subr.mxu0 0.0
      %3711 = vmatpush1.msra.mxu0 0.0
      %3712 = vmatprep.subr.mxu0 0.0
      %3713 = vmatpush1.msra.mxu0 0.0
      %3714 = vmatprep.subr.mxu0 0.0
      %3715 = vmatpush1.msra.mxu0 0.0
      %3716 = vmatprep.mubr.f32.mxu0 0.0
      %3717 = vmatmul.mubr.f32.gmra.mrb[0].mxu0 %v3617
      %v3718 = vpop.f32.mrb[0].mxu0
      %v3719 = vadd.f32 0.0, %v3718
      %v3720 = vpop.f32.mrb[0].mxu0
      %3721 = vmatprep.mubr.f32.mxu0 0.0
      %3722 = vmatmul.mubr.f32.gmra.mrb[0].mxu0 %v3620
      %v3723 = vpop.f32.mrb[0].mxu0
      %v3724 = vadd.f32 0.0, %v3723
      %v3725 = vpop.f32.mrb[0].mxu0
      %3726 = vmatprep.mubr.f32.mxu0 0.0
      %3727 = vmatmul.mubr.f32.gmra.mrb[0].mxu0 %v3623
      %v3728 = vpop.f32.mrb[0].mxu0
      %v3729 = vadd.f32 0.0, %v3728
      %v3730 = vpop.f32.mrb[0].mxu0
      %3731 = vmatprep.mubr.f32.mxu0 0.0
      %3732 = vmatmul.mubr.f32.gmra.mrb[0].mxu0 %v3626
      %v3733 = vpop.f32.mrb[0].mxu0
      %v3734 = vadd.f32 0.0, %v3733
      %v3735 = vpop.f32.mrb[0].mxu0
      %3736 = vmatprep.mubr.f32.mxu0 0.0
      %3737 = vmatmul.mubr.f32.gmra.mrb[0].mxu0 %v3629
      %v3738 = vpop.f32.mrb[0].mxu0
      %v3739 = vadd.f32 0.0, %v3738
      %v3740 = vpop.f32.mrb[0].mxu0
      %3741 = vmatprep.mubr.f32.mxu0 0.0
      %3742 = vmatmul.mubr.f32.gmra.mrb[0].mxu0 %v3632
      %v3743 = vpop.f32.mrb[0].mxu0
      %v3744 = vadd.f32 0.0, %v3743
      %v3745 = vpop.f32.mrb[0].mxu0
      %3746 = vmatprep.mubr.f32.mxu0 0.0
      %3747 = vmatmul.mubr.f32.gmra.mrb[0].mxu0 %v3635
      %v3748 = vpop.f32.mrb[0].mxu0
      %v3749 = vadd.f32 0.0, %v3748
      %v3750 = vpop.f32.mrb[0].mxu0
      %3751 = vmatprep.mubr.f32.mxu0 0.0
      %3752 = vmatmul.mubr.f32.gmra.mrb[0].mxu0 %v3638
      %v3753 = vpop.f32.mrb[0].mxu0
      %v3754 = vadd.f32 0.0, %v3753
      %v3755 = vpop.f32.mrb[0].mxu0
      %3756 = vmatprep.mubr.f32.mxu0 0.0
      %3757 = vmatmul.mubr.f32.gmra.mrb[0].mxu0 %v3641
      %v3758 = vpop.f32.mrb[0].mxu0
      %v3759 = vadd.f32 0.0, %v3758
      %v3760 = vpop.f32.mrb[0].mxu0
      %3761 = vmatprep.mubr.f32.mxu0 0.0
      %3762 = vmatmul.mubr.f32.gmra.mrb[0].mxu0 %v3644
      %v3763 = vpop.f32.mrb[0].mxu0
      %v3764 = vadd.f32 0.0, %v3763
      %v3765 = vpop.f32.mrb[0].mxu0
      %3766 = vmatprep.mubr.f32.mxu0 0.0
      %3767 = vmatmul.mubr.f32.gmra.mrb[0].mxu0 %v3647
      %v3768 = vpop.f32.mrb[0].mxu0
      %v3769 = vadd.f32 0.0, %v3768
      %v3770 = vpop.f32.mrb[0].mxu0
      %3771 = vmatprep.mubr.f32.mxu0 0.0
      %3772 = vmatmul.mubr.f32.gmra.mrb[0].mxu0 %v3650
      %v3773 = vpop.f32.mrb[0].mxu0
      %v3774 = vadd.f32 0.0, %v3773
      %v3775 = vpop.f32.mrb[0].mxu0
      %3776 = vdwg.mxu0
      %v3777 = vadd.f32 %v3584, %v3719
      %v3778 = vadd.f32 %v3585, %v3724
      %v3779 = vadd.f32 %v3586, %v3729
      %v3780 = vadd.f32 %v3587, %v3734
      %v3781 = vadd.f32 %v3588, %v3739
      %v3782 = vadd.f32 %v3589, %v3744
      %v3783 = vadd.f32 %v3590, %v3749
      %v3784 = vadd.f32 %v3591, %v3754
      %v3785 = vadd.f32 %v3592, %v3759
      %v3786 = vadd.f32 %v3593, %v3764
      %v3787 = vadd.f32 %v3594, %v3769
      %v3788 = vadd.f32 %v3595, %v3774
      %v3789 = vld [vmem:[#allocation2 + $0x25] sm:$0xff]
      %v3790 = vld [vmem:[#allocation2 + $0x2d] sm:$0xff]
      %v3791 = vld [vmem:[#allocation2 + $0x35] sm:$0xff]
      %v3792 = vld [vmem:[#allocation2 + $0x3d] sm:$0xff]
      %v3793 = vld [vmem:[#allocation2 + $0x45] sm:$0xff]
      %v3794 = vld [vmem:[#allocation2 + $0x4d] sm:$0xff]
      %v3795 = vld [vmem:[#allocation2 + $0x55] sm:$0xff]
      %v3796 = vld [vmem:[#allocation2 + $0x5d] sm:$0xff]
      %v3797 = vld [vmem:[#allocation2 + $0x65] sm:$0xff]
      %v3798 = vld [vmem:[#allocation2 + $0x6d] sm:$0xff]
      %v3799 = vld [vmem:[#allocation2 + $0x75] sm:$0xff]
      %v3800 = vld [vmem:[#allocation2 + $0x7d] sm:$0xff]
      %v3801 = vld [vmem:[%s3 + $0x400] sm:$0xff]
      %v3802 = vld [vmem:[%s3 + $0x408] sm:$0xff]
      %v3803 = vld [vmem:[%s3 + $0x410] sm:$0xff]
      %v3804 = vld [vmem:[%s3 + $0x418] sm:$0xff]
      %v3805 = vld [vmem:[%s3 + $0x420] sm:$0xff]
      %v3806 = vld [vmem:[%s3 + $0x428] sm:$0xff]
      %v3807 = vld [vmem:[%s3 + $0x430] sm:$0xff]
      %v3808 = vld [vmem:[%s3 + $0x438] sm:$0xff]
      %v3810 = vsel %vm697, %v3789, 0
      %v3813 = vsel %vm697, %v3790, 0
      %v3816 = vsel %vm697, %v3791, 0
      %v3819 = vsel %vm697, %v3792, 0
      %v3822 = vsel %vm697, %v3793, 0
      %v3825 = vsel %vm697, %v3794, 0
      %v3828 = vsel %vm697, %v3795, 0
      %v3831 = vsel %vm697, %v3796, 0
      %v3834 = vsel %vm697, %v3797, 0
      %v3837 = vsel %vm697, %v3798, 0
      %v3840 = vsel %vm697, %v3799, 0
      %v3843 = vsel %vm697, %v3800, 0
      %3845 = vmatprep.subr.mxu0 0.0
      %3846 = vmatpush1.msra.mxu0 %v3801
      %3847 = vmatprep.subr.mxu0 0.0
      %3848 = vmatpush1.msra.mxu0 %v3802
      %3849 = vmatprep.subr.mxu0 0.0
      %3850 = vmatpush1.msra.mxu0 %v3803
      %3851 = vmatprep.subr.mxu0 0.0
      %3852 = vmatpush1.msra.mxu0 %v3804
      %3853 = vmatprep.subr.mxu0 0.0
      %3854 = vmatpush1.msra.mxu0 %v3805
      %3855 = vmatprep.subr.mxu0 0.0
      %3856 = vmatpush1.msra.mxu0 %v3806
      %3857 = vmatprep.subr.mxu0 0.0
      %3858 = vmatpush1.msra.mxu0 %v3807
      %3859 = vmatprep.subr.mxu0 0.0
      %3860 = vmatpush1.msra.mxu0 %v3808
      %3861 = vmatprep.subr.mxu0 0.0
      %3862 = vmatpush1.msra.mxu0 0.0
      %3863 = vmatprep.subr.mxu0 0.0
      %3864 = vmatpush1.msra.mxu0 0.0
      %3865 = vmatprep.subr.mxu0 0.0
      %3866 = vmatpush1.msra.mxu0 0.0
      %3867 = vmatprep.subr.mxu0 0.0
      %3868 = vmatpush1.msra.mxu0 0.0
      %3869 = vmatprep.subr.mxu0 0.0
      %3870 = vmatpush1.msra.mxu0 0.0
      %3871 = vmatprep.subr.mxu0 0.0
      %3872 = vmatpush1.msra.mxu0 0.0
      %3873 = vmatprep.subr.mxu0 0.0
      %3874 = vmatpush1.msra.mxu0 0.0
      %3875 = vmatprep.subr.mxu0 0.0
      %3876 = vmatpush1.msra.mxu0 0.0
      %3877 = vmatprep.subr.mxu0 0.0
      %3878 = vmatpush1.msra.mxu0 0.0
      %3879 = vmatprep.subr.mxu0 0.0
      %3880 = vmatpush1.msra.mxu0 0.0
      %3881 = vmatprep.subr.mxu0 0.0
      %3882 = vmatpush1.msra.mxu0 0.0
      %3883 = vmatprep.subr.mxu0 0.0
      %3884 = vmatpush1.msra.mxu0 0.0
      %3885 = vmatprep.subr.mxu0 0.0
      %3886 = vmatpush1.msra.mxu0 0.0
      %3887 = vmatprep.subr.mxu0 0.0
      %3888 = vmatpush1.msra.mxu0 0.0
      %3889 = vmatprep.subr.mxu0 0.0
      %3890 = vmatpush1.msra.mxu0 0.0
      %3891 = vmatprep.subr.mxu0 0.0
      %3892 = vmatpush1.msra.mxu0 0.0
      %3893 = vmatprep.subr.mxu0 0.0
      %3894 = vmatpush1.msra.mxu0 0.0
      %3895 = vmatprep.subr.mxu0 0.0
      %3896 = vmatpush1.msra.mxu0 0.0
      %3897 = vmatprep.subr.mxu0 0.0
      %3898 = vmatpush1.msra.mxu0 0.0
      %3899 = vmatprep.subr.mxu0 0.0
      %3900 = vmatpush1.msra.mxu0 0.0
      %3901 = vmatprep.subr.mxu0 0.0
      %3902 = vmatpush1.msra.mxu0 0.0
      %3903 = vmatprep.subr.mxu0 0.0
      %3904 = vmatpush1.msra.mxu0 0.0
      %3905 = vmatprep.subr.mxu0 0.0
      %3906 = vmatpush1.msra.mxu0 0.0
      %3907 = vmatprep.subr.mxu0 0.0
      %3908 = vmatpush1.msra.mxu0 0.0
      %3909 = vmatprep.mubr.f32.mxu0 0.0
      %3910 = vmatmul.mubr.f32.gmra.mrb[0].mxu0 %v3810
      %v3911 = vpop.f32.mrb[0].mxu0
      %v3912 = vadd.f32 0.0, %v3911
      %v3913 = vpop.f32.mrb[0].mxu0
      %3914 = vmatprep.mubr.f32.mxu0 0.0
      %3915 = vmatmul.mubr.f32.gmra.mrb[0].mxu0 %v3813
      %v3916 = vpop.f32.mrb[0].mxu0
      %v3917 = vadd.f32 0.0, %v3916
      %v3918 = vpop.f32.mrb[0].mxu0
      %3919 = vmatprep.mubr.f32.mxu0 0.0
      %3920 = vmatmul.mubr.f32.gmra.mrb[0].mxu0 %v3816
      %v3921 = vpop.f32.mrb[0].mxu0
      %v3922 = vadd.f32 0.0, %v3921
      %v3923 = vpop.f32.mrb[0].mxu0
      %3924 = vmatprep.mubr.f32.mxu0 0.0
      %3925 = vmatmul.mubr.f32.gmra.mrb[0].mxu0 %v3819
      %v3926 = vpop.f32.mrb[0].mxu0
      %v3927 = vadd.f32 0.0, %v3926
      %v3928 = vpop.f32.mrb[0].mxu0
      %3929 = vmatprep.mubr.f32.mxu0 0.0
      %3930 = vmatmul.mubr.f32.gmra.mrb[0].mxu0 %v3822
      %v3931 = vpop.f32.mrb[0].mxu0
      %v3932 = vadd.f32 0.0, %v3931
      %v3933 = vpop.f32.mrb[0].mxu0
      %3934 = vmatprep.mubr.f32.mxu0 0.0
      %3935 = vmatmul.mubr.f32.gmra.mrb[0].mxu0 %v3825
      %v3936 = vpop.f32.mrb[0].mxu0
      %v3937 = vadd.f32 0.0, %v3936
      %v3938 = vpop.f32.mrb[0].mxu0
      %3939 = vmatprep.mubr.f32.mxu0 0.0
      %3940 = vmatmul.mubr.f32.gmra.mrb[0].mxu0 %v3828
      %v3941 = vpop.f32.mrb[0].mxu0
      %v3942 = vadd.f32 0.0, %v3941
      %v3943 = vpop.f32.mrb[0].mxu0
      %3944 = vmatprep.mubr.f32.mxu0 0.0
      %3945 = vmatmul.mubr.f32.gmra.mrb[0].mxu0 %v3831
      %v3946 = vpop.f32.mrb[0].mxu0
      %v3947 = vadd.f32 0.0, %v3946
      %v3948 = vpop.f32.mrb[0].mxu0
      %3949 = vmatprep.mubr.f32.mxu0 0.0
      %3950 = vmatmul.mubr.f32.gmra.mrb[0].mxu0 %v3834
      %v3951 = vpop.f32.mrb[0].mxu0
      %v3952 = vadd.f32 0.0, %v3951
      %v3953 = vpop.f32.mrb[0].mxu0
      %3954 = vmatprep.mubr.f32.mxu0 0.0
      %3955 = vmatmul.mubr.f32.gmra.mrb[0].mxu0 %v3837
      %v3956 = vpop.f32.mrb[0].mxu0
      %v3957 = vadd.f32 0.0, %v3956
      %v3958 = vpop.f32.mrb[0].mxu0
      %3959 = vmatprep.mubr.f32.mxu0 0.0
      %3960 = vmatmul.mubr.f32.gmra.mrb[0].mxu0 %v3840
      %v3961 = vpop.f32.mrb[0].mxu0
      %v3962 = vadd.f32 0.0, %v3961
      %v3963 = vpop.f32.mrb[0].mxu0
      %3964 = vmatprep.mubr.f32.mxu0 0.0
      %3965 = vmatmul.mubr.f32.gmra.mrb[0].mxu0 %v3843
      %v3966 = vpop.f32.mrb[0].mxu0
      %v3967 = vadd.f32 0.0, %v3966
      %v3968 = vpop.f32.mrb[0].mxu0
      %3969 = vdwg.mxu0
      %v3970 = vadd.f32 %v3777, %v3912
      %v3971 = vadd.f32 %v3778, %v3917
      %v3972 = vadd.f32 %v3779, %v3922
      %v3973 = vadd.f32 %v3780, %v3927
      %v3974 = vadd.f32 %v3781, %v3932
      %v3975 = vadd.f32 %v3782, %v3937
      %v3976 = vadd.f32 %v3783, %v3942
      %v3977 = vadd.f32 %v3784, %v3947
      %v3978 = vadd.f32 %v3785, %v3952
      %v3979 = vadd.f32 %v3786, %v3957
      %v3980 = vadd.f32 %v3787, %v3962
      %v3981 = vadd.f32 %v3788, %v3967
      %v3982 = vld [vmem:[#allocation2 + $0x26] sm:$0xff]
      %v3983 = vld [vmem:[#allocation2 + $0x2e] sm:$0xff]
      %v3984 = vld [vmem:[#allocation2 + $0x36] sm:$0xff]
      %v3985 = vld [vmem:[#allocation2 + $0x3e] sm:$0xff]
      %v3986 = vld [vmem:[#allocation2 + $0x46] sm:$0xff]
      %v3987 = vld [vmem:[#allocation2 + $0x4e] sm:$0xff]
      %v3988 = vld [vmem:[#allocation2 + $0x56] sm:$0xff]
      %v3989 = vld [vmem:[#allocation2 + $0x5e] sm:$0xff]
      %v3990 = vld [vmem:[#allocation2 + $0x66] sm:$0xff]
      %v3991 = vld [vmem:[#allocation2 + $0x6e] sm:$0xff]
      %v3992 = vld [vmem:[#allocation2 + $0x76] sm:$0xff]
      %v3993 = vld [vmem:[#allocation2 + $0x7e] sm:$0xff]
      %v3994 = vld [vmem:[%s3 + $0x440] sm:$0xff]
      %v3995 = vld [vmem:[%s3 + $0x448] sm:$0xff]
      %v3996 = vld [vmem:[%s3 + $0x450] sm:$0xff]
      %v3997 = vld [vmem:[%s3 + $0x458] sm:$0xff]
      %v3998 = vld [vmem:[%s3 + $0x460] sm:$0xff]
      %v3999 = vld [vmem:[%s3 + $0x468] sm:$0xff]
      %v4000 = vld [vmem:[%s3 + $0x470] sm:$0xff]
      %v4001 = vld [vmem:[%s3 + $0x478] sm:$0xff]
      %v4003 = vsel %vm697, %v3982, 0
      %v4006 = vsel %vm697, %v3983, 0
      %v4009 = vsel %vm697, %v3984, 0
      %v4012 = vsel %vm697, %v3985, 0
      %v4015 = vsel %vm697, %v3986, 0
      %v4018 = vsel %vm697, %v3987, 0
      %v4021 = vsel %vm697, %v3988, 0
      %v4024 = vsel %vm697, %v3989, 0
      %v4027 = vsel %vm697, %v3990, 0
      %v4030 = vsel %vm697, %v3991, 0
      %v4033 = vsel %vm697, %v3992, 0
      %v4036 = vsel %vm697, %v3993, 0
      %4038 = vmatprep.subr.mxu0 0.0
      %4039 = vmatpush1.msra.mxu0 %v3994
      %4040 = vmatprep.subr.mxu0 0.0
      %4041 = vmatpush1.msra.mxu0 %v3995
      %4042 = vmatprep.subr.mxu0 0.0
      %4043 = vmatpush1.msra.mxu0 %v3996
      %4044 = vmatprep.subr.mxu0 0.0
      %4045 = vmatpush1.msra.mxu0 %v3997
      %4046 = vmatprep.subr.mxu0 0.0
      %4047 = vmatpush1.msra.mxu0 %v3998
      %4048 = vmatprep.subr.mxu0 0.0
      %4049 = vmatpush1.msra.mxu0 %v3999
      %4050 = vmatprep.subr.mxu0 0.0
      %4051 = vmatpush1.msra.mxu0 %v4000
      %4052 = vmatprep.subr.mxu0 0.0
      %4053 = vmatpush1.msra.mxu0 %v4001
      %4054 = vmatprep.subr.mxu0 0.0
      %4055 = vmatpush1.msra.mxu0 0.0
      %4056 = vmatprep.subr.mxu0 0.0
      %4057 = vmatpush1.msra.mxu0 0.0
      %4058 = vmatprep.subr.mxu0 0.0
      %4059 = vmatpush1.msra.mxu0 0.0
      %4060 = vmatprep.subr.mxu0 0.0
      %4061 = vmatpush1.msra.mxu0 0.0
      %4062 = vmatprep.subr.mxu0 0.0
      %4063 = vmatpush1.msra.mxu0 0.0
      %4064 = vmatprep.subr.mxu0 0.0
      %4065 = vmatpush1.msra.mxu0 0.0
      %4066 = vmatprep.subr.mxu0 0.0
      %4067 = vmatpush1.msra.mxu0 0.0
      %4068 = vmatprep.subr.mxu0 0.0
      %4069 = vmatpush1.msra.mxu0 0.0
      %4070 = vmatprep.subr.mxu0 0.0
      %4071 = vmatpush1.msra.mxu0 0.0
      %4072 = vmatprep.subr.mxu0 0.0
      %4073 = vmatpush1.msra.mxu0 0.0
      %4074 = vmatprep.subr.mxu0 0.0
      %4075 = vmatpush1.msra.mxu0 0.0
      %4076 = vmatprep.subr.mxu0 0.0
      %4077 = vmatpush1.msra.mxu0 0.0
      %4078 = vmatprep.subr.mxu0 0.0
      %4079 = vmatpush1.msra.mxu0 0.0
      %4080 = vmatprep.subr.mxu0 0.0
      %4081 = vmatpush1.msra.mxu0 0.0
      %4082 = vmatprep.subr.mxu0 0.0
      %4083 = vmatpush1.msra.mxu0 0.0
      %4084 = vmatprep.subr.mxu0 0.0
      %4085 = vmatpush1.msra.mxu0 0.0
      %4086 = vmatprep.subr.mxu0 0.0
      %4087 = vmatpush1.msra.mxu0 0.0
      %4088 = vmatprep.subr.mxu0 0.0
      %4089 = vmatpush1.msra.mxu0 0.0
      %4090 = vmatprep.subr.mxu0 0.0
      %4091 = vmatpush1.msra.mxu0 0.0
      %4092 = vmatprep.subr.mxu0 0.0
      %4093 = vmatpush1.msra.mxu0 0.0
      %4094 = vmatprep.subr.mxu0 0.0
      %4095 = vmatpush1.msra.mxu0 0.0
      %4096 = vmatprep.subr.mxu0 0.0
      %4097 = vmatpush1.msra.mxu0 0.0
      %4098 = vmatprep.subr.mxu0 0.0
      %4099 = vmatpush1.msra.mxu0 0.0
      %4100 = vmatprep.subr.mxu0 0.0
      %4101 = vmatpush1.msra.mxu0 0.0
      %4102 = vmatprep.mubr.f32.mxu0 0.0
      %4103 = vmatmul.mubr.f32.gmra.mrb[0].mxu0 %v4003
      %v4104 = vpop.f32.mrb[0].mxu0
      %v4105 = vadd.f32 0.0, %v4104
      %v4106 = vpop.f32.mrb[0].mxu0
      %4107 = vmatprep.mubr.f32.mxu0 0.0
      %4108 = vmatmul.mubr.f32.gmra.mrb[0].mxu0 %v4006
      %v4109 = vpop.f32.mrb[0].mxu0
      %v4110 = vadd.f32 0.0, %v4109
      %v4111 = vpop.f32.mrb[0].mxu0
      %4112 = vmatprep.mubr.f32.mxu0 0.0
      %4113 = vmatmul.mubr.f32.gmra.mrb[0].mxu0 %v4009
      %v4114 = vpop.f32.mrb[0].mxu0
      %v4115 = vadd.f32 0.0, %v4114
      %v4116 = vpop.f32.mrb[0].mxu0
      %4117 = vmatprep.mubr.f32.mxu0 0.0
      %4118 = vmatmul.mubr.f32.gmra.mrb[0].mxu0 %v4012
      %v4119 = vpop.f32.mrb[0].mxu0
      %v4120 = vadd.f32 0.0, %v4119
      %v4121 = vpop.f32.mrb[0].mxu0
      %4122 = vmatprep.mubr.f32.mxu0 0.0
      %4123 = vmatmul.mubr.f32.gmra.mrb[0].mxu0 %v4015
      %v4124 = vpop.f32.mrb[0].mxu0
      %v4125 = vadd.f32 0.0, %v4124
      %v4126 = vpop.f32.mrb[0].mxu0
      %4127 = vmatprep.mubr.f32.mxu0 0.0
      %4128 = vmatmul.mubr.f32.gmra.mrb[0].mxu0 %v4018
      %v4129 = vpop.f32.mrb[0].mxu0
      %v4130 = vadd.f32 0.0, %v4129
      %v4131 = vpop.f32.mrb[0].mxu0
      %4132 = vmatprep.mubr.f32.mxu0 0.0
      %4133 = vmatmul.mubr.f32.gmra.mrb[0].mxu0 %v4021
      %v4134 = vpop.f32.mrb[0].mxu0
      %v4135 = vadd.f32 0.0, %v4134
      %v4136 = vpop.f32.mrb[0].mxu0
      %4137 = vmatprep.mubr.f32.mxu0 0.0
      %4138 = vmatmul.mubr.f32.gmra.mrb[0].mxu0 %v4024
      %v4139 = vpop.f32.mrb[0].mxu0
      %v4140 = vadd.f32 0.0, %v4139
      %v4141 = vpop.f32.mrb[0].mxu0
      %4142 = vmatprep.mubr.f32.mxu0 0.0
      %4143 = vmatmul.mubr.f32.gmra.mrb[0].mxu0 %v4027
      %v4144 = vpop.f32.mrb[0].mxu0
      %v4145 = vadd.f32 0.0, %v4144
      %v4146 = vpop.f32.mrb[0].mxu0
      %4147 = vmatprep.mubr.f32.mxu0 0.0
      %4148 = vmatmul.mubr.f32.gmra.mrb[0].mxu0 %v4030
      %v4149 = vpop.f32.mrb[0].mxu0
      %v4150 = vadd.f32 0.0, %v4149
      %v4151 = vpop.f32.mrb[0].mxu0
      %4152 = vmatprep.mubr.f32.mxu0 0.0
      %4153 = vmatmul.mubr.f32.gmra.mrb[0].mxu0 %v4033
      %v4154 = vpop.f32.mrb[0].mxu0
      %v4155 = vadd.f32 0.0, %v4154
      %v4156 = vpop.f32.mrb[0].mxu0
      %4157 = vmatprep.mubr.f32.mxu0 0.0
      %4158 = vmatmul.mubr.f32.gmra.mrb[0].mxu0 %v4036
      %v4159 = vpop.f32.mrb[0].mxu0
      %v4160 = vadd.f32 0.0, %v4159
      %v4161 = vpop.f32.mrb[0].mxu0
      %4162 = vdwg.mxu0
      %v4163 = vadd.f32 %v3970, %v4105
      %v4164 = vadd.f32 %v3971, %v4110
      %v4165 = vadd.f32 %v3972, %v4115
      %v4166 = vadd.f32 %v3973, %v4120
      %v4167 = vadd.f32 %v3974, %v4125
      %v4168 = vadd.f32 %v3975, %v4130
      %v4169 = vadd.f32 %v3976, %v4135
      %v4170 = vadd.f32 %v3977, %v4140
      %v4171 = vadd.f32 %v3978, %v4145
      %v4172 = vadd.f32 %v3979, %v4150
      %v4173 = vadd.f32 %v3980, %v4155
      %v4174 = vadd.f32 %v3981, %v4160
      %v4175 = vld [vmem:[#allocation2 + $0x27] sm:$0xff]
      %v4176 = vld [vmem:[#allocation2 + $0x2f] sm:$0xff]
      %v4177 = vld [vmem:[#allocation2 + $0x37] sm:$0xff]
      %v4178 = vld [vmem:[#allocation2 + $0x3f] sm:$0xff]
      %v4179 = vld [vmem:[#allocation2 + $0x47] sm:$0xff]
      %v4180 = vld [vmem:[#allocation2 + $0x4f] sm:$0xff]
      %v4181 = vld [vmem:[#allocation2 + $0x57] sm:$0xff]
      %v4182 = vld [vmem:[#allocation2 + $0x5f] sm:$0xff]
      %v4183 = vld [vmem:[#allocation2 + $0x67] sm:$0xff]
      %v4184 = vld [vmem:[#allocation2 + $0x6f] sm:$0xff]
      %v4185 = vld [vmem:[#allocation2 + $0x77] sm:$0xff]
      %v4186 = vld [vmem:[#allocation2 + $0x7f] sm:$0xff]
      %v4187 = vld [vmem:[%s3 + $0x480] sm:$0xff]
      %v4188 = vld [vmem:[%s3 + $0x488] sm:$0xff]
      %v4189 = vld [vmem:[%s3 + $0x490] sm:$0xff]
      %v4190 = vld [vmem:[%s3 + $0x498] sm:$0xff]
      %v4191 = vld [vmem:[%s3 + $0x4a0] sm:$0xff]
      %v4192 = vld [vmem:[%s3 + $0x4a8] sm:$0xff]
      %v4193 = vld [vmem:[%s3 + $0x4b0] sm:$0xff]
      %v4194 = vld [vmem:[%s3 + $0x4b8] sm:$0xff]
      %v4196 = vsel %vm697, %v4175, 0
      %v4199 = vsel %vm697, %v4176, 0
      %v4202 = vsel %vm697, %v4177, 0
      %v4205 = vsel %vm697, %v4178, 0
      %v4208 = vsel %vm697, %v4179, 0
      %v4211 = vsel %vm697, %v4180, 0
      %v4214 = vsel %vm697, %v4181, 0
      %v4217 = vsel %vm697, %v4182, 0
      %v4220 = vsel %vm697, %v4183, 0
      %v4223 = vsel %vm697, %v4184, 0
      %v4226 = vsel %vm697, %v4185, 0
      %v4229 = vsel %vm697, %v4186, 0
      %4231 = vmatprep.subr.mxu0 0.0
      %4232 = vmatpush1.msra.mxu0 %v4187
      %4233 = vmatprep.subr.mxu0 0.0
      %4234 = vmatpush1.msra.mxu0 %v4188
      %4235 = vmatprep.subr.mxu0 0.0
      %4236 = vmatpush1.msra.mxu0 %v4189
      %4237 = vmatprep.subr.mxu0 0.0
      %4238 = vmatpush1.msra.mxu0 %v4190
      %4239 = vmatprep.subr.mxu0 0.0
      %4240 = vmatpush1.msra.mxu0 %v4191
      %4241 = vmatprep.subr.mxu0 0.0
      %4242 = vmatpush1.msra.mxu0 %v4192
      %4243 = vmatprep.subr.mxu0 0.0
      %4244 = vmatpush1.msra.mxu0 %v4193
      %4245 = vmatprep.subr.mxu0 0.0
      %4246 = vmatpush1.msra.mxu0 %v4194
      %4247 = vmatprep.subr.mxu0 0.0
      %4248 = vmatpush1.msra.mxu0 0.0
      %4249 = vmatprep.subr.mxu0 0.0
      %4250 = vmatpush1.msra.mxu0 0.0
      %4251 = vmatprep.subr.mxu0 0.0
      %4252 = vmatpush1.msra.mxu0 0.0
      %4253 = vmatprep.subr.mxu0 0.0
      %4254 = vmatpush1.msra.mxu0 0.0
      %4255 = vmatprep.subr.mxu0 0.0
      %4256 = vmatpush1.msra.mxu0 0.0
      %4257 = vmatprep.subr.mxu0 0.0
      %4258 = vmatpush1.msra.mxu0 0.0
      %4259 = vmatprep.subr.mxu0 0.0
      %4260 = vmatpush1.msra.mxu0 0.0
      %4261 = vmatprep.subr.mxu0 0.0
      %4262 = vmatpush1.msra.mxu0 0.0
      %4263 = vmatprep.subr.mxu0 0.0
      %4264 = vmatpush1.msra.mxu0 0.0
      %4265 = vmatprep.subr.mxu0 0.0
      %4266 = vmatpush1.msra.mxu0 0.0
      %4267 = vmatprep.subr.mxu0 0.0
      %4268 = vmatpush1.msra.mxu0 0.0
      %4269 = vmatprep.subr.mxu0 0.0
      %4270 = vmatpush1.msra.mxu0 0.0
      %4271 = vmatprep.subr.mxu0 0.0
      %4272 = vmatpush1.msra.mxu0 0.0
      %4273 = vmatprep.subr.mxu0 0.0
      %4274 = vmatpush1.msra.mxu0 0.0
      %4275 = vmatprep.subr.mxu0 0.0
      %4276 = vmatpush1.msra.mxu0 0.0
      %4277 = vmatprep.subr.mxu0 0.0
      %4278 = vmatpush1.msra.mxu0 0.0
      %4279 = vmatprep.subr.mxu0 0.0
      %4280 = vmatpush1.msra.mxu0 0.0
      %4281 = vmatprep.subr.mxu0 0.0
      %4282 = vmatpush1.msra.mxu0 0.0
      %4283 = vmatprep.subr.mxu0 0.0
      %4284 = vmatpush1.msra.mxu0 0.0
      %4285 = vmatprep.subr.mxu0 0.0
      %4286 = vmatpush1.msra.mxu0 0.0
      %4287 = vmatprep.subr.mxu0 0.0
      %4288 = vmatpush1.msra.mxu0 0.0
      %4289 = vmatprep.subr.mxu0 0.0
      %4290 = vmatpush1.msra.mxu0 0.0
      %4291 = vmatprep.subr.mxu0 0.0
      %4292 = vmatpush1.msra.mxu0 0.0
      %4293 = vmatprep.subr.mxu0 0.0
      %4294 = vmatpush1.msra.mxu0 0.0
      %4295 = vmatprep.mubr.f32.mxu0 0.0
      %4296 = vmatmul.mubr.f32.gmra.mrb[0].mxu0 %v4196
      %v4297 = vpop.f32.mrb[0].mxu0
      %v4298 = vadd.f32 0.0, %v4297
      %v4299 = vpop.f32.mrb[0].mxu0
      %4300 = vmatprep.mubr.f32.mxu0 0.0
      %4301 = vmatmul.mubr.f32.gmra.mrb[0].mxu0 %v4199
      %v4302 = vpop.f32.mrb[0].mxu0
      %v4303 = vadd.f32 0.0, %v4302
      %v4304 = vpop.f32.mrb[0].mxu0
      %4305 = vmatprep.mubr.f32.mxu0 0.0
      %4306 = vmatmul.mubr.f32.gmra.mrb[0].mxu0 %v4202
      %v4307 = vpop.f32.mrb[0].mxu0
      %v4308 = vadd.f32 0.0, %v4307
      %v4309 = vpop.f32.mrb[0].mxu0
      %4310 = vmatprep.mubr.f32.mxu0 0.0
      %4311 = vmatmul.mubr.f32.gmra.mrb[0].mxu0 %v4205
      %v4312 = vpop.f32.mrb[0].mxu0
      %v4313 = vadd.f32 0.0, %v4312
      %v4314 = vpop.f32.mrb[0].mxu0
      %4315 = vmatprep.mubr.f32.mxu0 0.0
      %4316 = vmatmul.mubr.f32.gmra.mrb[0].mxu0 %v4208
      %v4317 = vpop.f32.mrb[0].mxu0
      %v4318 = vadd.f32 0.0, %v4317
      %v4319 = vpop.f32.mrb[0].mxu0
      %4320 = vmatprep.mubr.f32.mxu0 0.0
      %4321 = vmatmul.mubr.f32.gmra.mrb[0].mxu0 %v4211
      %v4322 = vpop.f32.mrb[0].mxu0
      %v4323 = vadd.f32 0.0, %v4322
      %v4324 = vpop.f32.mrb[0].mxu0
      %4325 = vmatprep.mubr.f32.mxu0 0.0
      %4326 = vmatmul.mubr.f32.gmra.mrb[0].mxu0 %v4214
      %v4327 = vpop.f32.mrb[0].mxu0
      %v4328 = vadd.f32 0.0, %v4327
      %v4329 = vpop.f32.mrb[0].mxu0
      %4330 = vmatprep.mubr.f32.mxu0 0.0
      %4331 = vmatmul.mubr.f32.gmra.mrb[0].mxu0 %v4217
      %v4332 = vpop.f32.mrb[0].mxu0
      %v4333 = vadd.f32 0.0, %v4332
      %v4334 = vpop.f32.mrb[0].mxu0
      %4335 = vmatprep.mubr.f32.mxu0 0.0
      %4336 = vmatmul.mubr.f32.gmra.mrb[0].mxu0 %v4220
      %v4337 = vpop.f32.mrb[0].mxu0
      %v4338 = vadd.f32 0.0, %v4337
      %v4339 = vpop.f32.mrb[0].mxu0
      %4340 = vmatprep.mubr.f32.mxu0 0.0
      %4341 = vmatmul.mubr.f32.gmra.mrb[0].mxu0 %v4223
      %v4342 = vpop.f32.mrb[0].mxu0
      %v4343 = vadd.f32 0.0, %v4342
      %v4344 = vpop.f32.mrb[0].mxu0
      %4345 = vmatprep.mubr.f32.mxu0 0.0
      %4346 = vmatmul.mubr.f32.gmra.mrb[0].mxu0 %v4226
      %v4347 = vpop.f32.mrb[0].mxu0
      %v4348 = vadd.f32 0.0, %v4347
      %v4349 = vpop.f32.mrb[0].mxu0
      %4350 = vmatprep.mubr.f32.mxu0 0.0
      %4351 = vmatmul.mubr.f32.gmra.mrb[0].mxu0 %v4229
      %v4352 = vpop.f32.mrb[0].mxu0
      %v4353 = vadd.f32 0.0, %v4352
      %v4354 = vpop.f32.mrb[0].mxu0
      %4355 = vdwg.mxu0
      %v4356 = vadd.f32 %v4163, %v4298
      %v4357 = vadd.f32 %v4164, %v4303
      %v4358 = vadd.f32 %v4165, %v4308
      %v4359 = vadd.f32 %v4166, %v4313
      %v4360 = vadd.f32 %v4167, %v4318
      %v4361 = vadd.f32 %v4168, %v4323
      %v4362 = vadd.f32 %v4169, %v4328
      %v4363 = vadd.f32 %v4170, %v4333
      %v4364 = vadd.f32 %v4171, %v4338
      %v4365 = vadd.f32 %v4172, %v4343
      %v4366 = vadd.f32 %v4173, %v4348
      %v4367 = vadd.f32 %v4174, %v4353
      %v4368 = vld [vmem:[#allocation2 + $0x28] sm:$0xff]
      %v4369 = vld [vmem:[#allocation2 + $0x30] sm:$0xff]
      %v4370 = vld [vmem:[#allocation2 + $0x38] sm:$0xff]
      %v4371 = vld [vmem:[#allocation2 + $0x40] sm:$0xff]
      %v4372 = vld [vmem:[#allocation2 + $0x48] sm:$0xff]
      %v4373 = vld [vmem:[#allocation2 + $0x50] sm:$0xff]
      %v4374 = vld [vmem:[#allocation2 + $0x58] sm:$0xff]
      %v4375 = vld [vmem:[#allocation2 + $0x60] sm:$0xff]
      %v4376 = vld [vmem:[#allocation2 + $0x68] sm:$0xff]
      %v4377 = vld [vmem:[#allocation2 + $0x70] sm:$0xff]
      %v4378 = vld [vmem:[#allocation2 + $0x78] sm:$0xff]
      %v4379 = vld [vmem:[#allocation2 + $0x80] sm:$0xff]
      %v4380 = vld [vmem:[%s3 + $0x4c0] sm:$0xff]
      %v4381 = vld [vmem:[%s3 + $0x4c8] sm:$0xff]
      %v4382 = vld [vmem:[%s3 + $0x4d0] sm:$0xff]
      %v4383 = vld [vmem:[%s3 + $0x4d8] sm:$0xff]
      %v4384 = vld [vmem:[%s3 + $0x4e0] sm:$0xff]
      %v4385 = vld [vmem:[%s3 + $0x4e8] sm:$0xff]
      %v4386 = vld [vmem:[%s3 + $0x4f0] sm:$0xff]
      %v4387 = vld [vmem:[%s3 + $0x4f8] sm:$0xff]
      %v4389 = vsel %vm697, %v4368, 0
      %v4392 = vsel %vm697, %v4369, 0
      %v4395 = vsel %vm697, %v4370, 0
      %v4398 = vsel %vm697, %v4371, 0
      %v4401 = vsel %vm697, %v4372, 0
      %v4404 = vsel %vm697, %v4373, 0
      %v4407 = vsel %vm697, %v4374, 0
      %v4410 = vsel %vm697, %v4375, 0
      %v4413 = vsel %vm697, %v4376, 0
      %v4416 = vsel %vm697, %v4377, 0
      %v4419 = vsel %vm697, %v4378, 0
      %v4422 = vsel %vm697, %v4379, 0
      %4424 = vmatprep.subr.mxu0 0.0
      %4425 = vmatpush1.msra.mxu0 %v4380
      %4426 = vmatprep.subr.mxu0 0.0
      %4427 = vmatpush1.msra.mxu0 %v4381
      %4428 = vmatprep.subr.mxu0 0.0
      %4429 = vmatpush1.msra.mxu0 %v4382
      %4430 = vmatprep.subr.mxu0 0.0
      %4431 = vmatpush1.msra.mxu0 %v4383
      %4432 = vmatprep.subr.mxu0 0.0
      %4433 = vmatpush1.msra.mxu0 %v4384
      %4434 = vmatprep.subr.mxu0 0.0
      %4435 = vmatpush1.msra.mxu0 %v4385
      %4436 = vmatprep.subr.mxu0 0.0
      %4437 = vmatpush1.msra.mxu0 %v4386
      %4438 = vmatprep.subr.mxu0 0.0
      %4439 = vmatpush1.msra.mxu0 %v4387
      %4440 = vmatprep.subr.mxu0 0.0
      %4441 = vmatpush1.msra.mxu0 0.0
      %4442 = vmatprep.subr.mxu0 0.0
      %4443 = vmatpush1.msra.mxu0 0.0
      %4444 = vmatprep.subr.mxu0 0.0
      %4445 = vmatpush1.msra.mxu0 0.0
      %4446 = vmatprep.subr.mxu0 0.0
      %4447 = vmatpush1.msra.mxu0 0.0
      %4448 = vmatprep.subr.mxu0 0.0
      %4449 = vmatpush1.msra.mxu0 0.0
      %4450 = vmatprep.subr.mxu0 0.0
      %4451 = vmatpush1.msra.mxu0 0.0
      %4452 = vmatprep.subr.mxu0 0.0
      %4453 = vmatpush1.msra.mxu0 0.0
      %4454 = vmatprep.subr.mxu0 0.0
      %4455 = vmatpush1.msra.mxu0 0.0
      %4456 = vmatprep.subr.mxu0 0.0
      %4457 = vmatpush1.msra.mxu0 0.0
      %4458 = vmatprep.subr.mxu0 0.0
      %4459 = vmatpush1.msra.mxu0 0.0
      %4460 = vmatprep.subr.mxu0 0.0
      %4461 = vmatpush1.msra.mxu0 0.0
      %4462 = vmatprep.subr.mxu0 0.0
      %4463 = vmatpush1.msra.mxu0 0.0
      %4464 = vmatprep.subr.mxu0 0.0
      %4465 = vmatpush1.msra.mxu0 0.0
      %4466 = vmatprep.subr.mxu0 0.0
      %4467 = vmatpush1.msra.mxu0 0.0
      %4468 = vmatprep.subr.mxu0 0.0
      %4469 = vmatpush1.msra.mxu0 0.0
      %4470 = vmatprep.subr.mxu0 0.0
      %4471 = vmatpush1.msra.mxu0 0.0
      %4472 = vmatprep.subr.mxu0 0.0
      %4473 = vmatpush1.msra.mxu0 0.0
      %4474 = vmatprep.subr.mxu0 0.0
      %4475 = vmatpush1.msra.mxu0 0.0
      %4476 = vmatprep.subr.mxu0 0.0
      %4477 = vmatpush1.msra.mxu0 0.0
      %4478 = vmatprep.subr.mxu0 0.0
      %4479 = vmatpush1.msra.mxu0 0.0
      %4480 = vmatprep.subr.mxu0 0.0
      %4481 = vmatpush1.msra.mxu0 0.0
      %4482 = vmatprep.subr.mxu0 0.0
      %4483 = vmatpush1.msra.mxu0 0.0
      %4484 = vmatprep.subr.mxu0 0.0
      %4485 = vmatpush1.msra.mxu0 0.0
      %4486 = vmatprep.subr.mxu0 0.0
      %4487 = vmatpush1.msra.mxu0 0.0
      %4488 = vmatprep.mubr.f32.mxu0 0.0
      %4489 = vmatmul.mubr.f32.gmra.mrb[0].mxu0 %v4389
      %v4490 = vpop.f32.mrb[0].mxu0
      %v4491 = vadd.f32 0.0, %v4490
      %v4492 = vpop.f32.mrb[0].mxu0
      %4493 = vmatprep.mubr.f32.mxu0 0.0
      %4494 = vmatmul.mubr.f32.gmra.mrb[0].mxu0 %v4392
      %v4495 = vpop.f32.mrb[0].mxu0
      %v4496 = vadd.f32 0.0, %v4495
      %v4497 = vpop.f32.mrb[0].mxu0
      %4498 = vmatprep.mubr.f32.mxu0 0.0
      %4499 = vmatmul.mubr.f32.gmra.mrb[0].mxu0 %v4395
      %v4500 = vpop.f32.mrb[0].mxu0
      %v4501 = vadd.f32 0.0, %v4500
      %v4502 = vpop.f32.mrb[0].mxu0
      %4503 = vmatprep.mubr.f32.mxu0 0.0
      %4504 = vmatmul.mubr.f32.gmra.mrb[0].mxu0 %v4398
      %v4505 = vpop.f32.mrb[0].mxu0
      %v4506 = vadd.f32 0.0, %v4505
      %v4507 = vpop.f32.mrb[0].mxu0
      %4508 = vmatprep.mubr.f32.mxu0 0.0
      %4509 = vmatmul.mubr.f32.gmra.mrb[0].mxu0 %v4401
      %v4510 = vpop.f32.mrb[0].mxu0
      %v4511 = vadd.f32 0.0, %v4510
      %v4512 = vpop.f32.mrb[0].mxu0
      %4513 = vmatprep.mubr.f32.mxu0 0.0
      %4514 = vmatmul.mubr.f32.gmra.mrb[0].mxu0 %v4404
      %v4515 = vpop.f32.mrb[0].mxu0
      %v4516 = vadd.f32 0.0, %v4515
      %v4517 = vpop.f32.mrb[0].mxu0
      %4518 = vmatprep.mubr.f32.mxu0 0.0
      %4519 = vmatmul.mubr.f32.gmra.mrb[0].mxu0 %v4407
      %v4520 = vpop.f32.mrb[0].mxu0
      %v4521 = vadd.f32 0.0, %v4520
      %v4522 = vpop.f32.mrb[0].mxu0
      %4523 = vmatprep.mubr.f32.mxu0 0.0
      %4524 = vmatmul.mubr.f32.gmra.mrb[0].mxu0 %v4410
      %v4525 = vpop.f32.mrb[0].mxu0
      %v4526 = vadd.f32 0.0, %v4525
      %v4527 = vpop.f32.mrb[0].mxu0
      %4528 = vmatprep.mubr.f32.mxu0 0.0
      %4529 = vmatmul.mubr.f32.gmra.mrb[0].mxu0 %v4413
      %v4530 = vpop.f32.mrb[0].mxu0
      %v4531 = vadd.f32 0.0, %v4530
      %v4532 = vpop.f32.mrb[0].mxu0
      %4533 = vmatprep.mubr.f32.mxu0 0.0
      %4534 = vmatmul.mubr.f32.gmra.mrb[0].mxu0 %v4416
      %v4535 = vpop.f32.mrb[0].mxu0
      %v4536 = vadd.f32 0.0, %v4535
      %v4537 = vpop.f32.mrb[0].mxu0
      %4538 = vmatprep.mubr.f32.mxu0 0.0
      %4539 = vmatmul.mubr.f32.gmra.mrb[0].mxu0 %v4419
      %v4540 = vpop.f32.mrb[0].mxu0
      %v4541 = vadd.f32 0.0, %v4540
      %v4542 = vpop.f32.mrb[0].mxu0
      %4543 = vmatprep.mubr.f32.mxu0 0.0
      %4544 = vmatmul.mubr.f32.gmra.mrb[0].mxu0 %v4422
      %v4545 = vpop.f32.mrb[0].mxu0
      %v4546 = vadd.f32 0.0, %v4545
      %v4547 = vpop.f32.mrb[0].mxu0
      %4548 = vdwg.mxu0
      %v4549 = vadd.f32 %v4356, %v4491
      %v4550 = vadd.f32 %v4357, %v4496
      %v4551 = vadd.f32 %v4358, %v4501
      %v4552 = vadd.f32 %v4359, %v4506
      %v4553 = vadd.f32 %v4360, %v4511
      %v4554 = vadd.f32 %v4361, %v4516
      %v4555 = vadd.f32 %v4362, %v4521
      %v4556 = vadd.f32 %v4363, %v4526
      %v4557 = vadd.f32 %v4364, %v4531
      %v4558 = vadd.f32 %v4365, %v4536
      %v4559 = vadd.f32 %v4366, %v4541
      %v4560 = vadd.f32 %v4367, %v4546
      %v4561 = vld [vmem:[#allocation2 + $0x30] sm:$0xff]
      %v4562 = vld [vmem:[#allocation2 + $0x38] sm:$0xff]
      %v4563 = vld [vmem:[#allocation2 + $0x40] sm:$0xff]
      %v4564 = vld [vmem:[#allocation2 + $0x48] sm:$0xff]
      %v4565 = vld [vmem:[#allocation2 + $0x50] sm:$0xff]
      %v4566 = vld [vmem:[#allocation2 + $0x58] sm:$0xff]
      %v4567 = vld [vmem:[#allocation2 + $0x60] sm:$0xff]
      %v4568 = vld [vmem:[#allocation2 + $0x68] sm:$0xff]
      %v4569 = vld [vmem:[#allocation2 + $0x70] sm:$0xff]
      %v4570 = vld [vmem:[#allocation2 + $0x78] sm:$0xff]
      %v4571 = vld [vmem:[#allocation2 + $0x80] sm:$0xff]
      %v4572 = vld [vmem:[#allocation2 + $0x88] sm:$0xff]
      %v4573 = vld [vmem:[%s3 + $0x500] sm:$0xff]
      %v4574 = vld [vmem:[%s3 + $0x508] sm:$0xff]
      %v4575 = vld [vmem:[%s3 + $0x510] sm:$0xff]
      %v4576 = vld [vmem:[%s3 + $0x518] sm:$0xff]
      %v4577 = vld [vmem:[%s3 + $0x520] sm:$0xff]
      %v4578 = vld [vmem:[%s3 + $0x528] sm:$0xff]
      %v4579 = vld [vmem:[%s3 + $0x530] sm:$0xff]
      %v4580 = vld [vmem:[%s3 + $0x538] sm:$0xff]
      %v4582 = vsel %vm697, %v4561, 0
      %v4585 = vsel %vm697, %v4562, 0
      %v4588 = vsel %vm697, %v4563, 0
      %v4591 = vsel %vm697, %v4564, 0
      %v4594 = vsel %vm697, %v4565, 0
      %v4597 = vsel %vm697, %v4566, 0
      %v4600 = vsel %vm697, %v4567, 0
      %v4603 = vsel %vm697, %v4568, 0
      %v4606 = vsel %vm697, %v4569, 0
      %v4609 = vsel %vm697, %v4570, 0
      %v4612 = vsel %vm697, %v4571, 0
      %v4615 = vsel %vm697, %v4572, 0
      %4617 = vmatprep.subr.mxu0 0.0
      %4618 = vmatpush1.msra.mxu0 %v4573
      %4619 = vmatprep.subr.mxu0 0.0
      %4620 = vmatpush1.msra.mxu0 %v4574
      %4621 = vmatprep.subr.mxu0 0.0
      %4622 = vmatpush1.msra.mxu0 %v4575
      %4623 = vmatprep.subr.mxu0 0.0
      %4624 = vmatpush1.msra.mxu0 %v4576
      %4625 = vmatprep.subr.mxu0 0.0
      %4626 = vmatpush1.msra.mxu0 %v4577
      %4627 = vmatprep.subr.mxu0 0.0
      %4628 = vmatpush1.msra.mxu0 %v4578
      %4629 = vmatprep.subr.mxu0 0.0
      %4630 = vmatpush1.msra.mxu0 %v4579
      %4631 = vmatprep.subr.mxu0 0.0
      %4632 = vmatpush1.msra.mxu0 %v4580
      %4633 = vmatprep.subr.mxu0 0.0
      %4634 = vmatpush1.msra.mxu0 0.0
      %4635 = vmatprep.subr.mxu0 0.0
      %4636 = vmatpush1.msra.mxu0 0.0
      %4637 = vmatprep.subr.mxu0 0.0
      %4638 = vmatpush1.msra.mxu0 0.0
      %4639 = vmatprep.subr.mxu0 0.0
      %4640 = vmatpush1.msra.mxu0 0.0
      %4641 = vmatprep.subr.mxu0 0.0
      %4642 = vmatpush1.msra.mxu0 0.0
      %4643 = vmatprep.subr.mxu0 0.0
      %4644 = vmatpush1.msra.mxu0 0.0
      %4645 = vmatprep.subr.mxu0 0.0
      %4646 = vmatpush1.msra.mxu0 0.0
      %4647 = vmatprep.subr.mxu0 0.0
      %4648 = vmatpush1.msra.mxu0 0.0
      %4649 = vmatprep.subr.mxu0 0.0
      %4650 = vmatpush1.msra.mxu0 0.0
      %4651 = vmatprep.subr.mxu0 0.0
      %4652 = vmatpush1.msra.mxu0 0.0
      %4653 = vmatprep.subr.mxu0 0.0
      %4654 = vmatpush1.msra.mxu0 0.0
      %4655 = vmatprep.subr.mxu0 0.0
      %4656 = vmatpush1.msra.mxu0 0.0
      %4657 = vmatprep.subr.mxu0 0.0
      %4658 = vmatpush1.msra.mxu0 0.0
      %4659 = vmatprep.subr.mxu0 0.0
      %4660 = vmatpush1.msra.mxu0 0.0
      %4661 = vmatprep.subr.mxu0 0.0
      %4662 = vmatpush1.msra.mxu0 0.0
      %4663 = vmatprep.subr.mxu0 0.0
      %4664 = vmatpush1.msra.mxu0 0.0
      %4665 = vmatprep.subr.mxu0 0.0
      %4666 = vmatpush1.msra.mxu0 0.0
      %4667 = vmatprep.subr.mxu0 0.0
      %4668 = vmatpush1.msra.mxu0 0.0
      %4669 = vmatprep.subr.mxu0 0.0
      %4670 = vmatpush1.msra.mxu0 0.0
      %4671 = vmatprep.subr.mxu0 0.0
      %4672 = vmatpush1.msra.mxu0 0.0
      %4673 = vmatprep.subr.mxu0 0.0
      %4674 = vmatpush1.msra.mxu0 0.0
      %4675 = vmatprep.subr.mxu0 0.0
      %4676 = vmatpush1.msra.mxu0 0.0
      %4677 = vmatprep.subr.mxu0 0.0
      %4678 = vmatpush1.msra.mxu0 0.0
      %4679 = vmatprep.subr.mxu0 0.0
      %4680 = vmatpush1.msra.mxu0 0.0
      %4681 = vmatprep.mubr.f32.mxu0 0.0
      %4682 = vmatmul.mubr.f32.gmra.mrb[0].mxu0 %v4582
      %v4683 = vpop.f32.mrb[0].mxu0
      %v4684 = vadd.f32 0.0, %v4683
      %v4685 = vpop.f32.mrb[0].mxu0
      %4686 = vmatprep.mubr.f32.mxu0 0.0
      %4687 = vmatmul.mubr.f32.gmra.mrb[0].mxu0 %v4585
      %v4688 = vpop.f32.mrb[0].mxu0
      %v4689 = vadd.f32 0.0, %v4688
      %v4690 = vpop.f32.mrb[0].mxu0
      %4691 = vmatprep.mubr.f32.mxu0 0.0
      %4692 = vmatmul.mubr.f32.gmra.mrb[0].mxu0 %v4588
      %v4693 = vpop.f32.mrb[0].mxu0
      %v4694 = vadd.f32 0.0, %v4693
      %v4695 = vpop.f32.mrb[0].mxu0
      %4696 = vmatprep.mubr.f32.mxu0 0.0
      %4697 = vmatmul.mubr.f32.gmra.mrb[0].mxu0 %v4591
      %v4698 = vpop.f32.mrb[0].mxu0
      %v4699 = vadd.f32 0.0, %v4698
      %v4700 = vpop.f32.mrb[0].mxu0
      %4701 = vmatprep.mubr.f32.mxu0 0.0
      %4702 = vmatmul.mubr.f32.gmra.mrb[0].mxu0 %v4594
      %v4703 = vpop.f32.mrb[0].mxu0
      %v4704 = vadd.f32 0.0, %v4703
      %v4705 = vpop.f32.mrb[0].mxu0
      %4706 = vmatprep.mubr.f32.mxu0 0.0
      %4707 = vmatmul.mubr.f32.gmra.mrb[0].mxu0 %v4597
      %v4708 = vpop.f32.mrb[0].mxu0
      %v4709 = vadd.f32 0.0, %v4708
      %v4710 = vpop.f32.mrb[0].mxu0
      %4711 = vmatprep.mubr.f32.mxu0 0.0
      %4712 = vmatmul.mubr.f32.gmra.mrb[0].mxu0 %v4600
      %v4713 = vpop.f32.mrb[0].mxu0
      %v4714 = vadd.f32 0.0, %v4713
      %v4715 = vpop.f32.mrb[0].mxu0
      %4716 = vmatprep.mubr.f32.mxu0 0.0
      %4717 = vmatmul.mubr.f32.gmra.mrb[0].mxu0 %v4603
      %v4718 = vpop.f32.mrb[0].mxu0
      %v4719 = vadd.f32 0.0, %v4718
      %v4720 = vpop.f32.mrb[0].mxu0
      %4721 = vmatprep.mubr.f32.mxu0 0.0
      %4722 = vmatmul.mubr.f32.gmra.mrb[0].mxu0 %v4606
      %v4723 = vpop.f32.mrb[0].mxu0
      %v4724 = vadd.f32 0.0, %v4723
      %v4725 = vpop.f32.mrb[0].mxu0
      %4726 = vmatprep.mubr.f32.mxu0 0.0
      %4727 = vmatmul.mubr.f32.gmra.mrb[0].mxu0 %v4609
      %v4728 = vpop.f32.mrb[0].mxu0
      %v4729 = vadd.f32 0.0, %v4728
      %v4730 = vpop.f32.mrb[0].mxu0
      %4731 = vmatprep.mubr.f32.mxu0 0.0
      %4732 = vmatmul.mubr.f32.gmra.mrb[0].mxu0 %v4612
      %v4733 = vpop.f32.mrb[0].mxu0
      %v4734 = vadd.f32 0.0, %v4733
      %v4735 = vpop.f32.mrb[0].mxu0
      %4736 = vmatprep.mubr.f32.mxu0 0.0
      %4737 = vmatmul.mubr.f32.gmra.mrb[0].mxu0 %v4615
      %v4738 = vpop.f32.mrb[0].mxu0
      %v4739 = vadd.f32 0.0, %v4738
      %v4740 = vpop.f32.mrb[0].mxu0
      %4741 = vdwg.mxu0
      %v4742 = vadd.f32 %v4549, %v4684
      %v4743 = vadd.f32 %v4550, %v4689
      %v4744 = vadd.f32 %v4551, %v4694
      %v4745 = vadd.f32 %v4552, %v4699
      %v4746 = vadd.f32 %v4553, %v4704
      %v4747 = vadd.f32 %v4554, %v4709
      %v4748 = vadd.f32 %v4555, %v4714
      %v4749 = vadd.f32 %v4556, %v4719
      %v4750 = vadd.f32 %v4557, %v4724
      %v4751 = vadd.f32 %v4558, %v4729
      %v4752 = vadd.f32 %v4559, %v4734
      %v4753 = vadd.f32 %v4560, %v4739
      %v4754 = vld [vmem:[#allocation2 + $0x31] sm:$0xff]
      %v4755 = vld [vmem:[#allocation2 + $0x39] sm:$0xff]
      %v4756 = vld [vmem:[#allocation2 + $0x41] sm:$0xff]
      %v4757 = vld [vmem:[#allocation2 + $0x49] sm:$0xff]
      %v4758 = vld [vmem:[#allocation2 + $0x51] sm:$0xff]
      %v4759 = vld [vmem:[#allocation2 + $0x59] sm:$0xff]
      %v4760 = vld [vmem:[#allocation2 + $0x61] sm:$0xff]
      %v4761 = vld [vmem:[#allocation2 + $0x69] sm:$0xff]
      %v4762 = vld [vmem:[#allocation2 + $0x71] sm:$0xff]
      %v4763 = vld [vmem:[#allocation2 + $0x79] sm:$0xff]
      %v4764 = vld [vmem:[#allocation2 + $0x81] sm:$0xff]
      %v4765 = vld [vmem:[#allocation2 + $0x89] sm:$0xff]
      %v4766 = vld [vmem:[%s3 + $0x540] sm:$0xff]
      %v4767 = vld [vmem:[%s3 + $0x548] sm:$0xff]
      %v4768 = vld [vmem:[%s3 + $0x550] sm:$0xff]
      %v4769 = vld [vmem:[%s3 + $0x558] sm:$0xff]
      %v4770 = vld [vmem:[%s3 + $0x560] sm:$0xff]
      %v4771 = vld [vmem:[%s3 + $0x568] sm:$0xff]
      %v4772 = vld [vmem:[%s3 + $0x570] sm:$0xff]
      %v4773 = vld [vmem:[%s3 + $0x578] sm:$0xff]
      %v4775 = vsel %vm697, %v4754, 0
      %v4778 = vsel %vm697, %v4755, 0
      %v4781 = vsel %vm697, %v4756, 0
      %v4784 = vsel %vm697, %v4757, 0
      %v4787 = vsel %vm697, %v4758, 0
      %v4790 = vsel %vm697, %v4759, 0
      %v4793 = vsel %vm697, %v4760, 0
      %v4796 = vsel %vm697, %v4761, 0
      %v4799 = vsel %vm697, %v4762, 0
      %v4802 = vsel %vm697, %v4763, 0
      %v4805 = vsel %vm697, %v4764, 0
      %v4808 = vsel %vm697, %v4765, 0
      %4810 = vmatprep.subr.mxu0 0.0
      %4811 = vmatpush1.msra.mxu0 %v4766
      %4812 = vmatprep.subr.mxu0 0.0
      %4813 = vmatpush1.msra.mxu0 %v4767
      %4814 = vmatprep.subr.mxu0 0.0
      %4815 = vmatpush1.msra.mxu0 %v4768
      %4816 = vmatprep.subr.mxu0 0.0
      %4817 = vmatpush1.msra.mxu0 %v4769
      %4818 = vmatprep.subr.mxu0 0.0
      %4819 = vmatpush1.msra.mxu0 %v4770
      %4820 = vmatprep.subr.mxu0 0.0
      %4821 = vmatpush1.msra.mxu0 %v4771
      %4822 = vmatprep.subr.mxu0 0.0
      %4823 = vmatpush1.msra.mxu0 %v4772
      %4824 = vmatprep.subr.mxu0 0.0
      %4825 = vmatpush1.msra.mxu0 %v4773
      %4826 = vmatprep.subr.mxu0 0.0
      %4827 = vmatpush1.msra.mxu0 0.0
      %4828 = vmatprep.subr.mxu0 0.0
      %4829 = vmatpush1.msra.mxu0 0.0
      %4830 = vmatprep.subr.mxu0 0.0
      %4831 = vmatpush1.msra.mxu0 0.0
      %4832 = vmatprep.subr.mxu0 0.0
      %4833 = vmatpush1.msra.mxu0 0.0
      %4834 = vmatprep.subr.mxu0 0.0
      %4835 = vmatpush1.msra.mxu0 0.0
      %4836 = vmatprep.subr.mxu0 0.0
      %4837 = vmatpush1.msra.mxu0 0.0
      %4838 = vmatprep.subr.mxu0 0.0
      %4839 = vmatpush1.msra.mxu0 0.0
      %4840 = vmatprep.subr.mxu0 0.0
      %4841 = vmatpush1.msra.mxu0 0.0
      %4842 = vmatprep.subr.mxu0 0.0
      %4843 = vmatpush1.msra.mxu0 0.0
      %4844 = vmatprep.subr.mxu0 0.0
      %4845 = vmatpush1.msra.mxu0 0.0
      %4846 = vmatprep.subr.mxu0 0.0
      %4847 = vmatpush1.msra.mxu0 0.0
      %4848 = vmatprep.subr.mxu0 0.0
      %4849 = vmatpush1.msra.mxu0 0.0
      %4850 = vmatprep.subr.mxu0 0.0
      %4851 = vmatpush1.msra.mxu0 0.0
      %4852 = vmatprep.subr.mxu0 0.0
      %4853 = vmatpush1.msra.mxu0 0.0
      %4854 = vmatprep.subr.mxu0 0.0
      %4855 = vmatpush1.msra.mxu0 0.0
      %4856 = vmatprep.subr.mxu0 0.0
      %4857 = vmatpush1.msra.mxu0 0.0
      %4858 = vmatprep.subr.mxu0 0.0
      %4859 = vmatpush1.msra.mxu0 0.0
      %4860 = vmatprep.subr.mxu0 0.0
      %4861 = vmatpush1.msra.mxu0 0.0
      %4862 = vmatprep.subr.mxu0 0.0
      %4863 = vmatpush1.msra.mxu0 0.0
      %4864 = vmatprep.subr.mxu0 0.0
      %4865 = vmatpush1.msra.mxu0 0.0
      %4866 = vmatprep.subr.mxu0 0.0
      %4867 = vmatpush1.msra.mxu0 0.0
      %4868 = vmatprep.subr.mxu0 0.0
      %4869 = vmatpush1.msra.mxu0 0.0
      %4870 = vmatprep.subr.mxu0 0.0
      %4871 = vmatpush1.msra.mxu0 0.0
      %4872 = vmatprep.subr.mxu0 0.0
      %4873 = vmatpush1.msra.mxu0 0.0
      %4874 = vmatprep.mubr.f32.mxu0 0.0
      %4875 = vmatmul.mubr.f32.gmra.mrb[0].mxu0 %v4775
      %v4876 = vpop.f32.mrb[0].mxu0
      %v4877 = vadd.f32 0.0, %v4876
      %v4878 = vpop.f32.mrb[0].mxu0
      %4879 = vmatprep.mubr.f32.mxu0 0.0
      %4880 = vmatmul.mubr.f32.gmra.mrb[0].mxu0 %v4778
      %v4881 = vpop.f32.mrb[0].mxu0
      %v4882 = vadd.f32 0.0, %v4881
      %v4883 = vpop.f32.mrb[0].mxu0
      %4884 = vmatprep.mubr.f32.mxu0 0.0
      %4885 = vmatmul.mubr.f32.gmra.mrb[0].mxu0 %v4781
      %v4886 = vpop.f32.mrb[0].mxu0
      %v4887 = vadd.f32 0.0, %v4886
      %v4888 = vpop.f32.mrb[0].mxu0
      %4889 = vmatprep.mubr.f32.mxu0 0.0
      %4890 = vmatmul.mubr.f32.gmra.mrb[0].mxu0 %v4784
      %v4891 = vpop.f32.mrb[0].mxu0
      %v4892 = vadd.f32 0.0, %v4891
      %v4893 = vpop.f32.mrb[0].mxu0
      %4894 = vmatprep.mubr.f32.mxu0 0.0
      %4895 = vmatmul.mubr.f32.gmra.mrb[0].mxu0 %v4787
      %v4896 = vpop.f32.mrb[0].mxu0
      %v4897 = vadd.f32 0.0, %v4896
      %v4898 = vpop.f32.mrb[0].mxu0
      %4899 = vmatprep.mubr.f32.mxu0 0.0
      %4900 = vmatmul.mubr.f32.gmra.mrb[0].mxu0 %v4790
      %v4901 = vpop.f32.mrb[0].mxu0
      %v4902 = vadd.f32 0.0, %v4901
      %v4903 = vpop.f32.mrb[0].mxu0
      %4904 = vmatprep.mubr.f32.mxu0 0.0
      %4905 = vmatmul.mubr.f32.gmra.mrb[0].mxu0 %v4793
      %v4906 = vpop.f32.mrb[0].mxu0
      %v4907 = vadd.f32 0.0, %v4906
      %v4908 = vpop.f32.mrb[0].mxu0
      %4909 = vmatprep.mubr.f32.mxu0 0.0
      %4910 = vmatmul.mubr.f32.gmra.mrb[0].mxu0 %v4796
      %v4911 = vpop.f32.mrb[0].mxu0
      %v4912 = vadd.f32 0.0, %v4911
      %v4913 = vpop.f32.mrb[0].mxu0
      %4914 = vmatprep.mubr.f32.mxu0 0.0
      %4915 = vmatmul.mubr.f32.gmra.mrb[0].mxu0 %v4799
      %v4916 = vpop.f32.mrb[0].mxu0
      %v4917 = vadd.f32 0.0, %v4916
      %v4918 = vpop.f32.mrb[0].mxu0
      %4919 = vmatprep.mubr.f32.mxu0 0.0
      %4920 = vmatmul.mubr.f32.gmra.mrb[0].mxu0 %v4802
      %v4921 = vpop.f32.mrb[0].mxu0
      %v4922 = vadd.f32 0.0, %v4921
      %v4923 = vpop.f32.mrb[0].mxu0
      %4924 = vmatprep.mubr.f32.mxu0 0.0
      %4925 = vmatmul.mubr.f32.gmra.mrb[0].mxu0 %v4805
      %v4926 = vpop.f32.mrb[0].mxu0
      %v4927 = vadd.f32 0.0, %v4926
      %v4928 = vpop.f32.mrb[0].mxu0
      %4929 = vmatprep.mubr.f32.mxu0 0.0
      %4930 = vmatmul.mubr.f32.gmra.mrb[0].mxu0 %v4808
      %v4931 = vpop.f32.mrb[0].mxu0
      %v4932 = vadd.f32 0.0, %v4931
      %v4933 = vpop.f32.mrb[0].mxu0
      %4934 = vdwg.mxu0
      %v4935 = vadd.f32 %v4742, %v4877
      %v4936 = vadd.f32 %v4743, %v4882
      %v4937 = vadd.f32 %v4744, %v4887
      %v4938 = vadd.f32 %v4745, %v4892
      %v4939 = vadd.f32 %v4746, %v4897
      %v4940 = vadd.f32 %v4747, %v4902
      %v4941 = vadd.f32 %v4748, %v4907
      %v4942 = vadd.f32 %v4749, %v4912
      %v4943 = vadd.f32 %v4750, %v4917
      %v4944 = vadd.f32 %v4751, %v4922
      %v4945 = vadd.f32 %v4752, %v4927
      %v4946 = vadd.f32 %v4753, %v4932
      %v4947 = vld [vmem:[#allocation2 + $0x32] sm:$0xff]
      %v4948 = vld [vmem:[#allocation2 + $0x3a] sm:$0xff]
      %v4949 = vld [vmem:[#allocation2 + $0x42] sm:$0xff]
      %v4950 = vld [vmem:[#allocation2 + $0x4a] sm:$0xff]
      %v4951 = vld [vmem:[#allocation2 + $0x52] sm:$0xff]
      %v4952 = vld [vmem:[#allocation2 + $0x5a] sm:$0xff]
      %v4953 = vld [vmem:[#allocation2 + $0x62] sm:$0xff]
      %v4954 = vld [vmem:[#allocation2 + $0x6a] sm:$0xff]
      %v4955 = vld [vmem:[#allocation2 + $0x72] sm:$0xff]
      %v4956 = vld [vmem:[#allocation2 + $0x7a] sm:$0xff]
      %v4957 = vld [vmem:[#allocation2 + $0x82] sm:$0xff]
      %v4958 = vld [vmem:[#allocation2 + $0x8a] sm:$0xff]
      %v4959 = vld [vmem:[%s3 + $0x580] sm:$0xff]
      %v4960 = vld [vmem:[%s3 + $0x588] sm:$0xff]
      %v4961 = vld [vmem:[%s3 + $0x590] sm:$0xff]
      %v4962 = vld [vmem:[%s3 + $0x598] sm:$0xff]
      %v4963 = vld [vmem:[%s3 + $0x5a0] sm:$0xff]
      %v4964 = vld [vmem:[%s3 + $0x5a8] sm:$0xff]
      %v4965 = vld [vmem:[%s3 + $0x5b0] sm:$0xff]
      %v4966 = vld [vmem:[%s3 + $0x5b8] sm:$0xff]
      %v4968 = vsel %vm697, %v4947, 0
      %v4971 = vsel %vm697, %v4948, 0
      %v4974 = vsel %vm697, %v4949, 0
      %v4977 = vsel %vm697, %v4950, 0
      %v4980 = vsel %vm697, %v4951, 0
      %v4983 = vsel %vm697, %v4952, 0
      %v4986 = vsel %vm697, %v4953, 0
      %v4989 = vsel %vm697, %v4954, 0
      %v4992 = vsel %vm697, %v4955, 0
      %v4995 = vsel %vm697, %v4956, 0
      %v4998 = vsel %vm697, %v4957, 0
      %v5001 = vsel %vm697, %v4958, 0
      %5003 = vmatprep.subr.mxu0 0.0
      %5004 = vmatpush1.msra.mxu0 %v4959
      %5005 = vmatprep.subr.mxu0 0.0
      %5006 = vmatpush1.msra.mxu0 %v4960
      %5007 = vmatprep.subr.mxu0 0.0
      %5008 = vmatpush1.msra.mxu0 %v4961
      %5009 = vmatprep.subr.mxu0 0.0
      %5010 = vmatpush1.msra.mxu0 %v4962
      %5011 = vmatprep.subr.mxu0 0.0
      %5012 = vmatpush1.msra.mxu0 %v4963
      %5013 = vmatprep.subr.mxu0 0.0
      %5014 = vmatpush1.msra.mxu0 %v4964
      %5015 = vmatprep.subr.mxu0 0.0
      %5016 = vmatpush1.msra.mxu0 %v4965
      %5017 = vmatprep.subr.mxu0 0.0
      %5018 = vmatpush1.msra.mxu0 %v4966
      %5019 = vmatprep.subr.mxu0 0.0
      %5020 = vmatpush1.msra.mxu0 0.0
      %5021 = vmatprep.subr.mxu0 0.0
      %5022 = vmatpush1.msra.mxu0 0.0
      %5023 = vmatprep.subr.mxu0 0.0
      %5024 = vmatpush1.msra.mxu0 0.0
      %5025 = vmatprep.subr.mxu0 0.0
      %5026 = vmatpush1.msra.mxu0 0.0
      %5027 = vmatprep.subr.mxu0 0.0
      %5028 = vmatpush1.msra.mxu0 0.0
      %5029 = vmatprep.subr.mxu0 0.0
      %5030 = vmatpush1.msra.mxu0 0.0
      %5031 = vmatprep.subr.mxu0 0.0
      %5032 = vmatpush1.msra.mxu0 0.0
      %5033 = vmatprep.subr.mxu0 0.0
      %5034 = vmatpush1.msra.mxu0 0.0
      %5035 = vmatprep.subr.mxu0 0.0
      %5036 = vmatpush1.msra.mxu0 0.0
      %5037 = vmatprep.subr.mxu0 0.0
      %5038 = vmatpush1.msra.mxu0 0.0
      %5039 = vmatprep.subr.mxu0 0.0
      %5040 = vmatpush1.msra.mxu0 0.0
      %5041 = vmatprep.subr.mxu0 0.0
      %5042 = vmatpush1.msra.mxu0 0.0
      %5043 = vmatprep.subr.mxu0 0.0
      %5044 = vmatpush1.msra.mxu0 0.0
      %5045 = vmatprep.subr.mxu0 0.0
      %5046 = vmatpush1.msra.mxu0 0.0
      %5047 = vmatprep.subr.mxu0 0.0
      %5048 = vmatpush1.msra.mxu0 0.0
      %5049 = vmatprep.subr.mxu0 0.0
      %5050 = vmatpush1.msra.mxu0 0.0
      %5051 = vmatprep.subr.mxu0 0.0
      %5052 = vmatpush1.msra.mxu0 0.0
      %5053 = vmatprep.subr.mxu0 0.0
      %5054 = vmatpush1.msra.mxu0 0.0
      %5055 = vmatprep.subr.mxu0 0.0
      %5056 = vmatpush1.msra.mxu0 0.0
      %5057 = vmatprep.subr.mxu0 0.0
      %5058 = vmatpush1.msra.mxu0 0.0
      %5059 = vmatprep.subr.mxu0 0.0
      %5060 = vmatpush1.msra.mxu0 0.0
      %5061 = vmatprep.subr.mxu0 0.0
      %5062 = vmatpush1.msra.mxu0 0.0
      %5063 = vmatprep.subr.mxu0 0.0
      %5064 = vmatpush1.msra.mxu0 0.0
      %5065 = vmatprep.subr.mxu0 0.0
      %5066 = vmatpush1.msra.mxu0 0.0
      %5067 = vmatprep.mubr.f32.mxu0 0.0
      %5068 = vmatmul.mubr.f32.gmra.mrb[0].mxu0 %v4968
      %v5069 = vpop.f32.mrb[0].mxu0
      %v5070 = vadd.f32 0.0, %v5069
      %v5071 = vpop.f32.mrb[0].mxu0
      %5072 = vmatprep.mubr.f32.mxu0 0.0
      %5073 = vmatmul.mubr.f32.gmra.mrb[0].mxu0 %v4971
      %v5074 = vpop.f32.mrb[0].mxu0
      %v5075 = vadd.f32 0.0, %v5074
      %v5076 = vpop.f32.mrb[0].mxu0
      %5077 = vmatprep.mubr.f32.mxu0 0.0
      %5078 = vmatmul.mubr.f32.gmra.mrb[0].mxu0 %v4974
      %v5079 = vpop.f32.mrb[0].mxu0
      %v5080 = vadd.f32 0.0, %v5079
      %v5081 = vpop.f32.mrb[0].mxu0
      %5082 = vmatprep.mubr.f32.mxu0 0.0
      %5083 = vmatmul.mubr.f32.gmra.mrb[0].mxu0 %v4977
      %v5084 = vpop.f32.mrb[0].mxu0
      %v5085 = vadd.f32 0.0, %v5084
      %v5086 = vpop.f32.mrb[0].mxu0
      %5087 = vmatprep.mubr.f32.mxu0 0.0
      %5088 = vmatmul.mubr.f32.gmra.mrb[0].mxu0 %v4980
      %v5089 = vpop.f32.mrb[0].mxu0
      %v5090 = vadd.f32 0.0, %v5089
      %v5091 = vpop.f32.mrb[0].mxu0
      %5092 = vmatprep.mubr.f32.mxu0 0.0
      %5093 = vmatmul.mubr.f32.gmra.mrb[0].mxu0 %v4983
      %v5094 = vpop.f32.mrb[0].mxu0
      %v5095 = vadd.f32 0.0, %v5094
      %v5096 = vpop.f32.mrb[0].mxu0
      %5097 = vmatprep.mubr.f32.mxu0 0.0
      %5098 = vmatmul.mubr.f32.gmra.mrb[0].mxu0 %v4986
      %v5099 = vpop.f32.mrb[0].mxu0
      %v5100 = vadd.f32 0.0, %v5099
      %v5101 = vpop.f32.mrb[0].mxu0
      %5102 = vmatprep.mubr.f32.mxu0 0.0
      %5103 = vmatmul.mubr.f32.gmra.mrb[0].mxu0 %v4989
      %v5104 = vpop.f32.mrb[0].mxu0
      %v5105 = vadd.f32 0.0, %v5104
      %v5106 = vpop.f32.mrb[0].mxu0
      %5107 = vmatprep.mubr.f32.mxu0 0.0
      %5108 = vmatmul.mubr.f32.gmra.mrb[0].mxu0 %v4992
      %v5109 = vpop.f32.mrb[0].mxu0
      %v5110 = vadd.f32 0.0, %v5109
      %v5111 = vpop.f32.mrb[0].mxu0
      %5112 = vmatprep.mubr.f32.mxu0 0.0
      %5113 = vmatmul.mubr.f32.gmra.mrb[0].mxu0 %v4995
      %v5114 = vpop.f32.mrb[0].mxu0
      %v5115 = vadd.f32 0.0, %v5114
      %v5116 = vpop.f32.mrb[0].mxu0
      %5117 = vmatprep.mubr.f32.mxu0 0.0
      %5118 = vmatmul.mubr.f32.gmra.mrb[0].mxu0 %v4998
      %v5119 = vpop.f32.mrb[0].mxu0
      %v5120 = vadd.f32 0.0, %v5119
      %v5121 = vpop.f32.mrb[0].mxu0
      %5122 = vmatprep.mubr.f32.mxu0 0.0
      %5123 = vmatmul.mubr.f32.gmra.mrb[0].mxu0 %v5001
      %v5124 = vpop.f32.mrb[0].mxu0
      %v5125 = vadd.f32 0.0, %v5124
      %v5126 = vpop.f32.mrb[0].mxu0
      %5127 = vdwg.mxu0
      %v5128 = vadd.f32 %v4935, %v5070
      %v5129 = vadd.f32 %v4936, %v5075
      %v5130 = vadd.f32 %v4937, %v5080
      %v5131 = vadd.f32 %v4938, %v5085
      %v5132 = vadd.f32 %v4939, %v5090
      %v5133 = vadd.f32 %v4940, %v5095
      %v5134 = vadd.f32 %v4941, %v5100
      %v5135 = vadd.f32 %v4942, %v5105
      %v5136 = vadd.f32 %v4943, %v5110
      %v5137 = vadd.f32 %v4944, %v5115
      %v5138 = vadd.f32 %v4945, %v5120
      %v5139 = vadd.f32 %v4946, %v5125
      %v5140 = vld [vmem:[#allocation2 + $0x33] sm:$0xff]
      %v5141 = vld [vmem:[#allocation2 + $0x3b] sm:$0xff]
      %v5142 = vld [vmem:[#allocation2 + $0x43] sm:$0xff]
      %v5143 = vld [vmem:[#allocation2 + $0x4b] sm:$0xff]
      %v5144 = vld [vmem:[#allocation2 + $0x53] sm:$0xff]
      %v5145 = vld [vmem:[#allocation2 + $0x5b] sm:$0xff]
      %v5146 = vld [vmem:[#allocation2 + $0x63] sm:$0xff]
      %v5147 = vld [vmem:[#allocation2 + $0x6b] sm:$0xff]
      %v5148 = vld [vmem:[#allocation2 + $0x73] sm:$0xff]
      %v5149 = vld [vmem:[#allocation2 + $0x7b] sm:$0xff]
      %v5150 = vld [vmem:[#allocation2 + $0x83] sm:$0xff]
      %v5151 = vld [vmem:[#allocation2 + $0x8b] sm:$0xff]
      %v5152 = vld [vmem:[%s3 + $0x5c0] sm:$0xff]
      %v5153 = vld [vmem:[%s3 + $0x5c8] sm:$0xff]
      %v5154 = vld [vmem:[%s3 + $0x5d0] sm:$0xff]
      %v5155 = vld [vmem:[%s3 + $0x5d8] sm:$0xff]
      %v5156 = vld [vmem:[%s3 + $0x5e0] sm:$0xff]
      %v5157 = vld [vmem:[%s3 + $0x5e8] sm:$0xff]
      %v5158 = vld [vmem:[%s3 + $0x5f0] sm:$0xff]
      %v5159 = vld [vmem:[%s3 + $0x5f8] sm:$0xff]
      %v5161 = vsel %vm697, %v5140, 0
      %v5164 = vsel %vm697, %v5141, 0
      %v5167 = vsel %vm697, %v5142, 0
      %v5170 = vsel %vm697, %v5143, 0
      %v5173 = vsel %vm697, %v5144, 0
      %v5176 = vsel %vm697, %v5145, 0
      %v5179 = vsel %vm697, %v5146, 0
      %v5182 = vsel %vm697, %v5147, 0
      %v5185 = vsel %vm697, %v5148, 0
      %v5188 = vsel %vm697, %v5149, 0
      %v5191 = vsel %vm697, %v5150, 0
      %v5194 = vsel %vm697, %v5151, 0
      %5196 = vmatprep.subr.mxu0 0.0
      %5197 = vmatpush1.msra.mxu0 %v5152
      %5198 = vmatprep.subr.mxu0 0.0
      %5199 = vmatpush1.msra.mxu0 %v5153
      %5200 = vmatprep.subr.mxu0 0.0
      %5201 = vmatpush1.msra.mxu0 %v5154
      %5202 = vmatprep.subr.mxu0 0.0
      %5203 = vmatpush1.msra.mxu0 %v5155
      %5204 = vmatprep.subr.mxu0 0.0
      %5205 = vmatpush1.msra.mxu0 %v5156
      %5206 = vmatprep.subr.mxu0 0.0
      %5207 = vmatpush1.msra.mxu0 %v5157
      %5208 = vmatprep.subr.mxu0 0.0
      %5209 = vmatpush1.msra.mxu0 %v5158
      %5210 = vmatprep.subr.mxu0 0.0
      %5211 = vmatpush1.msra.mxu0 %v5159
      %5212 = vmatprep.subr.mxu0 0.0
      %5213 = vmatpush1.msra.mxu0 0.0
      %5214 = vmatprep.subr.mxu0 0.0
      %5215 = vmatpush1.msra.mxu0 0.0
      %5216 = vmatprep.subr.mxu0 0.0
      %5217 = vmatpush1.msra.mxu0 0.0
      %5218 = vmatprep.subr.mxu0 0.0
      %5219 = vmatpush1.msra.mxu0 0.0
      %5220 = vmatprep.subr.mxu0 0.0
      %5221 = vmatpush1.msra.mxu0 0.0
      %5222 = vmatprep.subr.mxu0 0.0
      %5223 = vmatpush1.msra.mxu0 0.0
      %5224 = vmatprep.subr.mxu0 0.0
      %5225 = vmatpush1.msra.mxu0 0.0
      %5226 = vmatprep.subr.mxu0 0.0
      %5227 = vmatpush1.msra.mxu0 0.0
      %5228 = vmatprep.subr.mxu0 0.0
      %5229 = vmatpush1.msra.mxu0 0.0
      %5230 = vmatprep.subr.mxu0 0.0
      %5231 = vmatpush1.msra.mxu0 0.0
      %5232 = vmatprep.subr.mxu0 0.0
      %5233 = vmatpush1.msra.mxu0 0.0
      %5234 = vmatprep.subr.mxu0 0.0
      %5235 = vmatpush1.msra.mxu0 0.0
      %5236 = vmatprep.subr.mxu0 0.0
      %5237 = vmatpush1.msra.mxu0 0.0
      %5238 = vmatprep.subr.mxu0 0.0
      %5239 = vmatpush1.msra.mxu0 0.0
      %5240 = vmatprep.subr.mxu0 0.0
      %5241 = vmatpush1.msra.mxu0 0.0
      %5242 = vmatprep.subr.mxu0 0.0
      %5243 = vmatpush1.msra.mxu0 0.0
      %5244 = vmatprep.subr.mxu0 0.0
      %5245 = vmatpush1.msra.mxu0 0.0
      %5246 = vmatprep.subr.mxu0 0.0
      %5247 = vmatpush1.msra.mxu0 0.0
      %5248 = vmatprep.subr.mxu0 0.0
      %5249 = vmatpush1.msra.mxu0 0.0
      %5250 = vmatprep.subr.mxu0 0.0
      %5251 = vmatpush1.msra.mxu0 0.0
      %5252 = vmatprep.subr.mxu0 0.0
      %5253 = vmatpush1.msra.mxu0 0.0
      %5254 = vmatprep.subr.mxu0 0.0
      %5255 = vmatpush1.msra.mxu0 0.0
      %5256 = vmatprep.subr.mxu0 0.0
      %5257 = vmatpush1.msra.mxu0 0.0
      %5258 = vmatprep.subr.mxu0 0.0
      %5259 = vmatpush1.msra.mxu0 0.0
      %5260 = vmatprep.mubr.f32.mxu0 0.0
      %5261 = vmatmul.mubr.f32.gmra.mrb[0].mxu0 %v5161
      %v5262 = vpop.f32.mrb[0].mxu0
      %v5263 = vadd.f32 0.0, %v5262
      %v5264 = vpop.f32.mrb[0].mxu0
      %5265 = vmatprep.mubr.f32.mxu0 0.0
      %5266 = vmatmul.mubr.f32.gmra.mrb[0].mxu0 %v5164
      %v5267 = vpop.f32.mrb[0].mxu0
      %v5268 = vadd.f32 0.0, %v5267
      %v5269 = vpop.f32.mrb[0].mxu0
      %5270 = vmatprep.mubr.f32.mxu0 0.0
      %5271 = vmatmul.mubr.f32.gmra.mrb[0].mxu0 %v5167
      %v5272 = vpop.f32.mrb[0].mxu0
      %v5273 = vadd.f32 0.0, %v5272
      %v5274 = vpop.f32.mrb[0].mxu0
      %5275 = vmatprep.mubr.f32.mxu0 0.0
      %5276 = vmatmul.mubr.f32.gmra.mrb[0].mxu0 %v5170
      %v5277 = vpop.f32.mrb[0].mxu0
      %v5278 = vadd.f32 0.0, %v5277
      %v5279 = vpop.f32.mrb[0].mxu0
      %5280 = vmatprep.mubr.f32.mxu0 0.0
      %5281 = vmatmul.mubr.f32.gmra.mrb[0].mxu0 %v5173
      %v5282 = vpop.f32.mrb[0].mxu0
      %v5283 = vadd.f32 0.0, %v5282
      %v5284 = vpop.f32.mrb[0].mxu0
      %5285 = vmatprep.mubr.f32.mxu0 0.0
      %5286 = vmatmul.mubr.f32.gmra.mrb[0].mxu0 %v5176
      %v5287 = vpop.f32.mrb[0].mxu0
      %v5288 = vadd.f32 0.0, %v5287
      %v5289 = vpop.f32.mrb[0].mxu0
      %5290 = vmatprep.mubr.f32.mxu0 0.0
      %5291 = vmatmul.mubr.f32.gmra.mrb[0].mxu0 %v5179
      %v5292 = vpop.f32.mrb[0].mxu0
      %v5293 = vadd.f32 0.0, %v5292
      %v5294 = vpop.f32.mrb[0].mxu0
      %5295 = vmatprep.mubr.f32.mxu0 0.0
      %5296 = vmatmul.mubr.f32.gmra.mrb[0].mxu0 %v5182
      %v5297 = vpop.f32.mrb[0].mxu0
      %v5298 = vadd.f32 0.0, %v5297
      %v5299 = vpop.f32.mrb[0].mxu0
      %5300 = vmatprep.mubr.f32.mxu0 0.0
      %5301 = vmatmul.mubr.f32.gmra.mrb[0].mxu0 %v5185
      %v5302 = vpop.f32.mrb[0].mxu0
      %v5303 = vadd.f32 0.0, %v5302
      %v5304 = vpop.f32.mrb[0].mxu0
      %5305 = vmatprep.mubr.f32.mxu0 0.0
      %5306 = vmatmul.mubr.f32.gmra.mrb[0].mxu0 %v5188
      %v5307 = vpop.f32.mrb[0].mxu0
      %v5308 = vadd.f32 0.0, %v5307
      %v5309 = vpop.f32.mrb[0].mxu0
      %5310 = vmatprep.mubr.f32.mxu0 0.0
      %5311 = vmatmul.mubr.f32.gmra.mrb[0].mxu0 %v5191
      %v5312 = vpop.f32.mrb[0].mxu0
      %v5313 = vadd.f32 0.0, %v5312
      %v5314 = vpop.f32.mrb[0].mxu0
      %5315 = vmatprep.mubr.f32.mxu0 0.0
      %5316 = vmatmul.mubr.f32.gmra.mrb[0].mxu0 %v5194
      %v5317 = vpop.f32.mrb[0].mxu0
      %v5318 = vadd.f32 0.0, %v5317
      %v5319 = vpop.f32.mrb[0].mxu0
      %5320 = vdwg.mxu0
      %v5321 = vadd.f32 %v5128, %v5263
      %v5322 = vadd.f32 %v5129, %v5268
      %v5323 = vadd.f32 %v5130, %v5273
      %v5324 = vadd.f32 %v5131, %v5278
      %v5325 = vadd.f32 %v5132, %v5283
      %v5326 = vadd.f32 %v5133, %v5288
      %v5327 = vadd.f32 %v5134, %v5293
      %v5328 = vadd.f32 %v5135, %v5298
      %v5329 = vadd.f32 %v5136, %v5303
      %v5330 = vadd.f32 %v5137, %v5308
      %v5331 = vadd.f32 %v5138, %v5313
      %v5332 = vadd.f32 %v5139, %v5318
      %v5333 = vld [vmem:[#allocation2 + $0x34] sm:$0xff]
      %v5334 = vld [vmem:[#allocation2 + $0x3c] sm:$0xff]
      %v5335 = vld [vmem:[#allocation2 + $0x44] sm:$0xff]
      %v5336 = vld [vmem:[#allocation2 + $0x4c] sm:$0xff]
      %v5337 = vld [vmem:[#allocation2 + $0x54] sm:$0xff]
      %v5338 = vld [vmem:[#allocation2 + $0x5c] sm:$0xff]
      %v5339 = vld [vmem:[#allocation2 + $0x64] sm:$0xff]
      %v5340 = vld [vmem:[#allocation2 + $0x6c] sm:$0xff]
      %v5341 = vld [vmem:[#allocation2 + $0x74] sm:$0xff]
      %v5342 = vld [vmem:[#allocation2 + $0x7c] sm:$0xff]
      %v5343 = vld [vmem:[#allocation2 + $0x84] sm:$0xff]
      %v5344 = vld [vmem:[#allocation2 + $0x8c] sm:$0xff]
      %v5345 = vld [vmem:[%s3 + $0x600] sm:$0xff]
      %v5346 = vld [vmem:[%s3 + $0x608] sm:$0xff]
      %v5347 = vld [vmem:[%s3 + $0x610] sm:$0xff]
      %v5348 = vld [vmem:[%s3 + $0x618] sm:$0xff]
      %v5349 = vld [vmem:[%s3 + $0x620] sm:$0xff]
      %v5350 = vld [vmem:[%s3 + $0x628] sm:$0xff]
      %v5351 = vld [vmem:[%s3 + $0x630] sm:$0xff]
      %v5352 = vld [vmem:[%s3 + $0x638] sm:$0xff]
      %v5354 = vsel %vm697, %v5333, 0
      %v5357 = vsel %vm697, %v5334, 0
      %v5360 = vsel %vm697, %v5335, 0
      %v5363 = vsel %vm697, %v5336, 0
      %v5366 = vsel %vm697, %v5337, 0
      %v5369 = vsel %vm697, %v5338, 0
      %v5372 = vsel %vm697, %v5339, 0
      %v5375 = vsel %vm697, %v5340, 0
      %v5378 = vsel %vm697, %v5341, 0
      %v5381 = vsel %vm697, %v5342, 0
      %v5384 = vsel %vm697, %v5343, 0
      %v5387 = vsel %vm697, %v5344, 0
      %5389 = vmatprep.subr.mxu0 0.0
      %5390 = vmatpush1.msra.mxu0 %v5345
      %5391 = vmatprep.subr.mxu0 0.0
      %5392 = vmatpush1.msra.mxu0 %v5346
      %5393 = vmatprep.subr.mxu0 0.0
      %5394 = vmatpush1.msra.mxu0 %v5347
      %5395 = vmatprep.subr.mxu0 0.0
      %5396 = vmatpush1.msra.mxu0 %v5348
      %5397 = vmatprep.subr.mxu0 0.0
      %5398 = vmatpush1.msra.mxu0 %v5349
      %5399 = vmatprep.subr.mxu0 0.0
      %5400 = vmatpush1.msra.mxu0 %v5350
      %5401 = vmatprep.subr.mxu0 0.0
      %5402 = vmatpush1.msra.mxu0 %v5351
      %5403 = vmatprep.subr.mxu0 0.0
      %5404 = vmatpush1.msra.mxu0 %v5352
      %5405 = vmatprep.subr.mxu0 0.0
      %5406 = vmatpush1.msra.mxu0 0.0
      %5407 = vmatprep.subr.mxu0 0.0
      %5408 = vmatpush1.msra.mxu0 0.0
      %5409 = vmatprep.subr.mxu0 0.0
      %5410 = vmatpush1.msra.mxu0 0.0
      %5411 = vmatprep.subr.mxu0 0.0
      %5412 = vmatpush1.msra.mxu0 0.0
      %5413 = vmatprep.subr.mxu0 0.0
      %5414 = vmatpush1.msra.mxu0 0.0
      %5415 = vmatprep.subr.mxu0 0.0
      %5416 = vmatpush1.msra.mxu0 0.0
      %5417 = vmatprep.subr.mxu0 0.0
      %5418 = vmatpush1.msra.mxu0 0.0
      %5419 = vmatprep.subr.mxu0 0.0
      %5420 = vmatpush1.msra.mxu0 0.0
      %5421 = vmatprep.subr.mxu0 0.0
      %5422 = vmatpush1.msra.mxu0 0.0
      %5423 = vmatprep.subr.mxu0 0.0
      %5424 = vmatpush1.msra.mxu0 0.0
      %5425 = vmatprep.subr.mxu0 0.0
      %5426 = vmatpush1.msra.mxu0 0.0
      %5427 = vmatprep.subr.mxu0 0.0
      %5428 = vmatpush1.msra.mxu0 0.0
      %5429 = vmatprep.subr.mxu0 0.0
      %5430 = vmatpush1.msra.mxu0 0.0
      %5431 = vmatprep.subr.mxu0 0.0
      %5432 = vmatpush1.msra.mxu0 0.0
      %5433 = vmatprep.subr.mxu0 0.0
      %5434 = vmatpush1.msra.mxu0 0.0
      %5435 = vmatprep.subr.mxu0 0.0
      %5436 = vmatpush1.msra.mxu0 0.0
      %5437 = vmatprep.subr.mxu0 0.0
      %5438 = vmatpush1.msra.mxu0 0.0
      %5439 = vmatprep.subr.mxu0 0.0
      %5440 = vmatpush1.msra.mxu0 0.0
      %5441 = vmatprep.subr.mxu0 0.0
      %5442 = vmatpush1.msra.mxu0 0.0
      %5443 = vmatprep.subr.mxu0 0.0
      %5444 = vmatpush1.msra.mxu0 0.0
      %5445 = vmatprep.subr.mxu0 0.0
      %5446 = vmatpush1.msra.mxu0 0.0
      %5447 = vmatprep.subr.mxu0 0.0
      %5448 = vmatpush1.msra.mxu0 0.0
      %5449 = vmatprep.subr.mxu0 0.0
      %5450 = vmatpush1.msra.mxu0 0.0
      %5451 = vmatprep.subr.mxu0 0.0
      %5452 = vmatpush1.msra.mxu0 0.0
      %5453 = vmatprep.mubr.f32.mxu0 0.0
      %5454 = vmatmul.mubr.f32.gmra.mrb[0].mxu0 %v5354
      %v5455 = vpop.f32.mrb[0].mxu0
      %v5456 = vadd.f32 0.0, %v5455
      %v5457 = vpop.f32.mrb[0].mxu0
      %5458 = vmatprep.mubr.f32.mxu0 0.0
      %5459 = vmatmul.mubr.f32.gmra.mrb[0].mxu0 %v5357
      %v5460 = vpop.f32.mrb[0].mxu0
      %v5461 = vadd.f32 0.0, %v5460
      %v5462 = vpop.f32.mrb[0].mxu0
      %5463 = vmatprep.mubr.f32.mxu0 0.0
      %5464 = vmatmul.mubr.f32.gmra.mrb[0].mxu0 %v5360
      %v5465 = vpop.f32.mrb[0].mxu0
      %v5466 = vadd.f32 0.0, %v5465
      %v5467 = vpop.f32.mrb[0].mxu0
      %5468 = vmatprep.mubr.f32.mxu0 0.0
      %5469 = vmatmul.mubr.f32.gmra.mrb[0].mxu0 %v5363
      %v5470 = vpop.f32.mrb[0].mxu0
      %v5471 = vadd.f32 0.0, %v5470
      %v5472 = vpop.f32.mrb[0].mxu0
      %5473 = vmatprep.mubr.f32.mxu0 0.0
      %5474 = vmatmul.mubr.f32.gmra.mrb[0].mxu0 %v5366
      %v5475 = vpop.f32.mrb[0].mxu0
      %v5476 = vadd.f32 0.0, %v5475
      %v5477 = vpop.f32.mrb[0].mxu0
      %5478 = vmatprep.mubr.f32.mxu0 0.0
      %5479 = vmatmul.mubr.f32.gmra.mrb[0].mxu0 %v5369
      %v5480 = vpop.f32.mrb[0].mxu0
      %v5481 = vadd.f32 0.0, %v5480
      %v5482 = vpop.f32.mrb[0].mxu0
      %5483 = vmatprep.mubr.f32.mxu0 0.0
      %5484 = vmatmul.mubr.f32.gmra.mrb[0].mxu0 %v5372
      %v5485 = vpop.f32.mrb[0].mxu0
      %v5486 = vadd.f32 0.0, %v5485
      %v5487 = vpop.f32.mrb[0].mxu0
      %5488 = vmatprep.mubr.f32.mxu0 0.0
      %5489 = vmatmul.mubr.f32.gmra.mrb[0].mxu0 %v5375
      %v5490 = vpop.f32.mrb[0].mxu0
      %v5491 = vadd.f32 0.0, %v5490
      %v5492 = vpop.f32.mrb[0].mxu0
      %5493 = vmatprep.mubr.f32.mxu0 0.0
      %5494 = vmatmul.mubr.f32.gmra.mrb[0].mxu0 %v5378
      %v5495 = vpop.f32.mrb[0].mxu0
      %v5496 = vadd.f32 0.0, %v5495
      %v5497 = vpop.f32.mrb[0].mxu0
      %5498 = vmatprep.mubr.f32.mxu0 0.0
      %5499 = vmatmul.mubr.f32.gmra.mrb[0].mxu0 %v5381
      %v5500 = vpop.f32.mrb[0].mxu0
      %v5501 = vadd.f32 0.0, %v5500
      %v5502 = vpop.f32.mrb[0].mxu0
      %5503 = vmatprep.mubr.f32.mxu0 0.0
      %5504 = vmatmul.mubr.f32.gmra.mrb[0].mxu0 %v5384
      %v5505 = vpop.f32.mrb[0].mxu0
      %v5506 = vadd.f32 0.0, %v5505
      %v5507 = vpop.f32.mrb[0].mxu0
      %5508 = vmatprep.mubr.f32.mxu0 0.0
      %5509 = vmatmul.mubr.f32.gmra.mrb[0].mxu0 %v5387
      %v5510 = vpop.f32.mrb[0].mxu0
      %v5511 = vadd.f32 0.0, %v5510
      %v5512 = vpop.f32.mrb[0].mxu0
      %5513 = vdwg.mxu0
      %v5514 = vadd.f32 %v5321, %v5456
      %v5515 = vadd.f32 %v5322, %v5461
      %v5516 = vadd.f32 %v5323, %v5466
      %v5517 = vadd.f32 %v5324, %v5471
      %v5518 = vadd.f32 %v5325, %v5476
      %v5519 = vadd.f32 %v5326, %v5481
      %v5520 = vadd.f32 %v5327, %v5486
      %v5521 = vadd.f32 %v5328, %v5491
      %v5522 = vadd.f32 %v5329, %v5496
      %v5523 = vadd.f32 %v5330, %v5501
      %v5524 = vadd.f32 %v5331, %v5506
      %v5525 = vadd.f32 %v5332, %v5511
      %v5526 = vld [vmem:[%s4] sm:$0x1]
      %v5528 = vlaneseq
      %v5529 = vshrl.u32 %v5528, 7
      %v5530 = vsub.s32 0, %v5529
      %v5531 = vrot.slane %v5526, %v5530
      %v5533 = vadd.f32 %v5514, %v5531
      %v5534 = vadd.f32 %v5515, %v5531
      %v5535 = vadd.f32 %v5516, %v5531
      %v5536 = vadd.f32 %v5517, %v5531
      %v5537 = vadd.f32 %v5518, %v5531
      %v5538 = vadd.f32 %v5519, %v5531
      %v5539 = vadd.f32 %v5520, %v5531
      %v5540 = vadd.f32 %v5521, %v5531
      %v5541 = vadd.f32 %v5522, %v5531
      %v5542 = vadd.f32 %v5523, %v5531
      %v5543 = vadd.f32 %v5524, %v5531
      %v5544 = vadd.f32 %v5525, %v5531
      %v5545 = vmax.f32 %v5533, 0.0
      %v5546 = vmax.f32 %v5534, 0.0
      %v5547 = vmax.f32 %v5535, 0.0
      %v5548 = vmax.f32 %v5536, 0.0
      %v5549 = vmax.f32 %v5537, 0.0
      %v5550 = vmax.f32 %v5538, 0.0
      %v5551 = vmax.f32 %v5539, 0.0
      %v5552 = vmax.f32 %v5540, 0.0
      %v5553 = vmax.f32 %v5541, 0.0
      %v5554 = vmax.f32 %v5542, 0.0
      %v5555 = vmax.f32 %v5543, 0.0
      %v5556 = vmax.f32 %v5544, 0.0
      %5557 = vst [vmem:[%s224] sm:$0xff] %v5545
      %5558 = vst [vmem:[%s224 + $0x8] sm:$0xff] %v5546
      %5559 = vst [vmem:[%s224 + $0x10] sm:$0xff] %v5547
      %5560 = vst [vmem:[%s224 + $0x18] sm:$0xff] %v5548
      %5561 = vst [vmem:[%s224 + $0x20] sm:$0xff] %v5549
      %5562 = vst [vmem:[%s224 + $0x28] sm:$0xff] %v5550
      %5563 = vst [vmem:[%s224 + $0x30] sm:$0xff] %v5551
      %5564 = vst [vmem:[%s224 + $0x38] sm:$0xff] %v5552
      %5565 = vst [vmem:[%s224 + $0x40] sm:$0xff] %v5553
      %5566 = vst [vmem:[%s224 + $0x48] sm:$0xff] %v5554
      %5567 = vst [vmem:[%s224 + $0x50] sm:$0xff] %v5555
      %5568 = vst [vmem:[%s224 + $0x58] sm:$0xff] %v5556
      %p5569 = scmp.lt.s32.totalorder %s16, 1
      %s5570 = scalar_select %p5569, %s16, 1
      %s5571 = smul.addr %s5570, 12
      %s5572 = smul.addr %s5571, 8
      %s5573 = scalar_lea.vmem %s5, %s5572
      // Predicated region
      $region41: #{simple_cnn_forward.1} parent=39 // pred_check
        %p5574 = pneg %p144
      $region42: #{simple_cnn_forward.1} parent=39 // pred_check_branch
        %5576 = sbr.rel (%p5574) target = $region44
      $region43: #{simple_cnn_forward.1} parent=39 // pred_region
        _
      $region44: #{simple_cnn_forward.1} parent=39 // pred_fallthru
        _
    $region40: #{simple_cnn_forward.1} parent=5 // pred_fallthru
      _
    %p5577 = scmp.le.s32.totalorder 2, %s11
    // Predicated region
    $region45: #{simple_cnn_forward.1} parent=5 // pred_check
      %p5578 = pneg %p5577
    $region46: #{simple_cnn_forward.1} parent=5 // pred_check_branch
      %5580 = sbr.rel (%p5578) target = $region48
    $region47: #{simple_cnn_forward.1} parent=5 // pred_region
      %s5581 = ssub.s32 %s11, 2
      // Predicated region
      $region49: #{simple_cnn_forward.1} parent=47 // pred_check
        %p5582 = pneg %p150
      $region50: #{simple_cnn_forward.1} parent=47 // pred_check_branch
        %5584 = sbr.rel (%p5582) target = $region52
      $region51: #{simple_cnn_forward.1} parent=47 // pred_region
        %p5585 = scmp.lt.s32.totalorder %s17, 1
        %s5586 = scalar_select %p5585, %s17, 1
        %s5587 = smul.addr %s5586, 12
        %s5588 = smul.addr %s5587, 8
        %s5589 = scalar_lea.vmem %s5, %s5588
      $region52: #{simple_cnn_forward.1} parent=47 // pred_fallthru
        _
    $region48: #{simple_cnn_forward.1} parent=5 // pred_fallthru
      _
  $region6: #{simple_cnn_forward.1} parent=0 // loop_footer
    %s15 = sadd.s32 1, %s11
  $region7: #{simple_cnn_forward.1} parent=0 // loop_footer_branch
    %10 = sbr.rel target = $region3
  $region8: #{simple_cnn_forward.1} parent=0 // loop_exit
    _

</llo_original>
